<compile_context>
chip_gen: v5e
topology: v5e:2x2
jax: 0.10.0
libtpu: 0.0.40
codegen_flags: <defaults>
</compile_context>

<pallas_src>
import functools

import jax
import jax.numpy as jnp
from jax import lax
from jax.experimental import pallas as pl
from jax.experimental.pallas import tpu as pltpu


def _patch_cross_attn_kernel(x_ref, c_ref, xpos_ref, cpos_ref, pvec_ref,
                             wq_ref, wk_ref, wv_ref, wp_ref, o_ref,
                             *, num_heads):
    Bt, N, D = x_ref.shape                 # one grid step = Bt batch elements
    H = num_heads
    hd = D // H
    M = Bt * N                             # token rows in this step's slab
    G = Bt * H                             # (batch element, head) groups
    f32, bf16 = jnp.float32, jnp.bfloat16

    # stacked per-channel params: rows = [gx, bx, gc, bc, bp]
    gx = pvec_ref[0:1, :]
    bx = pvec_ref[1:2, :]
    gc = pvec_ref[2:3, :]
    bc = pvec_ref[3:4, :]
    bp = pvec_ref[4:5, :]

    def layer_norm(v, g, b):
        mu = jnp.mean(v, axis=-1, keepdims=True)
        vc = v - mu
        var = jnp.mean(vc * vc, axis=-1, keepdims=True)
        return vc * lax.rsqrt(var + 1e-5) * g + b

    # ---- fused positional-embedding add (broadcast over batch) + LayerNorms -
    x = x_ref[...].astype(f32) + xpos_ref[...][None]       # (Bt, N, D)
    c = c_ref[...].astype(f32) + cpos_ref[...][None]
    xn = layer_norm(x, gx, bx).reshape(M, D)                # (M, D) f32
    cn = layer_norm(c, gc, bc).reshape(M, D)
    xn_b = xn.astype(bf16)
    cn_b = cn.astype(bf16)

    # ---- full-width Q/K/V projections (scale folded into wq in the wrapper) -
    q2 = jnp.dot(xn_b, wq_ref[...], preferred_element_type=f32)   # (M, D)
    xc = jnp.concatenate([xn_b, cn_b], axis=0)                    # (2M, D)
    k2 = jnp.dot(xc, wk_ref[...], preferred_element_type=f32)     # (2M, D)
    v2 = jnp.dot(xc, wv_ref[...], preferred_element_type=f32)     # (2M, D)

    def split_heads(t2, lead):
        # (lead*M, D) -> (lead, Bt*H, N, hd): head split / XLU relayout (f32,
        # cast to bf16 after the shuffle).
        t = t2.reshape(lead * Bt, N, H, hd)
        t = jnp.transpose(t, (0, 2, 1, 3))                  # (lead*Bt, H, N, hd)
        return t.reshape(lead, G, N, hd).astype(bf16)

    q4 = split_heads(q2, 1)[0]                              # (G, N, hd)
    k4 = split_heads(k2, 2)                                 # (2, G, N, hd)
    v4 = split_heads(v2, 2)
    kx4, kc4 = k4[0], k4[1]                                 # x-keys / c-keys
    vx4, vc4 = v4[0], v4[1]

    # ---- batched attention over all (batch element, head) groups ------------
    # Key set is [x ; complement]; handled as two score blocks with a joint
    # softmax so the (N, 2N) concatenated score matrix is never materialised.
    sx = jnp.einsum('gnd,gmd->gnm', q4, kx4, preferred_element_type=f32)
    sc = jnp.einsum('gnd,gmd->gnm', q4, kc4, preferred_element_type=f32)
    mrow = jnp.maximum(jnp.max(sx, axis=-1, keepdims=True),
                       jnp.max(sc, axis=-1, keepdims=True))
    px = jnp.exp(sx - mrow)
    pc = jnp.exp(sc - mrow)
    denom = (jnp.sum(px, axis=-1, keepdims=True)
             + jnp.sum(pc, axis=-1, keepdims=True))
    ov = jnp.einsum('gnm,gmd->gnd', px.astype(bf16), vx4,
                    preferred_element_type=f32)
    ov = ov + jnp.einsum('gnm,gmd->gnd', pc.astype(bf16), vc4,
                         preferred_element_type=f32)
    ov = ov / denom                                         # exact softmax divide

    # ---- merge heads, output projection, both residuals ---------------------
    # Reference ordering: out = xn + proj(attn + xn); both residuals use the
    # post-LayerNorm tokens (x_copy is saved after the norm in the module).
    attn = jnp.transpose(ov.reshape(Bt, H, N, hd), (0, 2, 1, 3)).reshape(M, D)
    y = (attn + xn).astype(bf16)
    out = xn + jnp.dot(y, wp_ref[...], preferred_element_type=f32) + bp
    o_ref[...] = out.reshape(Bt, N, D).astype(o_ref.dtype)  # single full store


def patch_cross_attention(x_tok, c_tok, params, num_heads, *, batch_block=None):
    """x_tok, c_tok: (B, N, D) patch tokens (pos-embedding added inside the
    kernel).  Returns (B, N, D)."""
    B, N, D = x_tok.shape
    H = num_heads
    hd = D // H
    scale = float(hd) ** -0.5
    f32, bf16 = jnp.float32, jnp.bfloat16

    # per-grid-step slab target: ~1024 token rows (512-2048 sweet spot).  Take
    # the largest batch block that fits; do NOT force >=2 undersized steps
    # (single-TC v5e/v6e want one big step; v7x only benefits from splitting
    # when each step still has hundreds of rows, which this naturally gives
    # once B*N is large).
    if batch_block is None:
        target_rows = 1024
        cap = max(1, target_rows // N)
        divs = [d for d in range(1, B + 1) if B % d == 0 and d <= cap]
        bt = max(divs) if divs else 1
    else:
        bt = batch_block
    assert B % bt == 0, (B, bt)
    Mb = bt * N
    grid = (B // bt,)

    # one-time weight restructuring (outside the kernel):
    #  * to_kv split into Wk / Wv, attention scale folded into Wq once
    #  * MXU operands cast to bf16 (f32 accumulation inside the kernel)
    #  * small per-channel params stacked into one (5, D) input stream
    wq = (params["wq"] * scale).astype(bf16)                 # (D, D)
    wk = params["wkv"][:, :D].astype(bf16)                   # (D, D)
    wv = params["wkv"][:, D:].astype(bf16)                   # (D, D)
    wp = params["wp"].astype(bf16)                           # (D, D)
    pvec = jnp.concatenate([params["gx"], params["bx"], params["gc"],
                            params["bc"], params["bp"]], axis=0).astype(f32)
    xpos = params["x_pos"].reshape(N, D).astype(f32)         # (N, D), no tiling
    cpos = params["c_pos"].reshape(N, D).astype(f32)

    tok_spec = pl.BlockSpec((bt, N, D), lambda i: (i, 0, 0))

    def const_spec(shape):
        # constant block, same every step.  TODO(synk): could be single-buffered
        # (pipeline_mode=pl.Buffered(1)) or staged via pl.ANY + one DMA; at
        # these sizes the duplicate buffer is a few KiB and not worth it.
        return pl.BlockSpec(shape, lambda i: (0,) * len(shape))

    # VMEM budget derived from the working set (f32 token-slab temporaries and
    # score blocks), capped well under v7x's 64 MiB physical VMEM.
    scores_bytes = bt * H * N * N * 4
    vmem_est = 24 * Mb * D * 4 + 6 * scores_bytes + (2 << 20)
    vmem_limit = int(min(40 << 20, max(16 << 20, vmem_est)))

    kern = functools.partial(_patch_cross_attn_kernel, num_heads=H)

    out = pl.pallas_call(
        kern,
        out_shape=jax.ShapeDtypeStruct((B, N, D), x_tok.dtype),
        grid=grid,
        in_specs=[tok_spec, tok_spec,
                  const_spec((N, D)), const_spec((N, D)),
                  const_spec((5, D)),
                  const_spec((D, D)), const_spec((D, D)),
                  const_spec((D, D)), const_spec((D, D))],
        out_specs=tok_spec,
        compiler_params=pltpu.CompilerParams(
            dimension_semantics=("parallel",),
            vmem_limit_bytes=vmem_limit),
    )(x_tok, c_tok, xpos, cpos, pvec, wq, wk, wv, wp)
    return out


def patch_embedding_cross_attention(reference_features, non_reference_features,
                                    params, patch_size, num_heads):
    """NCHW in, NCHW out (same shape), matching the PyTorch module's forward."""
    B, C, H, W = reference_features.shape
    p = patch_size
    hh, ww = H // p, W // p

    def to_tokens(t):
        # einops 'b c (h p1) (w p2) -> b (h w) (p1 p2 c)'  (c fastest in D)
        t = t.reshape(B, C, hh, p, ww, p)
        t = t.transpose(0, 2, 4, 3, 5, 1)        # b h w p1 p2 c
        return t.reshape(B, hh * ww, p * p * C)

    x_tok = to_tokens(reference_features)
    c_tok = to_tokens(non_reference_features)

    out_tok = patch_cross_attention(x_tok, c_tok, params, num_heads)

    # einops 'b (h w) (p1 p2 c) -> b c (h p1) (w p2)'
    out = out_tok.reshape(B, hh, ww, p, p, C)
    out = out.transpose(0, 5, 1, 3, 2, 4)        # b c h p1 w p2
    return out.reshape(B, C, H, W)


if __name__ == "__main__":
    key = jax.random.PRNGKey(0)
    B, C, H, W = 2, 4, 16, 16
    patch_size = 4
    num_heads = 4
    D = patch_size * patch_size * C                    # emb_dim = 64
    N = (H // patch_size) * (W // patch_size)          # num_patch = 16

    ks = jax.random.split(key, 8)
    params = dict(
        x_pos=jax.random.normal(ks[0], (1, N, D), jnp.float32),
        c_pos=jax.random.normal(ks[1], (1, N, D), jnp.float32),
        gx=jnp.ones((1, D), jnp.float32),
        bx=jnp.zeros((1, D), jnp.float32),
        gc=jnp.ones((1, D), jnp.float32),
        bc=jnp.zeros((1, D), jnp.float32),
        wq=jax.random.normal(ks[2], (D, D), jnp.float32) * 0.05,       # to_q (no bias)
        wkv=jax.random.normal(ks[3], (D, 2 * D), jnp.float32) * 0.05,  # to_kv (no bias)
        wp=jax.random.normal(ks[4], (D, D), jnp.float32) * 0.05,       # proj weight
        bp=jax.random.normal(ks[5], (1, D), jnp.float32) * 0.02,       # proj bias
    )

    ref_feat = jax.random.normal(ks[6], (B, C, H, W), jnp.float32)
    nonref_feat = jax.random.normal(ks[7], (B, C, H, W), jnp.float32)

    fwd = jax.jit(functools.partial(patch_embedding_cross_attention,
                                    patch_size=patch_size, num_heads=num_heads))
    out = fwd(ref_feat, nonref_feat, params)
    jax.block_until_ready(out)
    assert out.shape == (B, C, H, W) and out.dtype == jnp.float32
    print("KERNEL_OK")
</pallas_src>

<mosaic_0001>
module attributes {stable_mosaic.version = 11 : i64} {
  func.func @_patch_cross_attn_kernel(%arg0: i32, %arg1: memref<2x16x64xf32, #tpu.memory_space<vmem>>, %arg2: memref<2x16x64xf32, #tpu.memory_space<vmem>>, %arg3: memref<16x64xf32, #tpu.memory_space<vmem>>, %arg4: memref<16x64xf32, #tpu.memory_space<vmem>>, %arg5: memref<5x64xf32, #tpu.memory_space<vmem>>, %arg6: memref<64x64xbf16, #tpu.memory_space<vmem>>, %arg7: memref<64x64xbf16, #tpu.memory_space<vmem>>, %arg8: memref<64x64xbf16, #tpu.memory_space<vmem>>, %arg9: memref<64x64xbf16, #tpu.memory_space<vmem>>, %arg10: memref<2x16x64xf32, #tpu.memory_space<vmem>>) attributes {dimension_semantics = [#tpu.dimension_semantics<parallel>], iteration_bounds = array<i64: 1>, scalar_prefetch = 0 : i64, scratch_operands = 0 : i64, tpu.core_type = #tpu.core_type<tc>, window_params = [{transform_indices = @transform_0, window_bounds = array<i64: 2, 16, 64>}, {transform_indices = @transform_1, window_bounds = array<i64: 2, 16, 64>}, {pipeline_mode = #tpu.pipeline_mode<synchronous>, transform_indices = @transform_2, window_bounds = array<i64: 16, 64>}, {pipeline_mode = #tpu.pipeline_mode<synchronous>, transform_indices = @transform_3, window_bounds = array<i64: 16, 64>}, {pipeline_mode = #tpu.pipeline_mode<synchronous>, transform_indices = @transform_4, window_bounds = array<i64: 5, 64>}, {pipeline_mode = #tpu.pipeline_mode<synchronous>, transform_indices = @transform_5, window_bounds = array<i64: 64, 64>}, {pipeline_mode = #tpu.pipeline_mode<synchronous>, transform_indices = @transform_6, window_bounds = array<i64: 64, 64>}, {pipeline_mode = #tpu.pipeline_mode<synchronous>, transform_indices = @transform_7, window_bounds = array<i64: 64, 64>}, {pipeline_mode = #tpu.pipeline_mode<synchronous>, transform_indices = @transform_8, window_bounds = array<i64: 64, 64>}, {transform_indices = @transform_9, window_bounds = array<i64: 2, 16, 64>}]} {
    %c0 = arith.constant 0 : index
    %c0_0 = arith.constant 0 : index
    %0 = vector.load %arg5[%c0, %c0_0] : memref<5x64xf32, #tpu.memory_space<vmem>>, vector<1x64xf32>
    %c1 = arith.constant 1 : index
    %c0_1 = arith.constant 0 : index
    %1 = vector.load %arg5[%c1, %c0_1] : memref<5x64xf32, #tpu.memory_space<vmem>>, vector<1x64xf32>
    %c2 = arith.constant 2 : index
    %c0_2 = arith.constant 0 : index
    %2 = vector.load %arg5[%c2, %c0_2] : memref<5x64xf32, #tpu.memory_space<vmem>>, vector<1x64xf32>
    %c3 = arith.constant 3 : index
    %c0_3 = arith.constant 0 : index
    %3 = vector.load %arg5[%c3, %c0_3] : memref<5x64xf32, #tpu.memory_space<vmem>>, vector<1x64xf32>
    %c4 = arith.constant 4 : index
    %c0_4 = arith.constant 0 : index
    %4 = vector.load %arg5[%c4, %c0_4] : memref<5x64xf32, #tpu.memory_space<vmem>>, vector<1x64xf32>
    %c0_5 = arith.constant 0 : index
    %c0_6 = arith.constant 0 : index
    %c0_7 = arith.constant 0 : index
    %5 = vector.load %arg1[%c0_5, %c0_6, %c0_7] : memref<2x16x64xf32, #tpu.memory_space<vmem>>, vector<2x16x64xf32>
    %c0_8 = arith.constant 0 : index
    %c0_9 = arith.constant 0 : index
    %6 = vector.load %arg3[%c0_8, %c0_9] : memref<16x64xf32, #tpu.memory_space<vmem>>, vector<16x64xf32>
    %7 = vector.shape_cast %6 : vector<16x64xf32> to vector<1x16x64xf32>
    %8 = vector.broadcast %7 : vector<1x16x64xf32> to vector<2x16x64xf32>
    %9 = arith.addf %5, %8 : vector<2x16x64xf32>
    %c0_10 = arith.constant 0 : index
    %c0_11 = arith.constant 0 : index
    %c0_12 = arith.constant 0 : index
    %10 = vector.load %arg2[%c0_10, %c0_11, %c0_12] : memref<2x16x64xf32, #tpu.memory_space<vmem>>, vector<2x16x64xf32>
    %c0_13 = arith.constant 0 : index
    %c0_14 = arith.constant 0 : index
    %11 = vector.load %arg4[%c0_13, %c0_14] : memref<16x64xf32, #tpu.memory_space<vmem>>, vector<16x64xf32>
    %12 = vector.shape_cast %11 : vector<16x64xf32> to vector<1x16x64xf32>
    %13 = vector.broadcast %12 : vector<1x16x64xf32> to vector<2x16x64xf32>
    %14 = arith.addf %10, %13 : vector<2x16x64xf32>
    %cst = arith.constant dense<0.000000e+00> : vector<2x16xf32>
    %15 = vector.multi_reduction <add>, %9, %cst [2] : vector<2x16x64xf32> to vector<2x16xf32>
    %16 = vector.shape_cast %15 : vector<2x16xf32> to vector<2x16x1xf32>
    %cst_15 = arith.constant 6.400000e+01 : f32
    %17 = vector.broadcast %cst_15 : f32 to vector<2x16x1xf32>
    %18 = arith.divf %16, %17 : vector<2x16x1xf32>
    %19 = vector.broadcast %18 : vector<2x16x1xf32> to vector<2x16x64xf32>
    %20 = arith.subf %9, %19 : vector<2x16x64xf32>
    %21 = arith.mulf %20, %20 : vector<2x16x64xf32>
    %cst_16 = arith.constant dense<0.000000e+00> : vector<2x16xf32>
    %22 = vector.multi_reduction <add>, %21, %cst_16 [2] : vector<2x16x64xf32> to vector<2x16xf32>
    %23 = vector.shape_cast %22 : vector<2x16xf32> to vector<2x16x1xf32>
    %cst_17 = arith.constant 6.400000e+01 : f32
    %24 = vector.broadcast %cst_17 : f32 to vector<2x16x1xf32>
    %25 = arith.divf %23, %24 : vector<2x16x1xf32>
    %cst_18 = arith.constant 9.99999974E-6 : f32
    %26 = vector.broadcast %cst_18 : f32 to vector<2x16x1xf32>
    %27 = arith.addf %25, %26 : vector<2x16x1xf32>
    %28 = math.rsqrt %27 : vector<2x16x1xf32>
    %29 = vector.broadcast %28 : vector<2x16x1xf32> to vector<2x16x64xf32>
    %30 = arith.mulf %20, %29 : vector<2x16x64xf32>
    %31 = vector.shape_cast %0 : vector<1x64xf32> to vector<1x1x64xf32>
    %32 = vector.broadcast %31 : vector<1x1x64xf32> to vector<2x16x64xf32>
    %33 = arith.mulf %30, %32 : vector<2x16x64xf32>
    %34 = vector.shape_cast %1 : vector<1x64xf32> to vector<1x1x64xf32>
    %35 = vector.broadcast %34 : vector<1x1x64xf32> to vector<2x16x64xf32>
    %36 = arith.addf %33, %35 : vector<2x16x64xf32>
    %37 = vector.shape_cast %36 : vector<2x16x64xf32> to vector<32x64xf32>
    %cst_19 = arith.constant dense<0.000000e+00> : vector<2x16xf32>
    %38 = vector.multi_reduction <add>, %14, %cst_19 [2] : vector<2x16x64xf32> to vector<2x16xf32>
    %39 = vector.shape_cast %38 : vector<2x16xf32> to vector<2x16x1xf32>
    %cst_20 = arith.constant 6.400000e+01 : f32
    %40 = vector.broadcast %cst_20 : f32 to vector<2x16x1xf32>
    %41 = arith.divf %39, %40 : vector<2x16x1xf32>
    %42 = vector.broadcast %41 : vector<2x16x1xf32> to vector<2x16x64xf32>
    %43 = arith.subf %14, %42 : vector<2x16x64xf32>
    %44 = arith.mulf %43, %43 : vector<2x16x64xf32>
    %cst_21 = arith.constant dense<0.000000e+00> : vector<2x16xf32>
    %45 = vector.multi_reduction <add>, %44, %cst_21 [2] : vector<2x16x64xf32> to vector<2x16xf32>
    %46 = vector.shape_cast %45 : vector<2x16xf32> to vector<2x16x1xf32>
    %cst_22 = arith.constant 6.400000e+01 : f32
    %47 = vector.broadcast %cst_22 : f32 to vector<2x16x1xf32>
    %48 = arith.divf %46, %47 : vector<2x16x1xf32>
    %cst_23 = arith.constant 9.99999974E-6 : f32
    %49 = vector.broadcast %cst_23 : f32 to vector<2x16x1xf32>
    %50 = arith.addf %48, %49 : vector<2x16x1xf32>
    %51 = math.rsqrt %50 : vector<2x16x1xf32>
    %52 = vector.broadcast %51 : vector<2x16x1xf32> to vector<2x16x64xf32>
    %53 = arith.mulf %43, %52 : vector<2x16x64xf32>
    %54 = vector.shape_cast %2 : vector<1x64xf32> to vector<1x1x64xf32>
    %55 = vector.broadcast %54 : vector<1x1x64xf32> to vector<2x16x64xf32>
    %56 = arith.mulf %53, %55 : vector<2x16x64xf32>
    %57 = vector.shape_cast %3 : vector<1x64xf32> to vector<1x1x64xf32>
    %58 = vector.broadcast %57 : vector<1x1x64xf32> to vector<2x16x64xf32>
    %59 = arith.addf %56, %58 : vector<2x16x64xf32>
    %60 = vector.shape_cast %59 : vector<2x16x64xf32> to vector<32x64xf32>
    %61 = arith.truncf %37 : vector<32x64xf32> to vector<32x64xbf16>
    %62 = arith.truncf %60 : vector<32x64xf32> to vector<32x64xbf16>
    %c0_24 = arith.constant 0 : index
    %c0_25 = arith.constant 0 : index
    %63 = vector.load %arg6[%c0_24, %c0_25] : memref<64x64xbf16, #tpu.memory_space<vmem>>, vector<64x64xbf16>
    %cst_26 = arith.constant dense<0.000000e+00> : vector<32x64xf32>
    %64 = tpu.matmul %61, %63, %cst_26 {dimension_numbers = #tpu.dot_dimension_numbers<[1], [0], [0], [1], [0, 0, 1, 1], [], []>} : vector<32x64xbf16>, vector<64x64xbf16>, vector<32x64xf32> -> vector<32x64xf32>
    %65 = tpu.concatenate %61, %62 in 0 : vector<32x64xbf16>, vector<32x64xbf16> -> vector<64x64xbf16>
    %c0_27 = arith.constant 0 : index
    %c0_28 = arith.constant 0 : index
    %66 = vector.load %arg7[%c0_27, %c0_28] : memref<64x64xbf16, #tpu.memory_space<vmem>>, vector<64x64xbf16>
    %cst_29 = arith.constant dense<0.000000e+00> : vector<64x64xf32>
    %67 = tpu.matmul %65, %66, %cst_29 {dimension_numbers = #tpu.dot_dimension_numbers<[1], [0], [0], [1], [0, 0, 1, 1], [], []>} : vector<64x64xbf16>, vector<64x64xbf16>, vector<64x64xf32> -> vector<64x64xf32>
    %c0_30 = arith.constant 0 : index
    %c0_31 = arith.constant 0 : index
    %68 = vector.load %arg8[%c0_30, %c0_31] : memref<64x64xbf16, #tpu.memory_space<vmem>>, vector<64x64xbf16>
    %cst_32 = arith.constant dense<0.000000e+00> : vector<64x64xf32>
    %69 = tpu.matmul %65, %68, %cst_32 {dimension_numbers = #tpu.dot_dimension_numbers<[1], [0], [0], [1], [0, 0, 1, 1], [], []>} : vector<64x64xbf16>, vector<64x64xbf16>, vector<64x64xf32> -> vector<64x64xf32>
    %70 = vector.shape_cast %64 : vector<32x64xf32> to vector<2x16x4x16xf32>
    %71 = tpu.transpose %70, [0, 2, 1, 3] : vector<2x16x4x16xf32> -> vector<2x4x16x16xf32>
    %72 = vector.shape_cast %71 : vector<2x4x16x16xf32> to vector<1x8x16x16xf32>
    %73 = arith.truncf %72 : vector<1x8x16x16xf32> to vector<1x8x16x16xbf16>
    %74 = vector.shape_cast %73 : vector<1x8x16x16xbf16> to vector<8x16x16xbf16>
    %75 = vector.shape_cast %67 : vector<64x64xf32> to vector<4x16x4x16xf32>
    %76 = tpu.transpose %75, [0, 2, 1, 3] : vector<4x16x4x16xf32> -> vector<4x4x16x16xf32>
    %77 = vector.shape_cast %76 : vector<4x4x16x16xf32> to vector<2x8x16x16xf32>
    %78 = arith.truncf %77 : vector<2x8x16x16xf32> to vector<2x8x16x16xbf16>
    %79 = vector.shape_cast %69 : vector<64x64xf32> to vector<4x16x4x16xf32>
    %80 = tpu.transpose %79, [0, 2, 1, 3] : vector<4x16x4x16xf32> -> vector<4x4x16x16xf32>
    %81 = vector.shape_cast %80 : vector<4x4x16x16xf32> to vector<2x8x16x16xf32>
    %82 = arith.truncf %81 : vector<2x8x16x16xf32> to vector<2x8x16x16xbf16>
    %83 = vector.extract_strided_slice %78 {offsets = [0, 0, 0, 0], sizes = [1, 8, 16, 16], strides = [1, 1, 1, 1]} : vector<2x8x16x16xbf16> to vector<1x8x16x16xbf16>
    %84 = vector.shape_cast %83 : vector<1x8x16x16xbf16> to vector<8x16x16xbf16>
    %85 = vector.extract_strided_slice %78 {offsets = [1, 0, 0, 0], sizes = [1, 8, 16, 16], strides = [1, 1, 1, 1]} : vector<2x8x16x16xbf16> to vector<1x8x16x16xbf16>
    %86 = vector.shape_cast %85 : vector<1x8x16x16xbf16> to vector<8x16x16xbf16>
    %87 = vector.extract_strided_slice %82 {offsets = [0, 0, 0, 0], sizes = [1, 8, 16, 16], strides = [1, 1, 1, 1]} : vector<2x8x16x16xbf16> to vector<1x8x16x16xbf16>
    %88 = vector.shape_cast %87 : vector<1x8x16x16xbf16> to vector<8x16x16xbf16>
    %89 = vector.extract_strided_slice %82 {offsets = [1, 0, 0, 0], sizes = [1, 8, 16, 16], strides = [1, 1, 1, 1]} : vector<2x8x16x16xbf16> to vector<1x8x16x16xbf16>
    %90 = vector.shape_cast %89 : vector<1x8x16x16xbf16> to vector<8x16x16xbf16>
    "tpu.trace_start"() <{level = 10 : i32, message = "gnd,gmd->gnm"}> : () -> ()
    %cst_33 = arith.constant dense<0.000000e+00> : vector<8x16x16xf32>
    %91 = tpu.matmul %74, %84, %cst_33 {dimension_numbers = #tpu.dot_dimension_numbers<[2], [2], [1], [1], [0, 0, 0, 1, 1, 1], [0], [0]>} : vector<8x16x16xbf16>, vector<8x16x16xbf16>, vector<8x16x16xf32> -> vector<8x16x16xf32>
    %cst_34 = arith.constant dense<0.000000e+00> : vector<8x16x16xf32>
    %92 = tpu.matmul %74, %86, %cst_34 {dimension_numbers = #tpu.dot_dimension_numbers<[2], [2], [1], [1], [0, 0, 0, 1, 1, 1], [0], [0]>} : vector<8x16x16xbf16>, vector<8x16x16xbf16>, vector<8x16x16xf32> -> vector<8x16x16xf32>
    "tpu.trace_stop"() : () -> ()
    %cst_35 = arith.constant dense<0xFF800000> : vector<8x16xf32>
    %93 = vector.multi_reduction <maximumf>, %91, %cst_35 [2] : vector<8x16x16xf32> to vector<8x16xf32>
    %94 = vector.shape_cast %93 : vector<8x16xf32> to vector<8x16x1xf32>
    %cst_36 = arith.constant dense<0xFF800000> : vector<8x16xf32>
    %95 = vector.multi_reduction <maximumf>, %92, %cst_36 [2] : vector<8x16x16xf32> to vector<8x16xf32>
    %96 = vector.shape_cast %95 : vector<8x16xf32> to vector<8x16x1xf32>
    %97 = arith.maximumf %94, %96 : vector<8x16x1xf32>
    %98 = vector.broadcast %97 : vector<8x16x1xf32> to vector<8x16x16xf32>
    %99 = arith.subf %91, %98 : vector<8x16x16xf32>
    %100 = math.exp %99 : vector<8x16x16xf32>
    %101 = vector.broadcast %97 : vector<8x16x1xf32> to vector<8x16x16xf32>
    %102 = arith.subf %92, %101 : vector<8x16x16xf32>
    %103 = math.exp %102 : vector<8x16x16xf32>
    %cst_37 = arith.constant dense<0.000000e+00> : vector<8x16xf32>
    %104 = vector.multi_reduction <add>, %100, %cst_37 [2] : vector<8x16x16xf32> to vector<8x16xf32>
    %105 = vector.shape_cast %104 : vector<8x16xf32> to vector<8x16x1xf32>
    %cst_38 = arith.constant dense<0.000000e+00> : vector<8x16xf32>
    %106 = vector.multi_reduction <add>, %103, %cst_38 [2] : vector<8x16x16xf32> to vector<8x16xf32>
    %107 = vector.shape_cast %106 : vector<8x16xf32> to vector<8x16x1xf32>
    %108 = arith.addf %105, %107 : vector<8x16x1xf32>
    %109 = arith.truncf %100 : vector<8x16x16xf32> to vector<8x16x16xbf16>
    "tpu.trace_start"() <{level = 10 : i32, message = "gnm,gmd->gnd"}> : () -> ()
    %cst_39 = arith.constant dense<0.000000e+00> : vector<8x16x16xf32>
    %110 = tpu.matmul %109, %88, %cst_39 {dimension_numbers = #tpu.dot_dimension_numbers<[2], [1], [1], [2], [0, 0, 0, 1, 1, 2], [0], [0]>} : vector<8x16x16xbf16>, vector<8x16x16xbf16>, vector<8x16x16xf32> -> vector<8x16x16xf32>
    "tpu.trace_stop"() : () -> ()
    %111 = arith.truncf %103 : vector<8x16x16xf32> to vector<8x16x16xbf16>
    "tpu.trace_start"() <{level = 10 : i32, message = "gnm,gmd->gnd"}> : () -> ()
    %cst_40 = arith.constant dense<0.000000e+00> : vector<8x16x16xf32>
    %112 = tpu.matmul %111, %90, %cst_40 {dimension_numbers = #tpu.dot_dimension_numbers<[2], [1], [1], [2], [0, 0, 0, 1, 1, 2], [0], [0]>} : vector<8x16x16xbf16>, vector<8x16x16xbf16>, vector<8x16x16xf32> -> vector<8x16x16xf32>
    "tpu.trace_stop"() : () -> ()
    %113 = arith.addf %110, %112 : vector<8x16x16xf32>
    %114 = vector.broadcast %108 : vector<8x16x1xf32> to vector<8x16x16xf32>
    %115 = arith.divf %113, %114 : vector<8x16x16xf32>
    %116 = vector.shape_cast %115 : vector<8x16x16xf32> to vector<2x4x16x16xf32>
    %117 = tpu.transpose %116, [0, 2, 1, 3] : vector<2x4x16x16xf32> -> vector<2x16x4x16xf32>
    %118 = vector.shape_cast %117 : vector<2x16x4x16xf32> to vector<32x64xf32>
    %119 = arith.addf %118, %37 : vector<32x64xf32>
    %120 = arith.truncf %119 : vector<32x64xf32> to vector<32x64xbf16>
    %c0_41 = arith.constant 0 : index
    %c0_42 = arith.constant 0 : index
    %121 = vector.load %arg9[%c0_41, %c0_42] : memref<64x64xbf16, #tpu.memory_space<vmem>>, vector<64x64xbf16>
    %cst_43 = arith.constant dense<0.000000e+00> : vector<32x64xf32>
    %122 = tpu.matmul %120, %121, %cst_43 {dimension_numbers = #tpu.dot_dimension_numbers<[1], [0], [0], [1], [0, 0, 1, 1], [], []>} : vector<32x64xbf16>, vector<64x64xbf16>, vector<32x64xf32> -> vector<32x64xf32>
    %123 = arith.addf %37, %122 : vector<32x64xf32>
    %124 = vector.broadcast %4 : vector<1x64xf32> to vector<32x64xf32>
    %125 = arith.addf %123, %124 : vector<32x64xf32>
    %126 = vector.shape_cast %125 : vector<32x64xf32> to vector<2x16x64xf32>
    %c0_44 = arith.constant 0 : index
    %c0_45 = arith.constant 0 : index
    %c0_46 = arith.constant 0 : index
    %127 = vector.load %arg10[%c0_44, %c0_45, %c0_46] : memref<2x16x64xf32, #tpu.memory_space<vmem>>, vector<2x16x64xf32>
    tpu.vector_store %arg10[%c0_44, %c0_45, %c0_46], %126 {strides = array<i32>} : memref<2x16x64xf32, #tpu.memory_space<vmem>>, vector<2x16x64xf32>,
    return
  }
  func.func @transform_0(%arg0: i32) -> (i32, i32, i32) {
    %c0_i32 = arith.constant 0 : i32
    %c0_i32_0 = arith.constant 0 : i32
    %c0_i32_1 = arith.constant 0 : i32
    return %arg0, %c0_i32, %c0_i32_0 : i32, i32, i32
  }
  func.func @transform_1(%arg0: i32) -> (i32, i32, i32) {
    %c0_i32 = arith.constant 0 : i32
    %c0_i32_0 = arith.constant 0 : i32
    %c0_i32_1 = arith.constant 0 : i32
    return %arg0, %c0_i32, %c0_i32_0 : i32, i32, i32
  }
  func.func @transform_2(%arg0: i32) -> (i32, i32) {
    %c0_i32 = arith.constant 0 : i32
    %c0_i32_0 = arith.constant 0 : i32
    %c0_i32_1 = arith.constant 0 : i32
    return %c0_i32, %c0_i32_0 : i32, i32
  }
  func.func @transform_3(%arg0: i32) -> (i32, i32) {
    %c0_i32 = arith.constant 0 : i32
    %c0_i32_0 = arith.constant 0 : i32
    %c0_i32_1 = arith.constant 0 : i32
    return %c0_i32, %c0_i32_0 : i32, i32
  }
  func.func @transform_4(%arg0: i32) -> (i32, i32) {
    %c0_i32 = arith.constant 0 : i32
    %c0_i32_0 = arith.constant 0 : i32
    %c0_i32_1 = arith.constant 0 : i32
    return %c0_i32, %c0_i32_0 : i32, i32
  }
  func.func @transform_5(%arg0: i32) -> (i32, i32) {
    %c0_i32 = arith.constant 0 : i32
    %c0_i32_0 = arith.constant 0 : i32
    %c0_i32_1 = arith.constant 0 : i32
    return %c0_i32, %c0_i32_0 : i32, i32
  }
  func.func @transform_6(%arg0: i32) -> (i32, i32) {
    %c0_i32 = arith.constant 0 : i32
    %c0_i32_0 = arith.constant 0 : i32
    %c0_i32_1 = arith.constant 0 : i32
    return %c0_i32, %c0_i32_0 : i32, i32
  }
  func.func @transform_7(%arg0: i32) -> (i32, i32) {
    %c0_i32 = arith.constant 0 : i32
    %c0_i32_0 = arith.constant 0 : i32
    %c0_i32_1 = arith.constant 0 : i32
    return %c0_i32, %c0_i32_0 : i32, i32
  }
  func.func @transform_8(%arg0: i32) -> (i32, i32) {
    %c0_i32 = arith.constant 0 : i32
    %c0_i32_0 = arith.constant 0 : i32
    %c0_i32_1 = arith.constant 0 : i32
    return %c0_i32, %c0_i32_0 : i32, i32
  }
  func.func @transform_9(%arg0: i32) -> (i32, i32, i32) {
    %c0_i32 = arith.constant 0 : i32
    %c0_i32_0 = arith.constant 0 : i32
    %c0_i32_1 = arith.constant 0 : i32
    return %arg0, %c0_i32, %c0_i32_0 : i32, i32, i32
  }
}

</mosaic_0001>

<llo_original>
// kernel: patch_embedding_cross_attention.1
$region0: #{patch_embedding_cross_attention.1}
  #allocation0 [shape = 'u32[]', space=smem, size = 0x4, offset = 0x4, fixed_abs, tag = 'smem constant byte address 0x4 - core index']
  #allocation1 [shape = 'u32[72,128]{1,0:T(1,128)}', space=vmem, size = 0x9000, scoped, tag = 'internal scratch']
  %s0 = inlined_call_operand.vmem [shape: f32[2,16,64], index: 0, kind: input, shape index: {}]
  %s1 = inlined_call_operand.vmem [shape: f32[2,16,64], index: 1, kind: input, shape index: {}]
  %s2 = inlined_call_operand.vmem [shape: f32[16,64], index: 2, kind: input, shape index: {}]
  %s3 = inlined_call_operand.vmem [shape: f32[16,64], index: 3, kind: input, shape index: {}]
  %s4 = inlined_call_operand.vmem [shape: f32[5,64], index: 4, kind: input, shape index: {}]
  %s5 = inlined_call_operand.vmem [shape: bf16[64,64], index: 5, kind: input, shape index: {}]
  %s6 = inlined_call_operand.vmem [shape: bf16[64,64], index: 6, kind: input, shape index: {}]
  %s7 = inlined_call_operand.vmem [shape: bf16[64,64], index: 7, kind: input, shape index: {}]
  %s8 = inlined_call_operand.vmem [shape: bf16[64,64], index: 8, kind: input, shape index: {}]
  %s9 = inlined_call_operand.vmem [shape: f32[2,16,64], index: 9, kind: output, shape index: {}]
  %s10 = sld [smem:[#allocation0]]
  $region46: #{patch_embedding_cross_attention.1} parent=0
    _
  %s12 = ssub.s32 1, %s10
  %s13 = scalar_select 0, %s12, %s10
  // Predicated region
  $region2: #{patch_embedding_cross_attention.1} parent=0 // pred_check
    _
  $region3: #{patch_embedding_cross_attention.1} parent=0 // pred_check_branch
    %15 = sbr.rel (0) target = $region5
  $region4: #{patch_embedding_cross_attention.1} parent=0 // pred_region
    _
  $region5: #{patch_embedding_cross_attention.1} parent=0 // pred_fallthru
    _
  // Predicated region
  $region6: #{patch_embedding_cross_attention.1} parent=0 // pred_check
    _
  $region7: #{patch_embedding_cross_attention.1} parent=0 // pred_check_branch
    %17 = sbr.rel (0) target = $region9
  $region8: #{patch_embedding_cross_attention.1} parent=0 // pred_region
    _
  $region9: #{patch_embedding_cross_attention.1} parent=0 // pred_fallthru
    _
  // Predicated region
  $region10: #{patch_embedding_cross_attention.1} parent=0 // pred_check
    _
  $region11: #{patch_embedding_cross_attention.1} parent=0 // pred_check_branch
    %19 = sbr.rel (0) target = $region13
  $region12: #{patch_embedding_cross_attention.1} parent=0 // pred_region
    _
  $region13: #{patch_embedding_cross_attention.1} parent=0 // pred_fallthru
    _
  // Predicated region
  $region14: #{patch_embedding_cross_attention.1} parent=0 // pred_check
    _
  $region15: #{patch_embedding_cross_attention.1} parent=0 // pred_check_branch
    %21 = sbr.rel (0) target = $region17
  $region16: #{patch_embedding_cross_attention.1} parent=0 // pred_region
    _
  $region17: #{patch_embedding_cross_attention.1} parent=0 // pred_fallthru
    _
  // Predicated region
  $region18: #{patch_embedding_cross_attention.1} parent=0 // pred_check
    _
  $region19: #{patch_embedding_cross_attention.1} parent=0 // pred_check_branch
    %23 = sbr.rel (0) target = $region21
  $region20: #{patch_embedding_cross_attention.1} parent=0 // pred_region
    _
  $region21: #{patch_embedding_cross_attention.1} parent=0 // pred_fallthru
    _
  // Predicated region
  $region22: #{patch_embedding_cross_attention.1} parent=0 // pred_check
    _
  $region23: #{patch_embedding_cross_attention.1} parent=0 // pred_check_branch
    %25 = sbr.rel (0) target = $region25
  $region24: #{patch_embedding_cross_attention.1} parent=0 // pred_region
    _
  $region25: #{patch_embedding_cross_attention.1} parent=0 // pred_fallthru
    _
  // Predicated region
  $region26: #{patch_embedding_cross_attention.1} parent=0 // pred_check
    _
  $region27: #{patch_embedding_cross_attention.1} parent=0 // pred_check_branch
    %27 = sbr.rel (0) target = $region29
  $region28: #{patch_embedding_cross_attention.1} parent=0 // pred_region
    _
  $region29: #{patch_embedding_cross_attention.1} parent=0 // pred_fallthru
    _
  // Predicated region
  $region30: #{patch_embedding_cross_attention.1} parent=0 // pred_check
    _
  $region31: #{patch_embedding_cross_attention.1} parent=0 // pred_check_branch
    %29 = sbr.rel (0) target = $region33
  $region32: #{patch_embedding_cross_attention.1} parent=0 // pred_region
    _
  $region33: #{patch_embedding_cross_attention.1} parent=0 // pred_fallthru
    _
  // Predicated region
  $region34: #{patch_embedding_cross_attention.1} parent=0 // pred_check
    _
  $region35: #{patch_embedding_cross_attention.1} parent=0 // pred_check_branch
    %31 = sbr.rel (0) target = $region37
  $region36: #{patch_embedding_cross_attention.1} parent=0 // pred_region
    _
  $region37: #{patch_embedding_cross_attention.1} parent=0 // pred_fallthru
    _
  %v33 = vld [vmem:[%s4] sm:$0x1]
  %v34 = vld [vmem:[%s4 + $0x1] sm:$0x1]
  %v35 = vld [vmem:[%s4 + $0x2] sm:$0x1]
  %v36 = vld [vmem:[%s4 + $0x3] sm:$0x1]
  %v37 = vld [vmem:[%s4 + $0x4] sm:$0x1]
  %v38 = vld [vmem:[%s0] sm:$0xff]
  %v39 = vld [vmem:[%s0 + $0x8] sm:$0xff]
  %v40 = vld [vmem:[%s0 + $0x10] sm:$0xff]
  %v41 = vld [vmem:[%s0 + $0x18] sm:$0xff]
  %v42 = vld [vmem:[%s2] sm:$0xff]
  %v43 = vld [vmem:[%s2 + $0x8] sm:$0xff]
  %v44 = vadd.f32 %v38, %v42
  %v45 = vadd.f32 %v39, %v43
  %v46 = vadd.f32 %v40, %v42
  %v47 = vadd.f32 %v41, %v43
  %v48 = vld [vmem:[%s1] sm:$0xff]
  %v49 = vld [vmem:[%s1 + $0x8] sm:$0xff]
  %v50 = vld [vmem:[%s1 + $0x10] sm:$0xff]
  %v51 = vld [vmem:[%s1 + $0x18] sm:$0xff]
  %v52 = vld [vmem:[%s3] sm:$0xff]
  %v53 = vld [vmem:[%s3 + $0x8] sm:$0xff]
  %v54 = vadd.f32 %v48, %v52
  %v55 = vadd.f32 %v49, %v53
  %v56 = vadd.f32 %v50, %v52
  %v57 = vadd.f32 %v51, %v53
  %vm58 = vcmask 523264
  %v59 = vsel %vm58, %v44, 0.0
  %60 = vadd.xlane.f32.xlu0 %v59
  %v61 = vpop.xlane.xlu0 %60
  %v62 = vsel %vm58, %v45, 0.0
  %63 = vadd.xlane.f32.xlu0 %v62
  %v64 = vpop.xlane.xlu0 %63
  %v65 = vsel %vm58, %v46, 0.0
  %66 = vadd.xlane.f32.xlu0 %v65
  %v67 = vpop.xlane.xlu0 %66
  %v68 = vsel %vm58, %v47, 0.0
  %69 = vadd.xlane.f32.xlu0 %v68
  %v70 = vpop.xlane.xlu0 %69
  %v71 = vrcp.pop 64.0
  %v72 = vmul.f32 64.0, %v71
  %v73 = vsub.f32 1.0, %v72
  %v74 = vmul.f32 %v71, %v73
  %v75 = vadd.f32 %v71, %v74
  %vm76 = vweird.f32 %v71
  %v77 = vsel %vm76, %v71, %v75
  %v78 = vmul.f32 %v61, %v77
  %v79 = vmul.f32 %v64, %v77
  %v80 = vmul.f32 %v67, %v77
  %v81 = vmul.f32 %v70, %v77
  %v82 = vsub.f32 %v44, %v78
  %v83 = vsub.f32 %v45, %v79
  %v84 = vsub.f32 %v46, %v80
  %v85 = vsub.f32 %v47, %v81
  %v86 = vmul.f32 %v82, %v82
  %v87 = vmul.f32 %v83, %v83
  %v88 = vmul.f32 %v84, %v84
  %v89 = vmul.f32 %v85, %v85
  %v90 = vsel %vm58, %v86, 0.0
  %91 = vadd.xlane.f32.xlu0 %v90
  %v92 = vpop.xlane.xlu0 %91
  %v93 = vsel %vm58, %v87, 0.0
  %94 = vadd.xlane.f32.xlu0 %v93
  %v95 = vpop.xlane.xlu0 %94
  %v96 = vsel %vm58, %v88, 0.0
  %97 = vadd.xlane.f32.xlu0 %v96
  %v98 = vpop.xlane.xlu0 %97
  %v99 = vsel %vm58, %v89, 0.0
  %100 = vadd.xlane.f32.xlu0 %v99
  %v101 = vpop.xlane.xlu0 %100
  %v102 = vmul.f32 %v92, %v77
  %v103 = vmul.f32 %v95, %v77
  %v104 = vmul.f32 %v98, %v77
  %v105 = vmul.f32 %v101, %v77
  %v106 = vadd.f32 %v102, 1e-05
  %v107 = vadd.f32 %v103, 1e-05
  %v108 = vadd.f32 %v104, 1e-05
  %v109 = vadd.f32 %v105, 1e-05
  %v110 = vrsqrt.pop %v106
  %v111 = vmul.f32 %v110, %v106
  %v112 = vmul.f32 %v111, %v110
  %v113 = vmul.f32 0.5, %v112
  %v114 = vsub.f32 1.5, %v113
  %v115 = vmul.f32 %v110, %v114
  %vm116 = vweird.f32 %v106
  %vm117 = vweird.f32 %v110
  %vm118 = vmor %vm116, %vm117
  %v119 = vsel %vm118, %v110, %v115
  %v120 = vrsqrt.pop %v107
  %v121 = vmul.f32 %v120, %v107
  %v122 = vmul.f32 %v121, %v120
  %v123 = vmul.f32 0.5, %v122
  %v124 = vsub.f32 1.5, %v123
  %v125 = vmul.f32 %v120, %v124
  %vm126 = vweird.f32 %v107
  %vm127 = vweird.f32 %v120
  %vm128 = vmor %vm126, %vm127
  %v129 = vsel %vm128, %v120, %v125
  %v130 = vrsqrt.pop %v108
  %v131 = vmul.f32 %v130, %v108
  %v132 = vmul.f32 %v131, %v130
  %v133 = vmul.f32 0.5, %v132
  %v134 = vsub.f32 1.5, %v133
  %v135 = vmul.f32 %v130, %v134
  %vm136 = vweird.f32 %v108
  %vm137 = vweird.f32 %v130
  %vm138 = vmor %vm136, %vm137
  %v139 = vsel %vm138, %v130, %v135
  %v140 = vrsqrt.pop %v109
  %v141 = vmul.f32 %v140, %v109
  %v142 = vmul.f32 %v141, %v140
  %v143 = vmul.f32 0.5, %v142
  %v144 = vsub.f32 1.5, %v143
  %v145 = vmul.f32 %v140, %v144
  %vm146 = vweird.f32 %v109
  %vm147 = vweird.f32 %v140
  %vm148 = vmor %vm146, %vm147
  %v149 = vsel %vm148, %v140, %v145
  %v150 = vmul.f32 %v82, %v119
  %v151 = vmul.f32 %v83, %v129
  %v152 = vmul.f32 %v84, %v139
  %v153 = vmul.f32 %v85, %v149
  %v154 = vperm.slane %v33, 0
  %v155 = vmul.f32 %v150, %v154
  %v156 = vmul.f32 %v151, %v154
  %v157 = vmul.f32 %v152, %v154
  %v158 = vmul.f32 %v153, %v154
  %v159 = vperm.slane %v34, 0
  %v160 = vadd.f32 %v155, %v159
  %v161 = vadd.f32 %v156, %v159
  %v162 = vadd.f32 %v157, %v159
  %v163 = vadd.f32 %v158, %v159
  %v164 = vsel %vm58, %v54, 0.0
  %165 = vadd.xlane.f32.xlu0 %v164
  %v166 = vpop.xlane.xlu0 %165
  %v167 = vsel %vm58, %v55, 0.0
  %168 = vadd.xlane.f32.xlu0 %v167
  %v169 = vpop.xlane.xlu0 %168
  %v170 = vsel %vm58, %v56, 0.0
  %171 = vadd.xlane.f32.xlu0 %v170
  %v172 = vpop.xlane.xlu0 %171
  %v173 = vsel %vm58, %v57, 0.0
  %174 = vadd.xlane.f32.xlu0 %v173
  %v175 = vpop.xlane.xlu0 %174
  %v176 = vmul.f32 %v166, %v77
  %v177 = vmul.f32 %v169, %v77
  %v178 = vmul.f32 %v172, %v77
  %v179 = vmul.f32 %v175, %v77
  %v180 = vsub.f32 %v54, %v176
  %v181 = vsub.f32 %v55, %v177
  %v182 = vsub.f32 %v56, %v178
  %v183 = vsub.f32 %v57, %v179
  %v184 = vmul.f32 %v180, %v180
  %v185 = vmul.f32 %v181, %v181
  %v186 = vmul.f32 %v182, %v182
  %v187 = vmul.f32 %v183, %v183
  %v188 = vsel %vm58, %v184, 0.0
  %189 = vadd.xlane.f32.xlu0 %v188
  %v190 = vpop.xlane.xlu0 %189
  %v191 = vsel %vm58, %v185, 0.0
  %192 = vadd.xlane.f32.xlu0 %v191
  %v193 = vpop.xlane.xlu0 %192
  %v194 = vsel %vm58, %v186, 0.0
  %195 = vadd.xlane.f32.xlu0 %v194
  %v196 = vpop.xlane.xlu0 %195
  %v197 = vsel %vm58, %v187, 0.0
  %198 = vadd.xlane.f32.xlu0 %v197
  %v199 = vpop.xlane.xlu0 %198
  %v200 = vmul.f32 %v190, %v77
  %v201 = vmul.f32 %v193, %v77
  %v202 = vmul.f32 %v196, %v77
  %v203 = vmul.f32 %v199, %v77
  %v204 = vadd.f32 %v200, 1e-05
  %v205 = vadd.f32 %v201, 1e-05
  %v206 = vadd.f32 %v202, 1e-05
  %v207 = vadd.f32 %v203, 1e-05
  %v208 = vrsqrt.pop %v204
  %v209 = vmul.f32 %v208, %v204
  %v210 = vmul.f32 %v209, %v208
  %v211 = vmul.f32 0.5, %v210
  %v212 = vsub.f32 1.5, %v211
  %v213 = vmul.f32 %v208, %v212
  %vm214 = vweird.f32 %v204
  %vm215 = vweird.f32 %v208
  %vm216 = vmor %vm214, %vm215
  %v217 = vsel %vm216, %v208, %v213
  %v218 = vrsqrt.pop %v205
  %v219 = vmul.f32 %v218, %v205
  %v220 = vmul.f32 %v219, %v218
  %v221 = vmul.f32 0.5, %v220
  %v222 = vsub.f32 1.5, %v221
  %v223 = vmul.f32 %v218, %v222
  %vm224 = vweird.f32 %v205
  %vm225 = vweird.f32 %v218
  %vm226 = vmor %vm224, %vm225
  %v227 = vsel %vm226, %v218, %v223
  %v228 = vrsqrt.pop %v206
  %v229 = vmul.f32 %v228, %v206
  %v230 = vmul.f32 %v229, %v228
  %v231 = vmul.f32 0.5, %v230
  %v232 = vsub.f32 1.5, %v231
  %v233 = vmul.f32 %v228, %v232
  %vm234 = vweird.f32 %v206
  %vm235 = vweird.f32 %v228
  %vm236 = vmor %vm234, %vm235
  %v237 = vsel %vm236, %v228, %v233
  %v238 = vrsqrt.pop %v207
  %v239 = vmul.f32 %v238, %v207
  %v240 = vmul.f32 %v239, %v238
  %v241 = vmul.f32 0.5, %v240
  %v242 = vsub.f32 1.5, %v241
  %v243 = vmul.f32 %v238, %v242
  %vm244 = vweird.f32 %v207
  %vm245 = vweird.f32 %v238
  %vm246 = vmor %vm244, %vm245
  %v247 = vsel %vm246, %v238, %v243
  %v248 = vmul.f32 %v180, %v217
  %v249 = vmul.f32 %v181, %v227
  %v250 = vmul.f32 %v182, %v237
  %v251 = vmul.f32 %v183, %v247
  %v252 = vperm.slane %v35, 0
  %v253 = vmul.f32 %v248, %v252
  %v254 = vmul.f32 %v249, %v252
  %v255 = vmul.f32 %v250, %v252
  %v256 = vmul.f32 %v251, %v252
  %v257 = vperm.slane %v36, 0
  %v258 = vadd.f32 %v253, %v257
  %v259 = vadd.f32 %v254, %v257
  %v260 = vadd.f32 %v255, %v257
  %v261 = vadd.f32 %v256, %v257
  %v262 = vpack.c.bf16 %v160, %v160
  %v263 = vpack.c.bf16 %v161, %v161
  %v264 = vpack.c.bf16 %v162, %v162
  %v265 = vpack.c.bf16 %v163, %v163
  %v266 = vpack.c.bf16 %v258, %v258
  %v267 = vpack.c.bf16 %v259, %v259
  %v268 = vpack.c.bf16 %v260, %v260
  %v269 = vpack.c.bf16 %v261, %v261
  %v270 = vld [vmem:[%s5] sm:$0xf]
  %v271 = vld [vmem:[%s5 + $0x4] sm:$0xf]
  %v272 = vld [vmem:[%s5 + $0x8] sm:$0xf]
  %v273 = vld [vmem:[%s5 + $0xc] sm:$0xf]
  %v274 = vld [vmem:[%s5 + $0x10] sm:$0xf]
  %v275 = vld [vmem:[%s5 + $0x14] sm:$0xf]
  %v276 = vld [vmem:[%s5 + $0x18] sm:$0xf]
  %v277 = vld [vmem:[%s5 + $0x1c] sm:$0xf]
  %v282 = vunpack.c.l.b16 %v262
  %v283 = vunpack.c.l.b16 %v263
  %v284 = vunpack.c.l.b16 %v264
  %v285 = vunpack.c.l.b16 %v265
  %v286 = vpack.c.b16 %v283, %v282
  %v287 = vpack.c.b16 %v285, %v284
  %v296 = vunpack.c.l.b16 %v270
  %v297 = vunpack.c.l.b16 %v271
  %v298 = vunpack.c.l.b16 %v272
  %v299 = vunpack.c.l.b16 %v273
  %v300 = vunpack.c.l.b16 %v274
  %v301 = vunpack.c.l.b16 %v275
  %v302 = vunpack.c.l.b16 %v276
  %v303 = vunpack.c.l.b16 %v277
  %v304 = vpack.c.b16 %v297, %v296
  %v305 = vpack.c.b16 %v299, %v298
  %v306 = vpack.c.b16 %v301, %v300
  %v307 = vpack.c.b16 %v303, %v302
  %v313 = vsel %vm58, %v286, 0
  %v316 = vsel %vm58, %v287, 0
  %318 = vmatpush.bf16.msra.mxu0 0
  %319 = vmatpush.bf16.msra.mxu0 0
  %320 = vmatpush.bf16.msra.mxu0 0
  %321 = vmatpush.bf16.msra.mxu0 0
  %322 = vmatpush.bf16.msra.mxu0 %v307
  %323 = vmatpush.bf16.msra.mxu0 %v306
  %324 = vmatpush.bf16.msra.mxu0 %v305
  %325 = vmatpush.bf16.msra.mxu0 %v304
  %326 = vmatmul.bf16.gmra.mxu0 %v313
  %v327 = vpop.f32.mrf.mxu0
  %v328 = vadd.f32 0.0, %v327
  %v329 = vpop.f32.mrf.mxu0
  %v330 = vadd.f32 0.0, %v329
  %331 = vmatmul.bf16.gmra.mxu0 %v316
  %v332 = vpop.f32.mrf.mxu0
  %v333 = vadd.f32 0.0, %v332
  %v334 = vpop.f32.mrf.mxu0
  %v335 = vadd.f32 0.0, %v334
  %336 = vdwg.mxu0
  %v341 = vunpack.c.l.b16 %v266
  %v342 = vunpack.c.l.b16 %v267
  %v343 = vunpack.c.l.b16 %v268
  %v344 = vunpack.c.l.b16 %v269
  %v345 = vpack.c.b16 %v342, %v341
  %v346 = vpack.c.b16 %v344, %v343
  %v347 = vld [vmem:[%s6] sm:$0xf]
  %v348 = vld [vmem:[%s6 + $0x4] sm:$0xf]
  %v349 = vld [vmem:[%s6 + $0x8] sm:$0xf]
  %v350 = vld [vmem:[%s6 + $0xc] sm:$0xf]
  %v351 = vld [vmem:[%s6 + $0x10] sm:$0xf]
  %v352 = vld [vmem:[%s6 + $0x14] sm:$0xf]
  %v353 = vld [vmem:[%s6 + $0x18] sm:$0xf]
  %v354 = vld [vmem:[%s6 + $0x1c] sm:$0xf]
  %v363 = vunpack.c.l.b16 %v347
  %v364 = vunpack.c.l.b16 %v348
  %v365 = vunpack.c.l.b16 %v349
  %v366 = vunpack.c.l.b16 %v350
  %v367 = vunpack.c.l.b16 %v351
  %v368 = vunpack.c.l.b16 %v352
  %v369 = vunpack.c.l.b16 %v353
  %v370 = vunpack.c.l.b16 %v354
  %v371 = vpack.c.b16 %v364, %v363
  %v372 = vpack.c.b16 %v366, %v365
  %v373 = vpack.c.b16 %v368, %v367
  %v374 = vpack.c.b16 %v370, %v369
  %v380 = vsel %vm58, %v345, 0
  %v383 = vsel %vm58, %v346, 0
  %385 = vmatpush.bf16.msra.mxu0 0
  %386 = vmatpush.bf16.msra.mxu0 0
  %387 = vmatpush.bf16.msra.mxu0 0
  %388 = vmatpush.bf16.msra.mxu0 0
  %389 = vmatpush.bf16.msra.mxu0 %v374
  %390 = vmatpush.bf16.msra.mxu0 %v373
  %391 = vmatpush.bf16.msra.mxu0 %v372
  %392 = vmatpush.bf16.msra.mxu0 %v371
  %393 = vmatmul.bf16.gmra.mxu0 %v313
  %v394 = vpop.f32.mrf.mxu0
  %v395 = vadd.f32 0.0, %v394
  %v396 = vpop.f32.mrf.mxu0
  %v397 = vadd.f32 0.0, %v396
  %398 = vmatmul.bf16.gmra.mxu0 %v316
  %v399 = vpop.f32.mrf.mxu0
  %v400 = vadd.f32 0.0, %v399
  %v401 = vpop.f32.mrf.mxu0
  %v402 = vadd.f32 0.0, %v401
  %403 = vmatmul.bf16.gmra.mxu0 %v380
  %v404 = vpop.f32.mrf.mxu0
  %v405 = vadd.f32 0.0, %v404
  %v406 = vpop.f32.mrf.mxu0
  %v407 = vadd.f32 0.0, %v406
  %408 = vmatmul.bf16.gmra.mxu0 %v383
  %v409 = vpop.f32.mrf.mxu0
  %v410 = vadd.f32 0.0, %v409
  %v411 = vpop.f32.mrf.mxu0
  %v412 = vadd.f32 0.0, %v411
  %413 = vdwg.mxu0
  %v414 = vld [vmem:[%s7] sm:$0xf]
  %v415 = vld [vmem:[%s7 + $0x4] sm:$0xf]
  %v416 = vld [vmem:[%s7 + $0x8] sm:$0xf]
  %v417 = vld [vmem:[%s7 + $0xc] sm:$0xf]
  %v418 = vld [vmem:[%s7 + $0x10] sm:$0xf]
  %v419 = vld [vmem:[%s7 + $0x14] sm:$0xf]
  %v420 = vld [vmem:[%s7 + $0x18] sm:$0xf]
  %v421 = vld [vmem:[%s7 + $0x1c] sm:$0xf]
  %v430 = vunpack.c.l.b16 %v414
  %v431 = vunpack.c.l.b16 %v415
  %v432 = vunpack.c.l.b16 %v416
  %v433 = vunpack.c.l.b16 %v417
  %v434 = vunpack.c.l.b16 %v418
  %v435 = vunpack.c.l.b16 %v419
  %v436 = vunpack.c.l.b16 %v420
  %v437 = vunpack.c.l.b16 %v421
  %v438 = vpack.c.b16 %v431, %v430
  %v439 = vpack.c.b16 %v433, %v432
  %v440 = vpack.c.b16 %v435, %v434
  %v441 = vpack.c.b16 %v437, %v436
  %446 = vmatpush.bf16.msra.mxu0 0
  %447 = vmatpush.bf16.msra.mxu0 0
  %448 = vmatpush.bf16.msra.mxu0 0
  %449 = vmatpush.bf16.msra.mxu0 0
  %450 = vmatpush.bf16.msra.mxu0 %v441
  %451 = vmatpush.bf16.msra.mxu0 %v440
  %452 = vmatpush.bf16.msra.mxu0 %v439
  %453 = vmatpush.bf16.msra.mxu0 %v438
  %454 = vmatmul.bf16.gmra.mxu0 %v313
  %v455 = vpop.f32.mrf.mxu0
  %v456 = vadd.f32 0.0, %v455
  %v457 = vpop.f32.mrf.mxu0
  %v458 = vadd.f32 0.0, %v457
  %459 = vmatmul.bf16.gmra.mxu0 %v316
  %v460 = vpop.f32.mrf.mxu0
  %v461 = vadd.f32 0.0, %v460
  %v462 = vpop.f32.mrf.mxu0
  %v463 = vadd.f32 0.0, %v462
  %464 = vmatmul.bf16.gmra.mxu0 %v380
  %v465 = vpop.f32.mrf.mxu0
  %v466 = vadd.f32 0.0, %v465
  %v467 = vpop.f32.mrf.mxu0
  %v468 = vadd.f32 0.0, %v467
  %469 = vmatmul.bf16.gmra.mxu0 %v383
  %v470 = vpop.f32.mrf.mxu0
  %v471 = vadd.f32 0.0, %v470
  %v472 = vpop.f32.mrf.mxu0
  %v473 = vadd.f32 0.0, %v472
  %474 = vdwg.mxu0
  %479 = vrot.lane.b32.xlu0 %v328, 112
  %v480 = vpop.permute.xlu0 %479
  %481 = vrot.lane.b32.xlu0 %v330, 112
  %v482 = vpop.permute.xlu0 %481
  %483 = vrot.lane.b32.xlu0 %v333, 112
  %v484 = vpop.permute.xlu0 %483
  %485 = vrot.lane.b32.xlu0 %v335, 112
  %v486 = vpop.permute.xlu0 %485
  %491 = vrot.lane.b32.xlu0 %v328, 96
  %v492 = vpop.permute.xlu0 %491
  %493 = vrot.lane.b32.xlu0 %v330, 96
  %v494 = vpop.permute.xlu0 %493
  %495 = vrot.lane.b32.xlu0 %v333, 96
  %v496 = vpop.permute.xlu0 %495
  %497 = vrot.lane.b32.xlu0 %v335, 96
  %v498 = vpop.permute.xlu0 %497
  %503 = vrot.lane.b32.xlu0 %v328, 80
  %v504 = vpop.permute.xlu0 %503
  %505 = vrot.lane.b32.xlu0 %v330, 80
  %v506 = vpop.permute.xlu0 %505
  %507 = vrot.lane.b32.xlu0 %v333, 80
  %v508 = vpop.permute.xlu0 %507
  %509 = vrot.lane.b32.xlu0 %v335, 80
  %v510 = vpop.permute.xlu0 %509
  %v515 = vrot.slane %v492, 4
  %vm516 = vcmask 1047556
  %v517 = vsel %vm516, %v515, %v328
  %v518 = vrot.slane %v328, 4
  %v519 = vsel %vm516, %v492, %v518
  %v521 = vunpack.c.l.s4 1983009808
  %v522 = vunpack.c.0.s8 %v521
  %v523 = vperm.slane %v517, %v522
  %v525 = vunpack.c.l.s4 1983009808
  %v526 = vunpack.c.0.s8 %v525
  %v527 = vperm.slane %v519, %v526
  %v528 = vrot.slane %v504, 4
  %v529 = vsel %vm516, %v528, %v480
  %v530 = vrot.slane %v480, 4
  %v531 = vsel %vm516, %v504, %v530
  %v533 = vunpack.c.l.s4 1983009808
  %v534 = vunpack.c.0.s8 %v533
  %v535 = vperm.slane %v529, %v534
  %v537 = vunpack.c.l.s4 1983009808
  %v538 = vunpack.c.0.s8 %v537
  %v539 = vperm.slane %v531, %v538
  %v540 = vrot.slane %v535, 4
  %v541 = vsel %vm516, %v540, %v523
  %v542 = vrot.slane %v523, 4
  %v543 = vsel %vm516, %v535, %v542
  %v545 = vunpack.c.l.s4 1934713408
  %v546 = vunpack.c.0.s8 %v545
  %v547 = vperm.slane %v541, %v546
  %v549 = vunpack.c.l.s4 1934713408
  %v550 = vunpack.c.0.s8 %v549
  %v551 = vperm.slane %v543, %v550
  %v552 = vrot.slane %v539, 4
  %v553 = vsel %vm516, %v552, %v527
  %v554 = vrot.slane %v527, 4
  %v555 = vsel %vm516, %v539, %v554
  %v557 = vunpack.c.l.s4 1934713408
  %v558 = vunpack.c.0.s8 %v557
  %v559 = vperm.slane %v553, %v558
  %v561 = vunpack.c.l.s4 1934713408
  %v562 = vunpack.c.0.s8 %v561
  %v563 = vperm.slane %v555, %v562
  %v564 = vrot.slane %v547, 4
  %v565 = vsel %vm516, 0.0, %v564
  %v566 = vrot.slane %v551, 4
  %v567 = vsel %vm516, 0.0, %v566
  %v568 = vrot.slane %v559, 4
  %v569 = vsel %vm516, 0.0, %v568
  %v570 = vrot.slane %v563, 4
  %v571 = vsel %vm516, 0.0, %v570
  %v572 = vrot.slane %v494, 4
  %v573 = vsel %vm516, %v572, %v330
  %v574 = vrot.slane %v330, 4
  %v575 = vsel %vm516, %v494, %v574
  %v577 = vunpack.c.l.s4 1983009808
  %v578 = vunpack.c.0.s8 %v577
  %v579 = vperm.slane %v573, %v578
  %v581 = vunpack.c.l.s4 1983009808
  %v582 = vunpack.c.0.s8 %v581
  %v583 = vperm.slane %v575, %v582
  %v584 = vrot.slane %v506, 4
  %v585 = vsel %vm516, %v584, %v482
  %v586 = vrot.slane %v482, 4
  %v587 = vsel %vm516, %v506, %v586
  %v589 = vunpack.c.l.s4 1983009808
  %v590 = vunpack.c.0.s8 %v589
  %v591 = vperm.slane %v585, %v590
  %v593 = vunpack.c.l.s4 1983009808
  %v594 = vunpack.c.0.s8 %v593
  %v595 = vperm.slane %v587, %v594
  %v596 = vrot.slane %v591, 4
  %v597 = vsel %vm516, %v596, %v579
  %v598 = vrot.slane %v579, 4
  %v599 = vsel %vm516, %v591, %v598
  %v601 = vunpack.c.l.s4 1934713408
  %v602 = vunpack.c.0.s8 %v601
  %v603 = vperm.slane %v597, %v602
  %v605 = vunpack.c.l.s4 1934713408
  %v606 = vunpack.c.0.s8 %v605
  %v607 = vperm.slane %v599, %v606
  %v608 = vrot.slane %v595, 4
  %v609 = vsel %vm516, %v608, %v583
  %v610 = vrot.slane %v583, 4
  %v611 = vsel %vm516, %v595, %v610
  %v613 = vunpack.c.l.s4 1934713408
  %v614 = vunpack.c.0.s8 %v613
  %v615 = vperm.slane %v609, %v614
  %v617 = vunpack.c.l.s4 1934713408
  %v618 = vunpack.c.0.s8 %v617
  %v619 = vperm.slane %v611, %v618
  %v620 = vrot.slane %v603, 4
  %v621 = vsel %vm516, 0.0, %v620
  %v622 = vrot.slane %v607, 4
  %v623 = vsel %vm516, 0.0, %v622
  %v624 = vrot.slane %v615, 4
  %v625 = vsel %vm516, 0.0, %v624
  %v626 = vrot.slane %v619, 4
  %v627 = vsel %vm516, 0.0, %v626
  %v628 = vrot.slane %v496, 4
  %v629 = vsel %vm516, %v628, %v333
  %v630 = vrot.slane %v333, 4
  %v631 = vsel %vm516, %v496, %v630
  %v633 = vunpack.c.l.s4 1983009808
  %v634 = vunpack.c.0.s8 %v633
  %v635 = vperm.slane %v629, %v634
  %v637 = vunpack.c.l.s4 1983009808
  %v638 = vunpack.c.0.s8 %v637
  %v639 = vperm.slane %v631, %v638
  %v640 = vrot.slane %v508, 4
  %v641 = vsel %vm516, %v640, %v484
  %v642 = vrot.slane %v484, 4
  %v643 = vsel %vm516, %v508, %v642
  %v645 = vunpack.c.l.s4 1983009808
  %v646 = vunpack.c.0.s8 %v645
  %v647 = vperm.slane %v641, %v646
  %v649 = vunpack.c.l.s4 1983009808
  %v650 = vunpack.c.0.s8 %v649
  %v651 = vperm.slane %v643, %v650
  %v652 = vrot.slane %v647, 4
  %v653 = vsel %vm516, %v652, %v635
  %v654 = vrot.slane %v635, 4
  %v655 = vsel %vm516, %v647, %v654
  %v657 = vunpack.c.l.s4 1934713408
  %v658 = vunpack.c.0.s8 %v657
  %v659 = vperm.slane %v653, %v658
  %v661 = vunpack.c.l.s4 1934713408
  %v662 = vunpack.c.0.s8 %v661
  %v663 = vperm.slane %v655, %v662
  %v664 = vrot.slane %v651, 4
  %v665 = vsel %vm516, %v664, %v639
  %v666 = vrot.slane %v639, 4
  %v667 = vsel %vm516, %v651, %v666
  %v669 = vunpack.c.l.s4 1934713408
  %v670 = vunpack.c.0.s8 %v669
  %v671 = vperm.slane %v665, %v670
  %v673 = vunpack.c.l.s4 1934713408
  %v674 = vunpack.c.0.s8 %v673
  %v675 = vperm.slane %v667, %v674
  %v676 = vrot.slane %v659, 4
  %v677 = vsel %vm516, 0.0, %v676
  %v678 = vrot.slane %v663, 4
  %v679 = vsel %vm516, 0.0, %v678
  %v680 = vrot.slane %v671, 4
  %v681 = vsel %vm516, 0.0, %v680
  %v682 = vrot.slane %v675, 4
  %v683 = vsel %vm516, 0.0, %v682
  %v684 = vrot.slane %v498, 4
  %v685 = vsel %vm516, %v684, %v335
  %v686 = vrot.slane %v335, 4
  %v687 = vsel %vm516, %v498, %v686
  %v689 = vunpack.c.l.s4 1983009808
  %v690 = vunpack.c.0.s8 %v689
  %v691 = vperm.slane %v685, %v690
  %v693 = vunpack.c.l.s4 1983009808
  %v694 = vunpack.c.0.s8 %v693
  %v695 = vperm.slane %v687, %v694
  %v696 = vrot.slane %v510, 4
  %v697 = vsel %vm516, %v696, %v486
  %v698 = vrot.slane %v486, 4
  %v699 = vsel %vm516, %v510, %v698
  %v701 = vunpack.c.l.s4 1983009808
  %v702 = vunpack.c.0.s8 %v701
  %v703 = vperm.slane %v697, %v702
  %v705 = vunpack.c.l.s4 1983009808
  %v706 = vunpack.c.0.s8 %v705
  %v707 = vperm.slane %v699, %v706
  %v708 = vrot.slane %v703, 4
  %v709 = vsel %vm516, %v708, %v691
  %v710 = vrot.slane %v691, 4
  %v711 = vsel %vm516, %v703, %v710
  %v713 = vunpack.c.l.s4 1934713408
  %v714 = vunpack.c.0.s8 %v713
  %v715 = vperm.slane %v709, %v714
  %v717 = vunpack.c.l.s4 1934713408
  %v718 = vunpack.c.0.s8 %v717
  %v719 = vperm.slane %v711, %v718
  %v720 = vrot.slane %v707, 4
  %v721 = vsel %vm516, %v720, %v695
  %v722 = vrot.slane %v695, 4
  %v723 = vsel %vm516, %v707, %v722
  %v725 = vunpack.c.l.s4 1934713408
  %v726 = vunpack.c.0.s8 %v725
  %v727 = vperm.slane %v721, %v726
  %v729 = vunpack.c.l.s4 1934713408
  %v730 = vunpack.c.0.s8 %v729
  %v731 = vperm.slane %v723, %v730
  %v732 = vrot.slane %v715, 4
  %v733 = vsel %vm516, 0.0, %v732
  %v734 = vrot.slane %v719, 4
  %v735 = vsel %vm516, 0.0, %v734
  %v736 = vrot.slane %v727, 4
  %v737 = vsel %vm516, 0.0, %v736
  %v738 = vrot.slane %v731, 4
  %v739 = vsel %vm516, 0.0, %v738
  %v740 = vsel %vm516, %v566, %v547
  %v742 = vunpack.c.l.s4 1983009808
  %v743 = vunpack.c.0.s8 %v742
  %v744 = vperm.slane %v740, %v743
  %v745 = vrot.slane %v567, 4
  %v746 = vsel %vm516, %v745, %v565
  %v748 = vunpack.c.l.s4 1983009808
  %v749 = vunpack.c.0.s8 %v748
  %v750 = vperm.slane %v746, %v749
  %v751 = vsel %vm516, %v570, %v559
  %v753 = vunpack.c.l.s4 1983009808
  %v754 = vunpack.c.0.s8 %v753
  %v755 = vperm.slane %v751, %v754
  %v756 = vrot.slane %v571, 4
  %v757 = vsel %vm516, %v756, %v569
  %v759 = vunpack.c.l.s4 1983009808
  %v760 = vunpack.c.0.s8 %v759
  %v761 = vperm.slane %v757, %v760
  %v762 = vrot.slane %v750, 4
  %v763 = vsel %vm516, %v762, %v744
  %v764 = vrot.slane %v744, 4
  %v765 = vsel %vm516, %v750, %v764
  %v767 = vunpack.c.l.s4 1934713408
  %v768 = vunpack.c.0.s8 %v767
  %v769 = vperm.slane %v763, %v768
  %v771 = vunpack.c.l.s4 1934713408
  %v772 = vunpack.c.0.s8 %v771
  %v773 = vperm.slane %v765, %v772
  %v774 = vrot.slane %v761, 4
  %v775 = vsel %vm516, %v774, %v755
  %v776 = vrot.slane %v755, 4
  %v777 = vsel %vm516, %v761, %v776
  %v779 = vunpack.c.l.s4 1934713408
  %v780 = vunpack.c.0.s8 %v779
  %v781 = vperm.slane %v775, %v780
  %v783 = vunpack.c.l.s4 1934713408
  %v784 = vunpack.c.0.s8 %v783
  %v785 = vperm.slane %v777, %v784
  %v786 = vrot.slane %v781, 4
  %v787 = vsel %vm516, %v786, %v769
  %v788 = vrot.slane %v769, 4
  %v789 = vsel %vm516, %v781, %v788
  %v790 = vrot.slane %v785, 4
  %v791 = vsel %vm516, %v790, %v773
  %v792 = vrot.slane %v773, 4
  %v793 = vsel %vm516, %v785, %v792
  %v794 = vsel %vm516, %v622, %v603
  %v796 = vunpack.c.l.s4 1983009808
  %v797 = vunpack.c.0.s8 %v796
  %v798 = vperm.slane %v794, %v797
  %v799 = vrot.slane %v623, 4
  %v800 = vsel %vm516, %v799, %v621
  %v802 = vunpack.c.l.s4 1983009808
  %v803 = vunpack.c.0.s8 %v802
  %v804 = vperm.slane %v800, %v803
  %v805 = vsel %vm516, %v626, %v615
  %v807 = vunpack.c.l.s4 1983009808
  %v808 = vunpack.c.0.s8 %v807
  %v809 = vperm.slane %v805, %v808
  %v810 = vrot.slane %v627, 4
  %v811 = vsel %vm516, %v810, %v625
  %v813 = vunpack.c.l.s4 1983009808
  %v814 = vunpack.c.0.s8 %v813
  %v815 = vperm.slane %v811, %v814
  %v816 = vrot.slane %v804, 4
  %v817 = vsel %vm516, %v816, %v798
  %v818 = vrot.slane %v798, 4
  %v819 = vsel %vm516, %v804, %v818
  %v821 = vunpack.c.l.s4 1934713408
  %v822 = vunpack.c.0.s8 %v821
  %v823 = vperm.slane %v817, %v822
  %v825 = vunpack.c.l.s4 1934713408
  %v826 = vunpack.c.0.s8 %v825
  %v827 = vperm.slane %v819, %v826
  %v828 = vrot.slane %v815, 4
  %v829 = vsel %vm516, %v828, %v809
  %v830 = vrot.slane %v809, 4
  %v831 = vsel %vm516, %v815, %v830
  %v833 = vunpack.c.l.s4 1934713408
  %v834 = vunpack.c.0.s8 %v833
  %v835 = vperm.slane %v829, %v834
  %v837 = vunpack.c.l.s4 1934713408
  %v838 = vunpack.c.0.s8 %v837
  %v839 = vperm.slane %v831, %v838
  %v840 = vrot.slane %v835, 4
  %v841 = vsel %vm516, %v840, %v823
  %v842 = vrot.slane %v823, 4
  %v843 = vsel %vm516, %v835, %v842
  %v844 = vrot.slane %v839, 4
  %v845 = vsel %vm516, %v844, %v827
  %v846 = vrot.slane %v827, 4
  %v847 = vsel %vm516, %v839, %v846
  %v848 = vsel %vm516, %v678, %v659
  %v850 = vunpack.c.l.s4 1983009808
  %v851 = vunpack.c.0.s8 %v850
  %v852 = vperm.slane %v848, %v851
  %v853 = vrot.slane %v679, 4
  %v854 = vsel %vm516, %v853, %v677
  %v856 = vunpack.c.l.s4 1983009808
  %v857 = vunpack.c.0.s8 %v856
  %v858 = vperm.slane %v854, %v857
  %v859 = vsel %vm516, %v682, %v671
  %v861 = vunpack.c.l.s4 1983009808
  %v862 = vunpack.c.0.s8 %v861
  %v863 = vperm.slane %v859, %v862
  %v864 = vrot.slane %v683, 4
  %v865 = vsel %vm516, %v864, %v681
  %v867 = vunpack.c.l.s4 1983009808
  %v868 = vunpack.c.0.s8 %v867
  %v869 = vperm.slane %v865, %v868
  %v870 = vrot.slane %v858, 4
  %v871 = vsel %vm516, %v870, %v852
  %v872 = vrot.slane %v852, 4
  %v873 = vsel %vm516, %v858, %v872
  %v875 = vunpack.c.l.s4 1934713408
  %v876 = vunpack.c.0.s8 %v875
  %v877 = vperm.slane %v871, %v876
  %v879 = vunpack.c.l.s4 1934713408
  %v880 = vunpack.c.0.s8 %v879
  %v881 = vperm.slane %v873, %v880
  %v882 = vrot.slane %v869, 4
  %v883 = vsel %vm516, %v882, %v863
  %v884 = vrot.slane %v863, 4
  %v885 = vsel %vm516, %v869, %v884
  %v887 = vunpack.c.l.s4 1934713408
  %v888 = vunpack.c.0.s8 %v887
  %v889 = vperm.slane %v883, %v888
  %v891 = vunpack.c.l.s4 1934713408
  %v892 = vunpack.c.0.s8 %v891
  %v893 = vperm.slane %v885, %v892
  %v894 = vrot.slane %v889, 4
  %v895 = vsel %vm516, %v894, %v877
  %v896 = vrot.slane %v877, 4
  %v897 = vsel %vm516, %v889, %v896
  %v898 = vrot.slane %v893, 4
  %v899 = vsel %vm516, %v898, %v881
  %v900 = vrot.slane %v881, 4
  %v901 = vsel %vm516, %v893, %v900
  %v902 = vsel %vm516, %v734, %v715
  %v904 = vunpack.c.l.s4 1983009808
  %v905 = vunpack.c.0.s8 %v904
  %v906 = vperm.slane %v902, %v905
  %v907 = vrot.slane %v735, 4
  %v908 = vsel %vm516, %v907, %v733
  %v910 = vunpack.c.l.s4 1983009808
  %v911 = vunpack.c.0.s8 %v910
  %v912 = vperm.slane %v908, %v911
  %v913 = vsel %vm516, %v738, %v727
  %v915 = vunpack.c.l.s4 1983009808
  %v916 = vunpack.c.0.s8 %v915
  %v917 = vperm.slane %v913, %v916
  %v918 = vrot.slane %v739, 4
  %v919 = vsel %vm516, %v918, %v737
  %v921 = vunpack.c.l.s4 1983009808
  %v922 = vunpack.c.0.s8 %v921
  %v923 = vperm.slane %v919, %v922
  %v924 = vrot.slane %v912, 4
  %v925 = vsel %vm516, %v924, %v906
  %v926 = vrot.slane %v906, 4
  %v927 = vsel %vm516, %v912, %v926
  %v929 = vunpack.c.l.s4 1934713408
  %v930 = vunpack.c.0.s8 %v929
  %v931 = vperm.slane %v925, %v930
  %v933 = vunpack.c.l.s4 1934713408
  %v934 = vunpack.c.0.s8 %v933
  %v935 = vperm.slane %v927, %v934
  %v936 = vrot.slane %v923, 4
  %v937 = vsel %vm516, %v936, %v917
  %v938 = vrot.slane %v917, 4
  %v939 = vsel %vm516, %v923, %v938
  %v941 = vunpack.c.l.s4 1934713408
  %v942 = vunpack.c.0.s8 %v941
  %v943 = vperm.slane %v937, %v942
  %v945 = vunpack.c.l.s4 1934713408
  %v946 = vunpack.c.0.s8 %v945
  %v947 = vperm.slane %v939, %v946
  %v948 = vrot.slane %v943, 4
  %v949 = vsel %vm516, %v948, %v931
  %v950 = vrot.slane %v931, 4
  %v951 = vsel %vm516, %v943, %v950
  %v952 = vrot.slane %v947, 4
  %v953 = vsel %vm516, %v952, %v935
  %v954 = vrot.slane %v935, 4
  %v955 = vsel %vm516, %v947, %v954
  %v956 = vpack.c.bf16 %v787, %v787
  %v957 = vpack.c.bf16 %v841, %v841
  %v958 = vpack.c.bf16 %v789, %v789
  %v959 = vpack.c.bf16 %v843, %v843
  %v960 = vpack.c.bf16 %v791, %v791
  %v961 = vpack.c.bf16 %v845, %v845
  %v962 = vpack.c.bf16 %v793, %v793
  %v963 = vpack.c.bf16 %v847, %v847
  %v964 = vpack.c.bf16 %v895, %v895
  %v965 = vpack.c.bf16 %v949, %v949
  %v966 = vpack.c.bf16 %v897, %v897
  %v967 = vpack.c.bf16 %v951, %v951
  %v968 = vpack.c.bf16 %v899, %v899
  %v969 = vpack.c.bf16 %v953, %v953
  %v970 = vpack.c.bf16 %v901, %v901
  %v971 = vpack.c.bf16 %v955, %v955
  %980 = vrot.lane.b32.xlu0 %v395, 112
  %v981 = vpop.permute.xlu0 %980
  %982 = vrot.lane.b32.xlu0 %v397, 112
  %v983 = vpop.permute.xlu0 %982
  %984 = vrot.lane.b32.xlu0 %v400, 112
  %v985 = vpop.permute.xlu0 %984
  %986 = vrot.lane.b32.xlu0 %v402, 112
  %v987 = vpop.permute.xlu0 %986
  %988 = vrot.lane.b32.xlu0 %v405, 112
  %v989 = vpop.permute.xlu0 %988
  %990 = vrot.lane.b32.xlu0 %v407, 112
  %v991 = vpop.permute.xlu0 %990
  %992 = vrot.lane.b32.xlu0 %v410, 112
  %v993 = vpop.permute.xlu0 %992
  %994 = vrot.lane.b32.xlu0 %v412, 112
  %v995 = vpop.permute.xlu0 %994
  %1004 = vrot.lane.b32.xlu0 %v395, 96
  %v1005 = vpop.permute.xlu0 %1004
  %1006 = vrot.lane.b32.xlu0 %v397, 96
  %v1007 = vpop.permute.xlu0 %1006
  %1008 = vrot.lane.b32.xlu0 %v400, 96
  %v1009 = vpop.permute.xlu0 %1008
  %1010 = vrot.lane.b32.xlu0 %v402, 96
  %v1011 = vpop.permute.xlu0 %1010
  %1012 = vrot.lane.b32.xlu0 %v405, 96
  %v1013 = vpop.permute.xlu0 %1012
  %1014 = vrot.lane.b32.xlu0 %v407, 96
  %v1015 = vpop.permute.xlu0 %1014
  %1016 = vrot.lane.b32.xlu0 %v410, 96
  %v1017 = vpop.permute.xlu0 %1016
  %1018 = vrot.lane.b32.xlu0 %v412, 96
  %v1019 = vpop.permute.xlu0 %1018
  %1028 = vrot.lane.b32.xlu0 %v395, 80
  %v1029 = vpop.permute.xlu0 %1028
  %1030 = vrot.lane.b32.xlu0 %v397, 80
  %v1031 = vpop.permute.xlu0 %1030
  %1032 = vrot.lane.b32.xlu0 %v400, 80
  %v1033 = vpop.permute.xlu0 %1032
  %1034 = vrot.lane.b32.xlu0 %v402, 80
  %v1035 = vpop.permute.xlu0 %1034
  %1036 = vrot.lane.b32.xlu0 %v405, 80
  %v1037 = vpop.permute.xlu0 %1036
  %1038 = vrot.lane.b32.xlu0 %v407, 80
  %v1039 = vpop.permute.xlu0 %1038
  %1040 = vrot.lane.b32.xlu0 %v410, 80
  %v1041 = vpop.permute.xlu0 %1040
  %1042 = vrot.lane.b32.xlu0 %v412, 80
  %v1043 = vpop.permute.xlu0 %1042
  %v1052 = vrot.slane %v1005, 4
  %v1053 = vsel %vm516, %v1052, %v395
  %v1054 = vrot.slane %v395, 4
  %v1055 = vsel %vm516, %v1005, %v1054
  %v1057 = vunpack.c.l.s4 1983009808
  %v1058 = vunpack.c.0.s8 %v1057
  %v1059 = vperm.slane %v1053, %v1058
  %v1061 = vunpack.c.l.s4 1983009808
  %v1062 = vunpack.c.0.s8 %v1061
  %v1063 = vperm.slane %v1055, %v1062
  %v1064 = vrot.slane %v1029, 4
  %v1065 = vsel %vm516, %v1064, %v981
  %v1066 = vrot.slane %v981, 4
  %v1067 = vsel %vm516, %v1029, %v1066
  %v1069 = vunpack.c.l.s4 1983009808
  %v1070 = vunpack.c.0.s8 %v1069
  %v1071 = vperm.slane %v1065, %v1070
  %v1073 = vunpack.c.l.s4 1983009808
  %v1074 = vunpack.c.0.s8 %v1073
  %v1075 = vperm.slane %v1067, %v1074
  %v1076 = vrot.slane %v1071, 4
  %v1077 = vsel %vm516, %v1076, %v1059
  %v1078 = vrot.slane %v1059, 4
  %v1079 = vsel %vm516, %v1071, %v1078
  %v1081 = vunpack.c.l.s4 1934713408
  %v1082 = vunpack.c.0.s8 %v1081
  %v1083 = vperm.slane %v1077, %v1082
  %v1085 = vunpack.c.l.s4 1934713408
  %v1086 = vunpack.c.0.s8 %v1085
  %v1087 = vperm.slane %v1079, %v1086
  %v1088 = vrot.slane %v1075, 4
  %v1089 = vsel %vm516, %v1088, %v1063
  %v1090 = vrot.slane %v1063, 4
  %v1091 = vsel %vm516, %v1075, %v1090
  %v1093 = vunpack.c.l.s4 1934713408
  %v1094 = vunpack.c.0.s8 %v1093
  %v1095 = vperm.slane %v1089, %v1094
  %v1097 = vunpack.c.l.s4 1934713408
  %v1098 = vunpack.c.0.s8 %v1097
  %v1099 = vperm.slane %v1091, %v1098
  %v1100 = vrot.slane %v1083, 4
  %v1101 = vsel %vm516, 0.0, %v1100
  %v1102 = vrot.slane %v1087, 4
  %v1103 = vsel %vm516, 0.0, %v1102
  %v1104 = vrot.slane %v1095, 4
  %v1105 = vsel %vm516, 0.0, %v1104
  %v1106 = vrot.slane %v1099, 4
  %v1107 = vsel %vm516, 0.0, %v1106
  %v1108 = vrot.slane %v1007, 4
  %v1109 = vsel %vm516, %v1108, %v397
  %v1110 = vrot.slane %v397, 4
  %v1111 = vsel %vm516, %v1007, %v1110
  %v1113 = vunpack.c.l.s4 1983009808
  %v1114 = vunpack.c.0.s8 %v1113
  %v1115 = vperm.slane %v1109, %v1114
  %v1117 = vunpack.c.l.s4 1983009808
  %v1118 = vunpack.c.0.s8 %v1117
  %v1119 = vperm.slane %v1111, %v1118
  %v1120 = vrot.slane %v1031, 4
  %v1121 = vsel %vm516, %v1120, %v983
  %v1122 = vrot.slane %v983, 4
  %v1123 = vsel %vm516, %v1031, %v1122
  %v1125 = vunpack.c.l.s4 1983009808
  %v1126 = vunpack.c.0.s8 %v1125
  %v1127 = vperm.slane %v1121, %v1126
  %v1129 = vunpack.c.l.s4 1983009808
  %v1130 = vunpack.c.0.s8 %v1129
  %v1131 = vperm.slane %v1123, %v1130
  %v1132 = vrot.slane %v1127, 4
  %v1133 = vsel %vm516, %v1132, %v1115
  %v1134 = vrot.slane %v1115, 4
  %v1135 = vsel %vm516, %v1127, %v1134
  %v1137 = vunpack.c.l.s4 1934713408
  %v1138 = vunpack.c.0.s8 %v1137
  %v1139 = vperm.slane %v1133, %v1138
  %v1141 = vunpack.c.l.s4 1934713408
  %v1142 = vunpack.c.0.s8 %v1141
  %v1143 = vperm.slane %v1135, %v1142
  %v1144 = vrot.slane %v1131, 4
  %v1145 = vsel %vm516, %v1144, %v1119
  %v1146 = vrot.slane %v1119, 4
  %v1147 = vsel %vm516, %v1131, %v1146
  %v1149 = vunpack.c.l.s4 1934713408
  %v1150 = vunpack.c.0.s8 %v1149
  %v1151 = vperm.slane %v1145, %v1150
  %v1153 = vunpack.c.l.s4 1934713408
  %v1154 = vunpack.c.0.s8 %v1153
  %v1155 = vperm.slane %v1147, %v1154
  %v1156 = vrot.slane %v1139, 4
  %v1157 = vsel %vm516, 0.0, %v1156
  %v1158 = vrot.slane %v1143, 4
  %v1159 = vsel %vm516, 0.0, %v1158
  %v1160 = vrot.slane %v1151, 4
  %v1161 = vsel %vm516, 0.0, %v1160
  %v1162 = vrot.slane %v1155, 4
  %v1163 = vsel %vm516, 0.0, %v1162
  %v1164 = vrot.slane %v1009, 4
  %v1165 = vsel %vm516, %v1164, %v400
  %v1166 = vrot.slane %v400, 4
  %v1167 = vsel %vm516, %v1009, %v1166
  %v1169 = vunpack.c.l.s4 1983009808
  %v1170 = vunpack.c.0.s8 %v1169
  %v1171 = vperm.slane %v1165, %v1170
  %v1173 = vunpack.c.l.s4 1983009808
  %v1174 = vunpack.c.0.s8 %v1173
  %v1175 = vperm.slane %v1167, %v1174
  %v1176 = vrot.slane %v1033, 4
  %v1177 = vsel %vm516, %v1176, %v985
  %v1178 = vrot.slane %v985, 4
  %v1179 = vsel %vm516, %v1033, %v1178
  %v1181 = vunpack.c.l.s4 1983009808
  %v1182 = vunpack.c.0.s8 %v1181
  %v1183 = vperm.slane %v1177, %v1182
  %v1185 = vunpack.c.l.s4 1983009808
  %v1186 = vunpack.c.0.s8 %v1185
  %v1187 = vperm.slane %v1179, %v1186
  %v1188 = vrot.slane %v1183, 4
  %v1189 = vsel %vm516, %v1188, %v1171
  %v1190 = vrot.slane %v1171, 4
  %v1191 = vsel %vm516, %v1183, %v1190
  %v1193 = vunpack.c.l.s4 1934713408
  %v1194 = vunpack.c.0.s8 %v1193
  %v1195 = vperm.slane %v1189, %v1194
  %v1197 = vunpack.c.l.s4 1934713408
  %v1198 = vunpack.c.0.s8 %v1197
  %v1199 = vperm.slane %v1191, %v1198
  %v1200 = vrot.slane %v1187, 4
  %v1201 = vsel %vm516, %v1200, %v1175
  %v1202 = vrot.slane %v1175, 4
  %v1203 = vsel %vm516, %v1187, %v1202
  %v1205 = vunpack.c.l.s4 1934713408
  %v1206 = vunpack.c.0.s8 %v1205
  %v1207 = vperm.slane %v1201, %v1206
  %v1209 = vunpack.c.l.s4 1934713408
  %v1210 = vunpack.c.0.s8 %v1209
  %v1211 = vperm.slane %v1203, %v1210
  %v1212 = vrot.slane %v1195, 4
  %v1213 = vsel %vm516, 0.0, %v1212
  %v1214 = vrot.slane %v1199, 4
  %v1215 = vsel %vm516, 0.0, %v1214
  %v1216 = vrot.slane %v1207, 4
  %v1217 = vsel %vm516, 0.0, %v1216
  %v1218 = vrot.slane %v1211, 4
  %v1219 = vsel %vm516, 0.0, %v1218
  %v1220 = vrot.slane %v1011, 4
  %v1221 = vsel %vm516, %v1220, %v402
  %v1222 = vrot.slane %v402, 4
  %v1223 = vsel %vm516, %v1011, %v1222
  %v1225 = vunpack.c.l.s4 1983009808
  %v1226 = vunpack.c.0.s8 %v1225
  %v1227 = vperm.slane %v1221, %v1226
  %v1229 = vunpack.c.l.s4 1983009808
  %v1230 = vunpack.c.0.s8 %v1229
  %v1231 = vperm.slane %v1223, %v1230
  %v1232 = vrot.slane %v1035, 4
  %v1233 = vsel %vm516, %v1232, %v987
  %v1234 = vrot.slane %v987, 4
  %v1235 = vsel %vm516, %v1035, %v1234
  %v1237 = vunpack.c.l.s4 1983009808
  %v1238 = vunpack.c.0.s8 %v1237
  %v1239 = vperm.slane %v1233, %v1238
  %v1241 = vunpack.c.l.s4 1983009808
  %v1242 = vunpack.c.0.s8 %v1241
  %v1243 = vperm.slane %v1235, %v1242
  %v1244 = vrot.slane %v1239, 4
  %v1245 = vsel %vm516, %v1244, %v1227
  %v1246 = vrot.slane %v1227, 4
  %v1247 = vsel %vm516, %v1239, %v1246
  %v1249 = vunpack.c.l.s4 1934713408
  %v1250 = vunpack.c.0.s8 %v1249
  %v1251 = vperm.slane %v1245, %v1250
  %v1253 = vunpack.c.l.s4 1934713408
  %v1254 = vunpack.c.0.s8 %v1253
  %v1255 = vperm.slane %v1247, %v1254
  %v1256 = vrot.slane %v1243, 4
  %v1257 = vsel %vm516, %v1256, %v1231
  %v1258 = vrot.slane %v1231, 4
  %v1259 = vsel %vm516, %v1243, %v1258
  %v1261 = vunpack.c.l.s4 1934713408
  %v1262 = vunpack.c.0.s8 %v1261
  %v1263 = vperm.slane %v1257, %v1262
  %v1265 = vunpack.c.l.s4 1934713408
  %v1266 = vunpack.c.0.s8 %v1265
  %v1267 = vperm.slane %v1259, %v1266
  %v1268 = vrot.slane %v1251, 4
  %v1269 = vsel %vm516, 0.0, %v1268
  %v1270 = vrot.slane %v1255, 4
  %v1271 = vsel %vm516, 0.0, %v1270
  %v1272 = vrot.slane %v1263, 4
  %v1273 = vsel %vm516, 0.0, %v1272
  %v1274 = vrot.slane %v1267, 4
  %v1275 = vsel %vm516, 0.0, %v1274
  %v1276 = vrot.slane %v1013, 4
  %v1277 = vsel %vm516, %v1276, %v405
  %v1278 = vrot.slane %v405, 4
  %v1279 = vsel %vm516, %v1013, %v1278
  %v1281 = vunpack.c.l.s4 1983009808
  %v1282 = vunpack.c.0.s8 %v1281
  %v1283 = vperm.slane %v1277, %v1282
  %v1285 = vunpack.c.l.s4 1983009808
  %v1286 = vunpack.c.0.s8 %v1285
  %v1287 = vperm.slane %v1279, %v1286
  %v1288 = vrot.slane %v1037, 4
  %v1289 = vsel %vm516, %v1288, %v989
  %v1290 = vrot.slane %v989, 4
  %v1291 = vsel %vm516, %v1037, %v1290
  %v1293 = vunpack.c.l.s4 1983009808
  %v1294 = vunpack.c.0.s8 %v1293
  %v1295 = vperm.slane %v1289, %v1294
  %v1297 = vunpack.c.l.s4 1983009808
  %v1298 = vunpack.c.0.s8 %v1297
  %v1299 = vperm.slane %v1291, %v1298
  %v1300 = vrot.slane %v1295, 4
  %v1301 = vsel %vm516, %v1300, %v1283
  %v1302 = vrot.slane %v1283, 4
  %v1303 = vsel %vm516, %v1295, %v1302
  %v1305 = vunpack.c.l.s4 1934713408
  %v1306 = vunpack.c.0.s8 %v1305
  %v1307 = vperm.slane %v1301, %v1306
  %v1309 = vunpack.c.l.s4 1934713408
  %v1310 = vunpack.c.0.s8 %v1309
  %v1311 = vperm.slane %v1303, %v1310
  %v1312 = vrot.slane %v1299, 4
  %v1313 = vsel %vm516, %v1312, %v1287
  %v1314 = vrot.slane %v1287, 4
  %v1315 = vsel %vm516, %v1299, %v1314
  %v1317 = vunpack.c.l.s4 1934713408
  %v1318 = vunpack.c.0.s8 %v1317
  %v1319 = vperm.slane %v1313, %v1318
  %v1321 = vunpack.c.l.s4 1934713408
  %v1322 = vunpack.c.0.s8 %v1321
  %v1323 = vperm.slane %v1315, %v1322
  %v1324 = vrot.slane %v1307, 4
  %v1325 = vsel %vm516, 0.0, %v1324
  %v1326 = vrot.slane %v1311, 4
  %v1327 = vsel %vm516, 0.0, %v1326
  %v1328 = vrot.slane %v1319, 4
  %v1329 = vsel %vm516, 0.0, %v1328
  %v1330 = vrot.slane %v1323, 4
  %v1331 = vsel %vm516, 0.0, %v1330
  %v1332 = vrot.slane %v1015, 4
  %v1333 = vsel %vm516, %v1332, %v407
  %v1334 = vrot.slane %v407, 4
  %v1335 = vsel %vm516, %v1015, %v1334
  %v1337 = vunpack.c.l.s4 1983009808
  %v1338 = vunpack.c.0.s8 %v1337
  %v1339 = vperm.slane %v1333, %v1338
  %v1341 = vunpack.c.l.s4 1983009808
  %v1342 = vunpack.c.0.s8 %v1341
  %v1343 = vperm.slane %v1335, %v1342
  %v1344 = vrot.slane %v1039, 4
  %v1345 = vsel %vm516, %v1344, %v991
  %v1346 = vrot.slane %v991, 4
  %v1347 = vsel %vm516, %v1039, %v1346
  %v1349 = vunpack.c.l.s4 1983009808
  %v1350 = vunpack.c.0.s8 %v1349
  %v1351 = vperm.slane %v1345, %v1350
  %v1353 = vunpack.c.l.s4 1983009808
  %v1354 = vunpack.c.0.s8 %v1353
  %v1355 = vperm.slane %v1347, %v1354
  %v1356 = vrot.slane %v1351, 4
  %v1357 = vsel %vm516, %v1356, %v1339
  %v1358 = vrot.slane %v1339, 4
  %v1359 = vsel %vm516, %v1351, %v1358
  %v1361 = vunpack.c.l.s4 1934713408
  %v1362 = vunpack.c.0.s8 %v1361
  %v1363 = vperm.slane %v1357, %v1362
  %v1365 = vunpack.c.l.s4 1934713408
  %v1366 = vunpack.c.0.s8 %v1365
  %v1367 = vperm.slane %v1359, %v1366
  %v1368 = vrot.slane %v1355, 4
  %v1369 = vsel %vm516, %v1368, %v1343
  %v1370 = vrot.slane %v1343, 4
  %v1371 = vsel %vm516, %v1355, %v1370
  %v1373 = vunpack.c.l.s4 1934713408
  %v1374 = vunpack.c.0.s8 %v1373
  %v1375 = vperm.slane %v1369, %v1374
  %v1377 = vunpack.c.l.s4 1934713408
  %v1378 = vunpack.c.0.s8 %v1377
  %v1379 = vperm.slane %v1371, %v1378
  %v1380 = vrot.slane %v1363, 4
  %v1381 = vsel %vm516, 0.0, %v1380
  %v1382 = vrot.slane %v1367, 4
  %v1383 = vsel %vm516, 0.0, %v1382
  %v1384 = vrot.slane %v1375, 4
  %v1385 = vsel %vm516, 0.0, %v1384
  %v1386 = vrot.slane %v1379, 4
  %v1387 = vsel %vm516, 0.0, %v1386
  %v1388 = vrot.slane %v1017, 4
  %v1389 = vsel %vm516, %v1388, %v410
  %v1390 = vrot.slane %v410, 4
  %v1391 = vsel %vm516, %v1017, %v1390
  %v1393 = vunpack.c.l.s4 1983009808
  %v1394 = vunpack.c.0.s8 %v1393
  %v1395 = vperm.slane %v1389, %v1394
  %v1397 = vunpack.c.l.s4 1983009808
  %v1398 = vunpack.c.0.s8 %v1397
  %v1399 = vperm.slane %v1391, %v1398
  %v1400 = vrot.slane %v1041, 4
  %v1401 = vsel %vm516, %v1400, %v993
  %v1402 = vrot.slane %v993, 4
  %v1403 = vsel %vm516, %v1041, %v1402
  %v1405 = vunpack.c.l.s4 1983009808
  %v1406 = vunpack.c.0.s8 %v1405
  %v1407 = vperm.slane %v1401, %v1406
  %v1409 = vunpack.c.l.s4 1983009808
  %v1410 = vunpack.c.0.s8 %v1409
  %v1411 = vperm.slane %v1403, %v1410
  %v1412 = vrot.slane %v1407, 4
  %v1413 = vsel %vm516, %v1412, %v1395
  %v1414 = vrot.slane %v1395, 4
  %v1415 = vsel %vm516, %v1407, %v1414
  %v1417 = vunpack.c.l.s4 1934713408
  %v1418 = vunpack.c.0.s8 %v1417
  %v1419 = vperm.slane %v1413, %v1418
  %v1421 = vunpack.c.l.s4 1934713408
  %v1422 = vunpack.c.0.s8 %v1421
  %v1423 = vperm.slane %v1415, %v1422
  %v1424 = vrot.slane %v1411, 4
  %v1425 = vsel %vm516, %v1424, %v1399
  %v1426 = vrot.slane %v1399, 4
  %v1427 = vsel %vm516, %v1411, %v1426
  %v1429 = vunpack.c.l.s4 1934713408
  %v1430 = vunpack.c.0.s8 %v1429
  %v1431 = vperm.slane %v1425, %v1430
  %v1433 = vunpack.c.l.s4 1934713408
  %v1434 = vunpack.c.0.s8 %v1433
  %v1435 = vperm.slane %v1427, %v1434
  %v1436 = vrot.slane %v1419, 4
  %v1437 = vsel %vm516, 0.0, %v1436
  %v1438 = vrot.slane %v1423, 4
  %v1439 = vsel %vm516, 0.0, %v1438
  %v1440 = vrot.slane %v1431, 4
  %v1441 = vsel %vm516, 0.0, %v1440
  %v1442 = vrot.slane %v1435, 4
  %v1443 = vsel %vm516, 0.0, %v1442
  %v1444 = vrot.slane %v1019, 4
  %v1445 = vsel %vm516, %v1444, %v412
  %v1446 = vrot.slane %v412, 4
  %v1447 = vsel %vm516, %v1019, %v1446
  %v1449 = vunpack.c.l.s4 1983009808
  %v1450 = vunpack.c.0.s8 %v1449
  %v1451 = vperm.slane %v1445, %v1450
  %v1453 = vunpack.c.l.s4 1983009808
  %v1454 = vunpack.c.0.s8 %v1453
  %v1455 = vperm.slane %v1447, %v1454
  %v1456 = vrot.slane %v1043, 4
  %v1457 = vsel %vm516, %v1456, %v995
  %v1458 = vrot.slane %v995, 4
  %v1459 = vsel %vm516, %v1043, %v1458
  %v1461 = vunpack.c.l.s4 1983009808
  %v1462 = vunpack.c.0.s8 %v1461
  %v1463 = vperm.slane %v1457, %v1462
  %v1465 = vunpack.c.l.s4 1983009808
  %v1466 = vunpack.c.0.s8 %v1465
  %v1467 = vperm.slane %v1459, %v1466
  %v1468 = vrot.slane %v1463, 4
  %v1469 = vsel %vm516, %v1468, %v1451
  %v1470 = vrot.slane %v1451, 4
  %v1471 = vsel %vm516, %v1463, %v1470
  %v1473 = vunpack.c.l.s4 1934713408
  %v1474 = vunpack.c.0.s8 %v1473
  %v1475 = vperm.slane %v1469, %v1474
  %v1477 = vunpack.c.l.s4 1934713408
  %v1478 = vunpack.c.0.s8 %v1477
  %v1479 = vperm.slane %v1471, %v1478
  %v1480 = vrot.slane %v1467, 4
  %v1481 = vsel %vm516, %v1480, %v1455
  %v1482 = vrot.slane %v1455, 4
  %v1483 = vsel %vm516, %v1467, %v1482
  %v1485 = vunpack.c.l.s4 1934713408
  %v1486 = vunpack.c.0.s8 %v1485
  %v1487 = vperm.slane %v1481, %v1486
  %v1489 = vunpack.c.l.s4 1934713408
  %v1490 = vunpack.c.0.s8 %v1489
  %v1491 = vperm.slane %v1483, %v1490
  %v1492 = vrot.slane %v1475, 4
  %v1493 = vsel %vm516, 0.0, %v1492
  %v1494 = vrot.slane %v1479, 4
  %v1495 = vsel %vm516, 0.0, %v1494
  %v1496 = vrot.slane %v1487, 4
  %v1497 = vsel %vm516, 0.0, %v1496
  %v1498 = vrot.slane %v1491, 4
  %v1499 = vsel %vm516, 0.0, %v1498
  %v1500 = vsel %vm516, %v1102, %v1083
  %v1502 = vunpack.c.l.s4 1983009808
  %v1503 = vunpack.c.0.s8 %v1502
  %v1504 = vperm.slane %v1500, %v1503
  %v1505 = vrot.slane %v1103, 4
  %v1506 = vsel %vm516, %v1505, %v1101
  %v1508 = vunpack.c.l.s4 1983009808
  %v1509 = vunpack.c.0.s8 %v1508
  %v1510 = vperm.slane %v1506, %v1509
  %v1511 = vsel %vm516, %v1106, %v1095
  %v1513 = vunpack.c.l.s4 1983009808
  %v1514 = vunpack.c.0.s8 %v1513
  %v1515 = vperm.slane %v1511, %v1514
  %v1516 = vrot.slane %v1107, 4
  %v1517 = vsel %vm516, %v1516, %v1105
  %v1519 = vunpack.c.l.s4 1983009808
  %v1520 = vunpack.c.0.s8 %v1519
  %v1521 = vperm.slane %v1517, %v1520
  %v1522 = vrot.slane %v1510, 4
  %v1523 = vsel %vm516, %v1522, %v1504
  %v1524 = vrot.slane %v1504, 4
  %v1525 = vsel %vm516, %v1510, %v1524
  %v1527 = vunpack.c.l.s4 1934713408
  %v1528 = vunpack.c.0.s8 %v1527
  %v1529 = vperm.slane %v1523, %v1528
  %v1531 = vunpack.c.l.s4 1934713408
  %v1532 = vunpack.c.0.s8 %v1531
  %v1533 = vperm.slane %v1525, %v1532
  %v1534 = vrot.slane %v1521, 4
  %v1535 = vsel %vm516, %v1534, %v1515
  %v1536 = vrot.slane %v1515, 4
  %v1537 = vsel %vm516, %v1521, %v1536
  %v1539 = vunpack.c.l.s4 1934713408
  %v1540 = vunpack.c.0.s8 %v1539
  %v1541 = vperm.slane %v1535, %v1540
  %v1543 = vunpack.c.l.s4 1934713408
  %v1544 = vunpack.c.0.s8 %v1543
  %v1545 = vperm.slane %v1537, %v1544
  %v1546 = vrot.slane %v1541, 4
  %v1547 = vsel %vm516, %v1546, %v1529
  %v1548 = vrot.slane %v1529, 4
  %v1549 = vsel %vm516, %v1541, %v1548
  %v1550 = vrot.slane %v1545, 4
  %v1551 = vsel %vm516, %v1550, %v1533
  %v1552 = vrot.slane %v1533, 4
  %v1553 = vsel %vm516, %v1545, %v1552
  %v1554 = vsel %vm516, %v1158, %v1139
  %v1556 = vunpack.c.l.s4 1983009808
  %v1557 = vunpack.c.0.s8 %v1556
  %v1558 = vperm.slane %v1554, %v1557
  %v1559 = vrot.slane %v1159, 4
  %v1560 = vsel %vm516, %v1559, %v1157
  %v1562 = vunpack.c.l.s4 1983009808
  %v1563 = vunpack.c.0.s8 %v1562
  %v1564 = vperm.slane %v1560, %v1563
  %v1565 = vsel %vm516, %v1162, %v1151
  %v1567 = vunpack.c.l.s4 1983009808
  %v1568 = vunpack.c.0.s8 %v1567
  %v1569 = vperm.slane %v1565, %v1568
  %v1570 = vrot.slane %v1163, 4
  %v1571 = vsel %vm516, %v1570, %v1161
  %v1573 = vunpack.c.l.s4 1983009808
  %v1574 = vunpack.c.0.s8 %v1573
  %v1575 = vperm.slane %v1571, %v1574
  %v1576 = vrot.slane %v1564, 4
  %v1577 = vsel %vm516, %v1576, %v1558
  %v1578 = vrot.slane %v1558, 4
  %v1579 = vsel %vm516, %v1564, %v1578
  %v1581 = vunpack.c.l.s4 1934713408
  %v1582 = vunpack.c.0.s8 %v1581
  %v1583 = vperm.slane %v1577, %v1582
  %v1585 = vunpack.c.l.s4 1934713408
  %v1586 = vunpack.c.0.s8 %v1585
  %v1587 = vperm.slane %v1579, %v1586
  %v1588 = vrot.slane %v1575, 4
  %v1589 = vsel %vm516, %v1588, %v1569
  %v1590 = vrot.slane %v1569, 4
  %v1591 = vsel %vm516, %v1575, %v1590
  %v1593 = vunpack.c.l.s4 1934713408
  %v1594 = vunpack.c.0.s8 %v1593
  %v1595 = vperm.slane %v1589, %v1594
  %v1597 = vunpack.c.l.s4 1934713408
  %v1598 = vunpack.c.0.s8 %v1597
  %v1599 = vperm.slane %v1591, %v1598
  %v1600 = vrot.slane %v1595, 4
  %v1601 = vsel %vm516, %v1600, %v1583
  %v1602 = vrot.slane %v1583, 4
  %v1603 = vsel %vm516, %v1595, %v1602
  %v1604 = vrot.slane %v1599, 4
  %v1605 = vsel %vm516, %v1604, %v1587
  %v1606 = vrot.slane %v1587, 4
  %v1607 = vsel %vm516, %v1599, %v1606
  %v1608 = vsel %vm516, %v1214, %v1195
  %v1610 = vunpack.c.l.s4 1983009808
  %v1611 = vunpack.c.0.s8 %v1610
  %v1612 = vperm.slane %v1608, %v1611
  %v1613 = vrot.slane %v1215, 4
  %v1614 = vsel %vm516, %v1613, %v1213
  %v1616 = vunpack.c.l.s4 1983009808
  %v1617 = vunpack.c.0.s8 %v1616
  %v1618 = vperm.slane %v1614, %v1617
  %v1619 = vsel %vm516, %v1218, %v1207
  %v1621 = vunpack.c.l.s4 1983009808
  %v1622 = vunpack.c.0.s8 %v1621
  %v1623 = vperm.slane %v1619, %v1622
  %v1624 = vrot.slane %v1219, 4
  %v1625 = vsel %vm516, %v1624, %v1217
  %v1627 = vunpack.c.l.s4 1983009808
  %v1628 = vunpack.c.0.s8 %v1627
  %v1629 = vperm.slane %v1625, %v1628
  %v1630 = vrot.slane %v1618, 4
  %v1631 = vsel %vm516, %v1630, %v1612
  %v1632 = vrot.slane %v1612, 4
  %v1633 = vsel %vm516, %v1618, %v1632
  %v1635 = vunpack.c.l.s4 1934713408
  %v1636 = vunpack.c.0.s8 %v1635
  %v1637 = vperm.slane %v1631, %v1636
  %v1639 = vunpack.c.l.s4 1934713408
  %v1640 = vunpack.c.0.s8 %v1639
  %v1641 = vperm.slane %v1633, %v1640
  %v1642 = vrot.slane %v1629, 4
  %v1643 = vsel %vm516, %v1642, %v1623
  %v1644 = vrot.slane %v1623, 4
  %v1645 = vsel %vm516, %v1629, %v1644
  %v1647 = vunpack.c.l.s4 1934713408
  %v1648 = vunpack.c.0.s8 %v1647
  %v1649 = vperm.slane %v1643, %v1648
  %v1651 = vunpack.c.l.s4 1934713408
  %v1652 = vunpack.c.0.s8 %v1651
  %v1653 = vperm.slane %v1645, %v1652
  %v1654 = vrot.slane %v1649, 4
  %v1655 = vsel %vm516, %v1654, %v1637
  %v1656 = vrot.slane %v1637, 4
  %v1657 = vsel %vm516, %v1649, %v1656
  %v1658 = vrot.slane %v1653, 4
  %v1659 = vsel %vm516, %v1658, %v1641
  %v1660 = vrot.slane %v1641, 4
  %v1661 = vsel %vm516, %v1653, %v1660
  %v1662 = vsel %vm516, %v1270, %v1251
  %v1664 = vunpack.c.l.s4 1983009808
  %v1665 = vunpack.c.0.s8 %v1664
  %v1666 = vperm.slane %v1662, %v1665
  %v1667 = vrot.slane %v1271, 4
  %v1668 = vsel %vm516, %v1667, %v1269
  %v1670 = vunpack.c.l.s4 1983009808
  %v1671 = vunpack.c.0.s8 %v1670
  %v1672 = vperm.slane %v1668, %v1671
  %v1673 = vsel %vm516, %v1274, %v1263
  %v1675 = vunpack.c.l.s4 1983009808
  %v1676 = vunpack.c.0.s8 %v1675
  %v1677 = vperm.slane %v1673, %v1676
  %v1678 = vrot.slane %v1275, 4
  %v1679 = vsel %vm516, %v1678, %v1273
  %v1681 = vunpack.c.l.s4 1983009808
  %v1682 = vunpack.c.0.s8 %v1681
  %v1683 = vperm.slane %v1679, %v1682
  %v1684 = vrot.slane %v1672, 4
  %v1685 = vsel %vm516, %v1684, %v1666
  %v1686 = vrot.slane %v1666, 4
  %v1687 = vsel %vm516, %v1672, %v1686
  %v1689 = vunpack.c.l.s4 1934713408
  %v1690 = vunpack.c.0.s8 %v1689
  %v1691 = vperm.slane %v1685, %v1690
  %v1693 = vunpack.c.l.s4 1934713408
  %v1694 = vunpack.c.0.s8 %v1693
  %v1695 = vperm.slane %v1687, %v1694
  %v1696 = vrot.slane %v1683, 4
  %v1697 = vsel %vm516, %v1696, %v1677
  %v1698 = vrot.slane %v1677, 4
  %v1699 = vsel %vm516, %v1683, %v1698
  %v1701 = vunpack.c.l.s4 1934713408
  %v1702 = vunpack.c.0.s8 %v1701
  %v1703 = vperm.slane %v1697, %v1702
  %v1705 = vunpack.c.l.s4 1934713408
  %v1706 = vunpack.c.0.s8 %v1705
  %v1707 = vperm.slane %v1699, %v1706
  %v1708 = vrot.slane %v1703, 4
  %v1709 = vsel %vm516, %v1708, %v1691
  %v1710 = vrot.slane %v1691, 4
  %v1711 = vsel %vm516, %v1703, %v1710
  %v1712 = vrot.slane %v1707, 4
  %v1713 = vsel %vm516, %v1712, %v1695
  %v1714 = vrot.slane %v1695, 4
  %v1715 = vsel %vm516, %v1707, %v1714
  %v1716 = vsel %vm516, %v1326, %v1307
  %v1718 = vunpack.c.l.s4 1983009808
  %v1719 = vunpack.c.0.s8 %v1718
  %v1720 = vperm.slane %v1716, %v1719
  %v1721 = vrot.slane %v1327, 4
  %v1722 = vsel %vm516, %v1721, %v1325
  %v1724 = vunpack.c.l.s4 1983009808
  %v1725 = vunpack.c.0.s8 %v1724
  %v1726 = vperm.slane %v1722, %v1725
  %v1727 = vsel %vm516, %v1330, %v1319
  %v1729 = vunpack.c.l.s4 1983009808
  %v1730 = vunpack.c.0.s8 %v1729
  %v1731 = vperm.slane %v1727, %v1730
  %v1732 = vrot.slane %v1331, 4
  %v1733 = vsel %vm516, %v1732, %v1329
  %v1735 = vunpack.c.l.s4 1983009808
  %v1736 = vunpack.c.0.s8 %v1735
  %v1737 = vperm.slane %v1733, %v1736
  %v1738 = vrot.slane %v1726, 4
  %v1739 = vsel %vm516, %v1738, %v1720
  %v1740 = vrot.slane %v1720, 4
  %v1741 = vsel %vm516, %v1726, %v1740
  %v1743 = vunpack.c.l.s4 1934713408
  %v1744 = vunpack.c.0.s8 %v1743
  %v1745 = vperm.slane %v1739, %v1744
  %v1747 = vunpack.c.l.s4 1934713408
  %v1748 = vunpack.c.0.s8 %v1747
  %v1749 = vperm.slane %v1741, %v1748
  %v1750 = vrot.slane %v1737, 4
  %v1751 = vsel %vm516, %v1750, %v1731
  %v1752 = vrot.slane %v1731, 4
  %v1753 = vsel %vm516, %v1737, %v1752
  %v1755 = vunpack.c.l.s4 1934713408
  %v1756 = vunpack.c.0.s8 %v1755
  %v1757 = vperm.slane %v1751, %v1756
  %v1759 = vunpack.c.l.s4 1934713408
  %v1760 = vunpack.c.0.s8 %v1759
  %v1761 = vperm.slane %v1753, %v1760
  %v1762 = vrot.slane %v1757, 4
  %v1763 = vsel %vm516, %v1762, %v1745
  %v1764 = vrot.slane %v1745, 4
  %v1765 = vsel %vm516, %v1757, %v1764
  %v1766 = vrot.slane %v1761, 4
  %v1767 = vsel %vm516, %v1766, %v1749
  %v1768 = vrot.slane %v1749, 4
  %v1769 = vsel %vm516, %v1761, %v1768
  %v1770 = vsel %vm516, %v1382, %v1363
  %v1772 = vunpack.c.l.s4 1983009808
  %v1773 = vunpack.c.0.s8 %v1772
  %v1774 = vperm.slane %v1770, %v1773
  %v1775 = vrot.slane %v1383, 4
  %v1776 = vsel %vm516, %v1775, %v1381
  %v1778 = vunpack.c.l.s4 1983009808
  %v1779 = vunpack.c.0.s8 %v1778
  %v1780 = vperm.slane %v1776, %v1779
  %v1781 = vsel %vm516, %v1386, %v1375
  %v1783 = vunpack.c.l.s4 1983009808
  %v1784 = vunpack.c.0.s8 %v1783
  %v1785 = vperm.slane %v1781, %v1784
  %v1786 = vrot.slane %v1387, 4
  %v1787 = vsel %vm516, %v1786, %v1385
  %v1789 = vunpack.c.l.s4 1983009808
  %v1790 = vunpack.c.0.s8 %v1789
  %v1791 = vperm.slane %v1787, %v1790
  %v1792 = vrot.slane %v1780, 4
  %v1793 = vsel %vm516, %v1792, %v1774
  %v1794 = vrot.slane %v1774, 4
  %v1795 = vsel %vm516, %v1780, %v1794
  %v1797 = vunpack.c.l.s4 1934713408
  %v1798 = vunpack.c.0.s8 %v1797
  %v1799 = vperm.slane %v1793, %v1798
  %v1801 = vunpack.c.l.s4 1934713408
  %v1802 = vunpack.c.0.s8 %v1801
  %v1803 = vperm.slane %v1795, %v1802
  %v1804 = vrot.slane %v1791, 4
  %v1805 = vsel %vm516, %v1804, %v1785
  %v1806 = vrot.slane %v1785, 4
  %v1807 = vsel %vm516, %v1791, %v1806
  %v1809 = vunpack.c.l.s4 1934713408
  %v1810 = vunpack.c.0.s8 %v1809
  %v1811 = vperm.slane %v1805, %v1810
  %v1813 = vunpack.c.l.s4 1934713408
  %v1814 = vunpack.c.0.s8 %v1813
  %v1815 = vperm.slane %v1807, %v1814
  %v1816 = vrot.slane %v1811, 4
  %v1817 = vsel %vm516, %v1816, %v1799
  %v1818 = vrot.slane %v1799, 4
  %v1819 = vsel %vm516, %v1811, %v1818
  %v1820 = vrot.slane %v1815, 4
  %v1821 = vsel %vm516, %v1820, %v1803
  %v1822 = vrot.slane %v1803, 4
  %v1823 = vsel %vm516, %v1815, %v1822
  %v1824 = vsel %vm516, %v1438, %v1419
  %v1826 = vunpack.c.l.s4 1983009808
  %v1827 = vunpack.c.0.s8 %v1826
  %v1828 = vperm.slane %v1824, %v1827
  %v1829 = vrot.slane %v1439, 4
  %v1830 = vsel %vm516, %v1829, %v1437
  %v1832 = vunpack.c.l.s4 1983009808
  %v1833 = vunpack.c.0.s8 %v1832
  %v1834 = vperm.slane %v1830, %v1833
  %v1835 = vsel %vm516, %v1442, %v1431
  %v1837 = vunpack.c.l.s4 1983009808
  %v1838 = vunpack.c.0.s8 %v1837
  %v1839 = vperm.slane %v1835, %v1838
  %v1840 = vrot.slane %v1443, 4
  %v1841 = vsel %vm516, %v1840, %v1441
  %v1843 = vunpack.c.l.s4 1983009808
  %v1844 = vunpack.c.0.s8 %v1843
  %v1845 = vperm.slane %v1841, %v1844
  %v1846 = vrot.slane %v1834, 4
  %v1847 = vsel %vm516, %v1846, %v1828
  %v1848 = vrot.slane %v1828, 4
  %v1849 = vsel %vm516, %v1834, %v1848
  %v1851 = vunpack.c.l.s4 1934713408
  %v1852 = vunpack.c.0.s8 %v1851
  %v1853 = vperm.slane %v1847, %v1852
  %v1855 = vunpack.c.l.s4 1934713408
  %v1856 = vunpack.c.0.s8 %v1855
  %v1857 = vperm.slane %v1849, %v1856
  %v1858 = vrot.slane %v1845, 4
  %v1859 = vsel %vm516, %v1858, %v1839
  %v1860 = vrot.slane %v1839, 4
  %v1861 = vsel %vm516, %v1845, %v1860
  %v1863 = vunpack.c.l.s4 1934713408
  %v1864 = vunpack.c.0.s8 %v1863
  %v1865 = vperm.slane %v1859, %v1864
  %v1867 = vunpack.c.l.s4 1934713408
  %v1868 = vunpack.c.0.s8 %v1867
  %v1869 = vperm.slane %v1861, %v1868
  %v1870 = vrot.slane %v1865, 4
  %v1871 = vsel %vm516, %v1870, %v1853
  %v1872 = vrot.slane %v1853, 4
  %v1873 = vsel %vm516, %v1865, %v1872
  %v1874 = vrot.slane %v1869, 4
  %v1875 = vsel %vm516, %v1874, %v1857
  %v1876 = vrot.slane %v1857, 4
  %v1877 = vsel %vm516, %v1869, %v1876
  %v1878 = vsel %vm516, %v1494, %v1475
  %v1880 = vunpack.c.l.s4 1983009808
  %v1881 = vunpack.c.0.s8 %v1880
  %v1882 = vperm.slane %v1878, %v1881
  %v1883 = vrot.slane %v1495, 4
  %v1884 = vsel %vm516, %v1883, %v1493
  %v1886 = vunpack.c.l.s4 1983009808
  %v1887 = vunpack.c.0.s8 %v1886
  %v1888 = vperm.slane %v1884, %v1887
  %v1889 = vsel %vm516, %v1498, %v1487
  %v1891 = vunpack.c.l.s4 1983009808
  %v1892 = vunpack.c.0.s8 %v1891
  %v1893 = vperm.slane %v1889, %v1892
  %v1894 = vrot.slane %v1499, 4
  %v1895 = vsel %vm516, %v1894, %v1497
  %v1897 = vunpack.c.l.s4 1983009808
  %v1898 = vunpack.c.0.s8 %v1897
  %v1899 = vperm.slane %v1895, %v1898
  %v1900 = vrot.slane %v1888, 4
  %v1901 = vsel %vm516, %v1900, %v1882
  %v1902 = vrot.slane %v1882, 4
  %v1903 = vsel %vm516, %v1888, %v1902
  %v1905 = vunpack.c.l.s4 1934713408
  %v1906 = vunpack.c.0.s8 %v1905
  %v1907 = vperm.slane %v1901, %v1906
  %v1909 = vunpack.c.l.s4 1934713408
  %v1910 = vunpack.c.0.s8 %v1909
  %v1911 = vperm.slane %v1903, %v1910
  %v1912 = vrot.slane %v1899, 4
  %v1913 = vsel %vm516, %v1912, %v1893
  %v1914 = vrot.slane %v1893, 4
  %v1915 = vsel %vm516, %v1899, %v1914
  %v1917 = vunpack.c.l.s4 1934713408
  %v1918 = vunpack.c.0.s8 %v1917
  %v1919 = vperm.slane %v1913, %v1918
  %v1921 = vunpack.c.l.s4 1934713408
  %v1922 = vunpack.c.0.s8 %v1921
  %v1923 = vperm.slane %v1915, %v1922
  %v1924 = vrot.slane %v1919, 4
  %v1925 = vsel %vm516, %v1924, %v1907
  %v1926 = vrot.slane %v1907, 4
  %v1927 = vsel %vm516, %v1919, %v1926
  %v1928 = vrot.slane %v1923, 4
  %v1929 = vsel %vm516, %v1928, %v1911
  %v1930 = vrot.slane %v1911, 4
  %v1931 = vsel %vm516, %v1923, %v1930
  %v1932 = vpack.c.bf16 %v1547, %v1547
  %v1933 = vpack.c.bf16 %v1601, %v1601
  %v1934 = vpack.c.bf16 %v1549, %v1549
  %v1935 = vpack.c.bf16 %v1603, %v1603
  %v1936 = vpack.c.bf16 %v1551, %v1551
  %v1937 = vpack.c.bf16 %v1605, %v1605
  %v1938 = vpack.c.bf16 %v1553, %v1553
  %v1939 = vpack.c.bf16 %v1607, %v1607
  %v1940 = vpack.c.bf16 %v1655, %v1655
  %v1941 = vpack.c.bf16 %v1709, %v1709
  %v1942 = vpack.c.bf16 %v1657, %v1657
  %v1943 = vpack.c.bf16 %v1711, %v1711
  %v1944 = vpack.c.bf16 %v1659, %v1659
  %v1945 = vpack.c.bf16 %v1713, %v1713
  %v1946 = vpack.c.bf16 %v1661, %v1661
  %v1947 = vpack.c.bf16 %v1715, %v1715
  %v1948 = vpack.c.bf16 %v1763, %v1763
  %v1949 = vpack.c.bf16 %v1817, %v1817
  %v1950 = vpack.c.bf16 %v1765, %v1765
  %v1951 = vpack.c.bf16 %v1819, %v1819
  %v1952 = vpack.c.bf16 %v1767, %v1767
  %v1953 = vpack.c.bf16 %v1821, %v1821
  %v1954 = vpack.c.bf16 %v1769, %v1769
  %v1955 = vpack.c.bf16 %v1823, %v1823
  %v1956 = vpack.c.bf16 %v1871, %v1871
  %v1957 = vpack.c.bf16 %v1925, %v1925
  %v1958 = vpack.c.bf16 %v1873, %v1873
  %v1959 = vpack.c.bf16 %v1927, %v1927
  %v1960 = vpack.c.bf16 %v1875, %v1875
  %v1961 = vpack.c.bf16 %v1929, %v1929
  %v1962 = vpack.c.bf16 %v1877, %v1877
  %v1963 = vpack.c.bf16 %v1931, %v1931
  %1972 = vrot.lane.b32.xlu0 %v456, 112
  %v1973 = vpop.permute.xlu0 %1972
  %1974 = vrot.lane.b32.xlu0 %v458, 112
  %v1975 = vpop.permute.xlu0 %1974
  %1976 = vrot.lane.b32.xlu0 %v461, 112
  %v1977 = vpop.permute.xlu0 %1976
  %1978 = vrot.lane.b32.xlu0 %v463, 112
  %v1979 = vpop.permute.xlu0 %1978
  %1980 = vrot.lane.b32.xlu0 %v466, 112
  %v1981 = vpop.permute.xlu0 %1980
  %1982 = vrot.lane.b32.xlu0 %v468, 112
  %v1983 = vpop.permute.xlu0 %1982
  %1984 = vrot.lane.b32.xlu0 %v471, 112
  %v1985 = vpop.permute.xlu0 %1984
  %1986 = vrot.lane.b32.xlu0 %v473, 112
  %v1987 = vpop.permute.xlu0 %1986
  %1996 = vrot.lane.b32.xlu0 %v456, 96
  %v1997 = vpop.permute.xlu0 %1996
  %1998 = vrot.lane.b32.xlu0 %v458, 96
  %v1999 = vpop.permute.xlu0 %1998
  %2000 = vrot.lane.b32.xlu0 %v461, 96
  %v2001 = vpop.permute.xlu0 %2000
  %2002 = vrot.lane.b32.xlu0 %v463, 96
  %v2003 = vpop.permute.xlu0 %2002
  %2004 = vrot.lane.b32.xlu0 %v466, 96
  %v2005 = vpop.permute.xlu0 %2004
  %2006 = vrot.lane.b32.xlu0 %v468, 96
  %v2007 = vpop.permute.xlu0 %2006
  %2008 = vrot.lane.b32.xlu0 %v471, 96
  %v2009 = vpop.permute.xlu0 %2008
  %2010 = vrot.lane.b32.xlu0 %v473, 96
  %v2011 = vpop.permute.xlu0 %2010
  %2020 = vrot.lane.b32.xlu0 %v456, 80
  %v2021 = vpop.permute.xlu0 %2020
  %2022 = vrot.lane.b32.xlu0 %v458, 80
  %v2023 = vpop.permute.xlu0 %2022
  %2024 = vrot.lane.b32.xlu0 %v461, 80
  %v2025 = vpop.permute.xlu0 %2024
  %2026 = vrot.lane.b32.xlu0 %v463, 80
  %v2027 = vpop.permute.xlu0 %2026
  %2028 = vrot.lane.b32.xlu0 %v466, 80
  %v2029 = vpop.permute.xlu0 %2028
  %2030 = vrot.lane.b32.xlu0 %v468, 80
  %v2031 = vpop.permute.xlu0 %2030
  %2032 = vrot.lane.b32.xlu0 %v471, 80
  %v2033 = vpop.permute.xlu0 %2032
  %2034 = vrot.lane.b32.xlu0 %v473, 80
  %v2035 = vpop.permute.xlu0 %2034
  %v2044 = vrot.slane %v1997, 4
  %v2045 = vsel %vm516, %v2044, %v456
  %v2046 = vrot.slane %v456, 4
  %v2047 = vsel %vm516, %v1997, %v2046
  %v2049 = vunpack.c.l.s4 1983009808
  %v2050 = vunpack.c.0.s8 %v2049
  %v2051 = vperm.slane %v2045, %v2050
  %v2053 = vunpack.c.l.s4 1983009808
  %v2054 = vunpack.c.0.s8 %v2053
  %v2055 = vperm.slane %v2047, %v2054
  %v2056 = vrot.slane %v2021, 4
  %v2057 = vsel %vm516, %v2056, %v1973
  %v2058 = vrot.slane %v1973, 4
  %v2059 = vsel %vm516, %v2021, %v2058
  %v2061 = vunpack.c.l.s4 1983009808
  %v2062 = vunpack.c.0.s8 %v2061
  %v2063 = vperm.slane %v2057, %v2062
  %v2065 = vunpack.c.l.s4 1983009808
  %v2066 = vunpack.c.0.s8 %v2065
  %v2067 = vperm.slane %v2059, %v2066
  %v2068 = vrot.slane %v2063, 4
  %v2069 = vsel %vm516, %v2068, %v2051
  %v2070 = vrot.slane %v2051, 4
  %v2071 = vsel %vm516, %v2063, %v2070
  %v2073 = vunpack.c.l.s4 1934713408
  %v2074 = vunpack.c.0.s8 %v2073
  %v2075 = vperm.slane %v2069, %v2074
  %v2077 = vunpack.c.l.s4 1934713408
  %v2078 = vunpack.c.0.s8 %v2077
  %v2079 = vperm.slane %v2071, %v2078
  %v2080 = vrot.slane %v2067, 4
  %v2081 = vsel %vm516, %v2080, %v2055
  %v2082 = vrot.slane %v2055, 4
  %v2083 = vsel %vm516, %v2067, %v2082
  %v2085 = vunpack.c.l.s4 1934713408
  %v2086 = vunpack.c.0.s8 %v2085
  %v2087 = vperm.slane %v2081, %v2086
  %v2089 = vunpack.c.l.s4 1934713408
  %v2090 = vunpack.c.0.s8 %v2089
  %v2091 = vperm.slane %v2083, %v2090
  %v2092 = vrot.slane %v2075, 4
  %v2093 = vsel %vm516, 0.0, %v2092
  %v2094 = vrot.slane %v2079, 4
  %v2095 = vsel %vm516, 0.0, %v2094
  %v2096 = vrot.slane %v2087, 4
  %v2097 = vsel %vm516, 0.0, %v2096
  %v2098 = vrot.slane %v2091, 4
  %v2099 = vsel %vm516, 0.0, %v2098
  %v2100 = vrot.slane %v1999, 4
  %v2101 = vsel %vm516, %v2100, %v458
  %v2102 = vrot.slane %v458, 4
  %v2103 = vsel %vm516, %v1999, %v2102
  %v2105 = vunpack.c.l.s4 1983009808
  %v2106 = vunpack.c.0.s8 %v2105
  %v2107 = vperm.slane %v2101, %v2106
  %v2109 = vunpack.c.l.s4 1983009808
  %v2110 = vunpack.c.0.s8 %v2109
  %v2111 = vperm.slane %v2103, %v2110
  %v2112 = vrot.slane %v2023, 4
  %v2113 = vsel %vm516, %v2112, %v1975
  %v2114 = vrot.slane %v1975, 4
  %v2115 = vsel %vm516, %v2023, %v2114
  %v2117 = vunpack.c.l.s4 1983009808
  %v2118 = vunpack.c.0.s8 %v2117
  %v2119 = vperm.slane %v2113, %v2118
  %v2121 = vunpack.c.l.s4 1983009808
  %v2122 = vunpack.c.0.s8 %v2121
  %v2123 = vperm.slane %v2115, %v2122
  %v2124 = vrot.slane %v2119, 4
  %v2125 = vsel %vm516, %v2124, %v2107
  %v2126 = vrot.slane %v2107, 4
  %v2127 = vsel %vm516, %v2119, %v2126
  %v2129 = vunpack.c.l.s4 1934713408
  %v2130 = vunpack.c.0.s8 %v2129
  %v2131 = vperm.slane %v2125, %v2130
  %v2133 = vunpack.c.l.s4 1934713408
  %v2134 = vunpack.c.0.s8 %v2133
  %v2135 = vperm.slane %v2127, %v2134
  %v2136 = vrot.slane %v2123, 4
  %v2137 = vsel %vm516, %v2136, %v2111
  %v2138 = vrot.slane %v2111, 4
  %v2139 = vsel %vm516, %v2123, %v2138
  %v2141 = vunpack.c.l.s4 1934713408
  %v2142 = vunpack.c.0.s8 %v2141
  %v2143 = vperm.slane %v2137, %v2142
  %v2145 = vunpack.c.l.s4 1934713408
  %v2146 = vunpack.c.0.s8 %v2145
  %v2147 = vperm.slane %v2139, %v2146
  %v2148 = vrot.slane %v2131, 4
  %v2149 = vsel %vm516, 0.0, %v2148
  %v2150 = vrot.slane %v2135, 4
  %v2151 = vsel %vm516, 0.0, %v2150
  %v2152 = vrot.slane %v2143, 4
  %v2153 = vsel %vm516, 0.0, %v2152
  %v2154 = vrot.slane %v2147, 4
  %v2155 = vsel %vm516, 0.0, %v2154
  %v2156 = vrot.slane %v2001, 4
  %v2157 = vsel %vm516, %v2156, %v461
  %v2158 = vrot.slane %v461, 4
  %v2159 = vsel %vm516, %v2001, %v2158
  %v2161 = vunpack.c.l.s4 1983009808
  %v2162 = vunpack.c.0.s8 %v2161
  %v2163 = vperm.slane %v2157, %v2162
  %v2165 = vunpack.c.l.s4 1983009808
  %v2166 = vunpack.c.0.s8 %v2165
  %v2167 = vperm.slane %v2159, %v2166
  %v2168 = vrot.slane %v2025, 4
  %v2169 = vsel %vm516, %v2168, %v1977
  %v2170 = vrot.slane %v1977, 4
  %v2171 = vsel %vm516, %v2025, %v2170
  %v2173 = vunpack.c.l.s4 1983009808
  %v2174 = vunpack.c.0.s8 %v2173
  %v2175 = vperm.slane %v2169, %v2174
  %v2177 = vunpack.c.l.s4 1983009808
  %v2178 = vunpack.c.0.s8 %v2177
  %v2179 = vperm.slane %v2171, %v2178
  %v2180 = vrot.slane %v2175, 4
  %v2181 = vsel %vm516, %v2180, %v2163
  %v2182 = vrot.slane %v2163, 4
  %v2183 = vsel %vm516, %v2175, %v2182
  %v2185 = vunpack.c.l.s4 1934713408
  %v2186 = vunpack.c.0.s8 %v2185
  %v2187 = vperm.slane %v2181, %v2186
  %v2189 = vunpack.c.l.s4 1934713408
  %v2190 = vunpack.c.0.s8 %v2189
  %v2191 = vperm.slane %v2183, %v2190
  %v2192 = vrot.slane %v2179, 4
  %v2193 = vsel %vm516, %v2192, %v2167
  %v2194 = vrot.slane %v2167, 4
  %v2195 = vsel %vm516, %v2179, %v2194
  %v2197 = vunpack.c.l.s4 1934713408
  %v2198 = vunpack.c.0.s8 %v2197
  %v2199 = vperm.slane %v2193, %v2198
  %v2201 = vunpack.c.l.s4 1934713408
  %v2202 = vunpack.c.0.s8 %v2201
  %v2203 = vperm.slane %v2195, %v2202
  %v2204 = vrot.slane %v2187, 4
  %v2205 = vsel %vm516, 0.0, %v2204
  %v2206 = vrot.slane %v2191, 4
  %v2207 = vsel %vm516, 0.0, %v2206
  %v2208 = vrot.slane %v2199, 4
  %v2209 = vsel %vm516, 0.0, %v2208
  %v2210 = vrot.slane %v2203, 4
  %v2211 = vsel %vm516, 0.0, %v2210
  %v2212 = vrot.slane %v2003, 4
  %v2213 = vsel %vm516, %v2212, %v463
  %v2214 = vrot.slane %v463, 4
  %v2215 = vsel %vm516, %v2003, %v2214
  %v2217 = vunpack.c.l.s4 1983009808
  %v2218 = vunpack.c.0.s8 %v2217
  %v2219 = vperm.slane %v2213, %v2218
  %v2221 = vunpack.c.l.s4 1983009808
  %v2222 = vunpack.c.0.s8 %v2221
  %v2223 = vperm.slane %v2215, %v2222
  %v2224 = vrot.slane %v2027, 4
  %v2225 = vsel %vm516, %v2224, %v1979
  %v2226 = vrot.slane %v1979, 4
  %v2227 = vsel %vm516, %v2027, %v2226
  %v2229 = vunpack.c.l.s4 1983009808
  %v2230 = vunpack.c.0.s8 %v2229
  %v2231 = vperm.slane %v2225, %v2230
  %v2233 = vunpack.c.l.s4 1983009808
  %v2234 = vunpack.c.0.s8 %v2233
  %v2235 = vperm.slane %v2227, %v2234
  %v2236 = vrot.slane %v2231, 4
  %v2237 = vsel %vm516, %v2236, %v2219
  %v2238 = vrot.slane %v2219, 4
  %v2239 = vsel %vm516, %v2231, %v2238
  %v2241 = vunpack.c.l.s4 1934713408
  %v2242 = vunpack.c.0.s8 %v2241
  %v2243 = vperm.slane %v2237, %v2242
  %v2245 = vunpack.c.l.s4 1934713408
  %v2246 = vunpack.c.0.s8 %v2245
  %v2247 = vperm.slane %v2239, %v2246
  %v2248 = vrot.slane %v2235, 4
  %v2249 = vsel %vm516, %v2248, %v2223
  %v2250 = vrot.slane %v2223, 4
  %v2251 = vsel %vm516, %v2235, %v2250
  %v2253 = vunpack.c.l.s4 1934713408
  %v2254 = vunpack.c.0.s8 %v2253
  %v2255 = vperm.slane %v2249, %v2254
  %v2257 = vunpack.c.l.s4 1934713408
  %v2258 = vunpack.c.0.s8 %v2257
  %v2259 = vperm.slane %v2251, %v2258
  %v2260 = vrot.slane %v2243, 4
  %v2261 = vsel %vm516, 0.0, %v2260
  %v2262 = vrot.slane %v2247, 4
  %v2263 = vsel %vm516, 0.0, %v2262
  %v2264 = vrot.slane %v2255, 4
  %v2265 = vsel %vm516, 0.0, %v2264
  %v2266 = vrot.slane %v2259, 4
  %v2267 = vsel %vm516, 0.0, %v2266
  %v2268 = vrot.slane %v2005, 4
  %v2269 = vsel %vm516, %v2268, %v466
  %v2270 = vrot.slane %v466, 4
  %v2271 = vsel %vm516, %v2005, %v2270
  %v2273 = vunpack.c.l.s4 1983009808
  %v2274 = vunpack.c.0.s8 %v2273
  %v2275 = vperm.slane %v2269, %v2274
  %v2277 = vunpack.c.l.s4 1983009808
  %v2278 = vunpack.c.0.s8 %v2277
  %v2279 = vperm.slane %v2271, %v2278
  %v2280 = vrot.slane %v2029, 4
  %v2281 = vsel %vm516, %v2280, %v1981
  %v2282 = vrot.slane %v1981, 4
  %v2283 = vsel %vm516, %v2029, %v2282
  %v2285 = vunpack.c.l.s4 1983009808
  %v2286 = vunpack.c.0.s8 %v2285
  %v2287 = vperm.slane %v2281, %v2286
  %v2289 = vunpack.c.l.s4 1983009808
  %v2290 = vunpack.c.0.s8 %v2289
  %v2291 = vperm.slane %v2283, %v2290
  %v2292 = vrot.slane %v2287, 4
  %v2293 = vsel %vm516, %v2292, %v2275
  %v2294 = vrot.slane %v2275, 4
  %v2295 = vsel %vm516, %v2287, %v2294
  %v2297 = vunpack.c.l.s4 1934713408
  %v2298 = vunpack.c.0.s8 %v2297
  %v2299 = vperm.slane %v2293, %v2298
  %v2301 = vunpack.c.l.s4 1934713408
  %v2302 = vunpack.c.0.s8 %v2301
  %v2303 = vperm.slane %v2295, %v2302
  %v2304 = vrot.slane %v2291, 4
  %v2305 = vsel %vm516, %v2304, %v2279
  %v2306 = vrot.slane %v2279, 4
  %v2307 = vsel %vm516, %v2291, %v2306
  %v2309 = vunpack.c.l.s4 1934713408
  %v2310 = vunpack.c.0.s8 %v2309
  %v2311 = vperm.slane %v2305, %v2310
  %v2313 = vunpack.c.l.s4 1934713408
  %v2314 = vunpack.c.0.s8 %v2313
  %v2315 = vperm.slane %v2307, %v2314
  %v2316 = vrot.slane %v2299, 4
  %v2317 = vsel %vm516, 0.0, %v2316
  %v2318 = vrot.slane %v2303, 4
  %v2319 = vsel %vm516, 0.0, %v2318
  %v2320 = vrot.slane %v2311, 4
  %v2321 = vsel %vm516, 0.0, %v2320
  %v2322 = vrot.slane %v2315, 4
  %v2323 = vsel %vm516, 0.0, %v2322
  %v2324 = vrot.slane %v2007, 4
  %v2325 = vsel %vm516, %v2324, %v468
  %v2326 = vrot.slane %v468, 4
  %v2327 = vsel %vm516, %v2007, %v2326
  %v2329 = vunpack.c.l.s4 1983009808
  %v2330 = vunpack.c.0.s8 %v2329
  %v2331 = vperm.slane %v2325, %v2330
  %v2333 = vunpack.c.l.s4 1983009808
  %v2334 = vunpack.c.0.s8 %v2333
  %v2335 = vperm.slane %v2327, %v2334
  %v2336 = vrot.slane %v2031, 4
  %v2337 = vsel %vm516, %v2336, %v1983
  %v2338 = vrot.slane %v1983, 4
  %v2339 = vsel %vm516, %v2031, %v2338
  %v2341 = vunpack.c.l.s4 1983009808
  %v2342 = vunpack.c.0.s8 %v2341
  %v2343 = vperm.slane %v2337, %v2342
  %v2345 = vunpack.c.l.s4 1983009808
  %v2346 = vunpack.c.0.s8 %v2345
  %v2347 = vperm.slane %v2339, %v2346
  %v2348 = vrot.slane %v2343, 4
  %v2349 = vsel %vm516, %v2348, %v2331
  %v2350 = vrot.slane %v2331, 4
  %v2351 = vsel %vm516, %v2343, %v2350
  %v2353 = vunpack.c.l.s4 1934713408
  %v2354 = vunpack.c.0.s8 %v2353
  %v2355 = vperm.slane %v2349, %v2354
  %v2357 = vunpack.c.l.s4 1934713408
  %v2358 = vunpack.c.0.s8 %v2357
  %v2359 = vperm.slane %v2351, %v2358
  %v2360 = vrot.slane %v2347, 4
  %v2361 = vsel %vm516, %v2360, %v2335
  %v2362 = vrot.slane %v2335, 4
  %v2363 = vsel %vm516, %v2347, %v2362
  %v2365 = vunpack.c.l.s4 1934713408
  %v2366 = vunpack.c.0.s8 %v2365
  %v2367 = vperm.slane %v2361, %v2366
  %v2369 = vunpack.c.l.s4 1934713408
  %v2370 = vunpack.c.0.s8 %v2369
  %v2371 = vperm.slane %v2363, %v2370
  %v2372 = vrot.slane %v2355, 4
  %v2373 = vsel %vm516, 0.0, %v2372
  %v2374 = vrot.slane %v2359, 4
  %v2375 = vsel %vm516, 0.0, %v2374
  %v2376 = vrot.slane %v2367, 4
  %v2377 = vsel %vm516, 0.0, %v2376
  %v2378 = vrot.slane %v2371, 4
  %v2379 = vsel %vm516, 0.0, %v2378
  %v2380 = vrot.slane %v2009, 4
  %v2381 = vsel %vm516, %v2380, %v471
  %v2382 = vrot.slane %v471, 4
  %v2383 = vsel %vm516, %v2009, %v2382
  %v2385 = vunpack.c.l.s4 1983009808
  %v2386 = vunpack.c.0.s8 %v2385
  %v2387 = vperm.slane %v2381, %v2386
  %v2389 = vunpack.c.l.s4 1983009808
  %v2390 = vunpack.c.0.s8 %v2389
  %v2391 = vperm.slane %v2383, %v2390
  %v2392 = vrot.slane %v2033, 4
  %v2393 = vsel %vm516, %v2392, %v1985
  %v2394 = vrot.slane %v1985, 4
  %v2395 = vsel %vm516, %v2033, %v2394
  %v2397 = vunpack.c.l.s4 1983009808
  %v2398 = vunpack.c.0.s8 %v2397
  %v2399 = vperm.slane %v2393, %v2398
  %v2401 = vunpack.c.l.s4 1983009808
  %v2402 = vunpack.c.0.s8 %v2401
  %v2403 = vperm.slane %v2395, %v2402
  %v2404 = vrot.slane %v2399, 4
  %v2405 = vsel %vm516, %v2404, %v2387
  %v2406 = vrot.slane %v2387, 4
  %v2407 = vsel %vm516, %v2399, %v2406
  %v2409 = vunpack.c.l.s4 1934713408
  %v2410 = vunpack.c.0.s8 %v2409
  %v2411 = vperm.slane %v2405, %v2410
  %v2413 = vunpack.c.l.s4 1934713408
  %v2414 = vunpack.c.0.s8 %v2413
  %v2415 = vperm.slane %v2407, %v2414
  %v2416 = vrot.slane %v2403, 4
  %v2417 = vsel %vm516, %v2416, %v2391
  %v2418 = vrot.slane %v2391, 4
  %v2419 = vsel %vm516, %v2403, %v2418
  %v2421 = vunpack.c.l.s4 1934713408
  %v2422 = vunpack.c.0.s8 %v2421
  %v2423 = vperm.slane %v2417, %v2422
  %v2425 = vunpack.c.l.s4 1934713408
  %v2426 = vunpack.c.0.s8 %v2425
  %v2427 = vperm.slane %v2419, %v2426
  %v2428 = vrot.slane %v2411, 4
  %v2429 = vsel %vm516, 0.0, %v2428
  %v2430 = vrot.slane %v2415, 4
  %v2431 = vsel %vm516, 0.0, %v2430
  %v2432 = vrot.slane %v2423, 4
  %v2433 = vsel %vm516, 0.0, %v2432
  %v2434 = vrot.slane %v2427, 4
  %v2435 = vsel %vm516, 0.0, %v2434
  %v2436 = vrot.slane %v2011, 4
  %v2437 = vsel %vm516, %v2436, %v473
  %v2438 = vrot.slane %v473, 4
  %v2439 = vsel %vm516, %v2011, %v2438
  %v2441 = vunpack.c.l.s4 1983009808
  %v2442 = vunpack.c.0.s8 %v2441
  %v2443 = vperm.slane %v2437, %v2442
  %v2445 = vunpack.c.l.s4 1983009808
  %v2446 = vunpack.c.0.s8 %v2445
  %v2447 = vperm.slane %v2439, %v2446
  %v2448 = vrot.slane %v2035, 4
  %v2449 = vsel %vm516, %v2448, %v1987
  %v2450 = vrot.slane %v1987, 4
  %v2451 = vsel %vm516, %v2035, %v2450
  %v2453 = vunpack.c.l.s4 1983009808
  %v2454 = vunpack.c.0.s8 %v2453
  %v2455 = vperm.slane %v2449, %v2454
  %v2457 = vunpack.c.l.s4 1983009808
  %v2458 = vunpack.c.0.s8 %v2457
  %v2459 = vperm.slane %v2451, %v2458
  %v2460 = vrot.slane %v2455, 4
  %v2461 = vsel %vm516, %v2460, %v2443
  %v2462 = vrot.slane %v2443, 4
  %v2463 = vsel %vm516, %v2455, %v2462
  %v2465 = vunpack.c.l.s4 1934713408
  %v2466 = vunpack.c.0.s8 %v2465
  %v2467 = vperm.slane %v2461, %v2466
  %v2469 = vunpack.c.l.s4 1934713408
  %v2470 = vunpack.c.0.s8 %v2469
  %v2471 = vperm.slane %v2463, %v2470
  %v2472 = vrot.slane %v2459, 4
  %v2473 = vsel %vm516, %v2472, %v2447
  %v2474 = vrot.slane %v2447, 4
  %v2475 = vsel %vm516, %v2459, %v2474
  %v2477 = vunpack.c.l.s4 1934713408
  %v2478 = vunpack.c.0.s8 %v2477
  %v2479 = vperm.slane %v2473, %v2478
  %v2481 = vunpack.c.l.s4 1934713408
  %v2482 = vunpack.c.0.s8 %v2481
  %v2483 = vperm.slane %v2475, %v2482
  %v2484 = vrot.slane %v2467, 4
  %v2485 = vsel %vm516, 0.0, %v2484
  %v2486 = vrot.slane %v2471, 4
  %v2487 = vsel %vm516, 0.0, %v2486
  %v2488 = vrot.slane %v2479, 4
  %v2489 = vsel %vm516, 0.0, %v2488
  %v2490 = vrot.slane %v2483, 4
  %v2491 = vsel %vm516, 0.0, %v2490
  %v2492 = vsel %vm516, %v2094, %v2075
  %v2494 = vunpack.c.l.s4 1983009808
  %v2495 = vunpack.c.0.s8 %v2494
  %v2496 = vperm.slane %v2492, %v2495
  %v2497 = vrot.slane %v2095, 4
  %v2498 = vsel %vm516, %v2497, %v2093
  %v2500 = vunpack.c.l.s4 1983009808
  %v2501 = vunpack.c.0.s8 %v2500
  %v2502 = vperm.slane %v2498, %v2501
  %v2503 = vsel %vm516, %v2098, %v2087
  %v2505 = vunpack.c.l.s4 1983009808
  %v2506 = vunpack.c.0.s8 %v2505
  %v2507 = vperm.slane %v2503, %v2506
  %v2508 = vrot.slane %v2099, 4
  %v2509 = vsel %vm516, %v2508, %v2097
  %v2511 = vunpack.c.l.s4 1983009808
  %v2512 = vunpack.c.0.s8 %v2511
  %v2513 = vperm.slane %v2509, %v2512
  %v2514 = vrot.slane %v2502, 4
  %v2515 = vsel %vm516, %v2514, %v2496
  %v2516 = vrot.slane %v2496, 4
  %v2517 = vsel %vm516, %v2502, %v2516
  %v2519 = vunpack.c.l.s4 1934713408
  %v2520 = vunpack.c.0.s8 %v2519
  %v2521 = vperm.slane %v2515, %v2520
  %v2523 = vunpack.c.l.s4 1934713408
  %v2524 = vunpack.c.0.s8 %v2523
  %v2525 = vperm.slane %v2517, %v2524
  %v2526 = vrot.slane %v2513, 4
  %v2527 = vsel %vm516, %v2526, %v2507
  %v2528 = vrot.slane %v2507, 4
  %v2529 = vsel %vm516, %v2513, %v2528
  %v2531 = vunpack.c.l.s4 1934713408
  %v2532 = vunpack.c.0.s8 %v2531
  %v2533 = vperm.slane %v2527, %v2532
  %v2535 = vunpack.c.l.s4 1934713408
  %v2536 = vunpack.c.0.s8 %v2535
  %v2537 = vperm.slane %v2529, %v2536
  %v2538 = vrot.slane %v2533, 4
  %v2539 = vsel %vm516, %v2538, %v2521
  %v2540 = vrot.slane %v2521, 4
  %v2541 = vsel %vm516, %v2533, %v2540
  %v2542 = vrot.slane %v2537, 4
  %v2543 = vsel %vm516, %v2542, %v2525
  %v2544 = vrot.slane %v2525, 4
  %v2545 = vsel %vm516, %v2537, %v2544
  %v2546 = vsel %vm516, %v2150, %v2131
  %v2548 = vunpack.c.l.s4 1983009808
  %v2549 = vunpack.c.0.s8 %v2548
  %v2550 = vperm.slane %v2546, %v2549
  %v2551 = vrot.slane %v2151, 4
  %v2552 = vsel %vm516, %v2551, %v2149
  %v2554 = vunpack.c.l.s4 1983009808
  %v2555 = vunpack.c.0.s8 %v2554
  %v2556 = vperm.slane %v2552, %v2555
  %v2557 = vsel %vm516, %v2154, %v2143
  %v2559 = vunpack.c.l.s4 1983009808
  %v2560 = vunpack.c.0.s8 %v2559
  %v2561 = vperm.slane %v2557, %v2560
  %v2562 = vrot.slane %v2155, 4
  %v2563 = vsel %vm516, %v2562, %v2153
  %v2565 = vunpack.c.l.s4 1983009808
  %v2566 = vunpack.c.0.s8 %v2565
  %v2567 = vperm.slane %v2563, %v2566
  %v2568 = vrot.slane %v2556, 4
  %v2569 = vsel %vm516, %v2568, %v2550
  %v2570 = vrot.slane %v2550, 4
  %v2571 = vsel %vm516, %v2556, %v2570
  %v2573 = vunpack.c.l.s4 1934713408
  %v2574 = vunpack.c.0.s8 %v2573
  %v2575 = vperm.slane %v2569, %v2574
  %v2577 = vunpack.c.l.s4 1934713408
  %v2578 = vunpack.c.0.s8 %v2577
  %v2579 = vperm.slane %v2571, %v2578
  %v2580 = vrot.slane %v2567, 4
  %v2581 = vsel %vm516, %v2580, %v2561
  %v2582 = vrot.slane %v2561, 4
  %v2583 = vsel %vm516, %v2567, %v2582
  %v2585 = vunpack.c.l.s4 1934713408
  %v2586 = vunpack.c.0.s8 %v2585
  %v2587 = vperm.slane %v2581, %v2586
  %v2589 = vunpack.c.l.s4 1934713408
  %v2590 = vunpack.c.0.s8 %v2589
  %v2591 = vperm.slane %v2583, %v2590
  %v2592 = vrot.slane %v2587, 4
  %v2593 = vsel %vm516, %v2592, %v2575
  %v2594 = vrot.slane %v2575, 4
  %v2595 = vsel %vm516, %v2587, %v2594
  %v2596 = vrot.slane %v2591, 4
  %v2597 = vsel %vm516, %v2596, %v2579
  %v2598 = vrot.slane %v2579, 4
  %v2599 = vsel %vm516, %v2591, %v2598
  %v2600 = vsel %vm516, %v2206, %v2187
  %v2602 = vunpack.c.l.s4 1983009808
  %v2603 = vunpack.c.0.s8 %v2602
  %v2604 = vperm.slane %v2600, %v2603
  %v2605 = vrot.slane %v2207, 4
  %v2606 = vsel %vm516, %v2605, %v2205
  %v2608 = vunpack.c.l.s4 1983009808
  %v2609 = vunpack.c.0.s8 %v2608
  %v2610 = vperm.slane %v2606, %v2609
  %v2611 = vsel %vm516, %v2210, %v2199
  %v2613 = vunpack.c.l.s4 1983009808
  %v2614 = vunpack.c.0.s8 %v2613
  %v2615 = vperm.slane %v2611, %v2614
  %v2616 = vrot.slane %v2211, 4
  %v2617 = vsel %vm516, %v2616, %v2209
  %v2619 = vunpack.c.l.s4 1983009808
  %v2620 = vunpack.c.0.s8 %v2619
  %v2621 = vperm.slane %v2617, %v2620
  %v2622 = vrot.slane %v2610, 4
  %v2623 = vsel %vm516, %v2622, %v2604
  %v2624 = vrot.slane %v2604, 4
  %v2625 = vsel %vm516, %v2610, %v2624
  %v2627 = vunpack.c.l.s4 1934713408
  %v2628 = vunpack.c.0.s8 %v2627
  %v2629 = vperm.slane %v2623, %v2628
  %v2631 = vunpack.c.l.s4 1934713408
  %v2632 = vunpack.c.0.s8 %v2631
  %v2633 = vperm.slane %v2625, %v2632
  %v2634 = vrot.slane %v2621, 4
  %v2635 = vsel %vm516, %v2634, %v2615
  %v2636 = vrot.slane %v2615, 4
  %v2637 = vsel %vm516, %v2621, %v2636
  %v2639 = vunpack.c.l.s4 1934713408
  %v2640 = vunpack.c.0.s8 %v2639
  %v2641 = vperm.slane %v2635, %v2640
  %v2643 = vunpack.c.l.s4 1934713408
  %v2644 = vunpack.c.0.s8 %v2643
  %v2645 = vperm.slane %v2637, %v2644
  %v2646 = vrot.slane %v2641, 4
  %v2647 = vsel %vm516, %v2646, %v2629
  %v2648 = vrot.slane %v2629, 4
  %v2649 = vsel %vm516, %v2641, %v2648
  %v2650 = vrot.slane %v2645, 4
  %v2651 = vsel %vm516, %v2650, %v2633
  %v2652 = vrot.slane %v2633, 4
  %v2653 = vsel %vm516, %v2645, %v2652
  %v2654 = vsel %vm516, %v2262, %v2243
  %v2656 = vunpack.c.l.s4 1983009808
  %v2657 = vunpack.c.0.s8 %v2656
  %v2658 = vperm.slane %v2654, %v2657
  %v2659 = vrot.slane %v2263, 4
  %v2660 = vsel %vm516, %v2659, %v2261
  %v2662 = vunpack.c.l.s4 1983009808
  %v2663 = vunpack.c.0.s8 %v2662
  %v2664 = vperm.slane %v2660, %v2663
  %v2665 = vsel %vm516, %v2266, %v2255
  %v2667 = vunpack.c.l.s4 1983009808
  %v2668 = vunpack.c.0.s8 %v2667
  %v2669 = vperm.slane %v2665, %v2668
  %v2670 = vrot.slane %v2267, 4
  %v2671 = vsel %vm516, %v2670, %v2265
  %v2673 = vunpack.c.l.s4 1983009808
  %v2674 = vunpack.c.0.s8 %v2673
  %v2675 = vperm.slane %v2671, %v2674
  %v2676 = vrot.slane %v2664, 4
  %v2677 = vsel %vm516, %v2676, %v2658
  %v2678 = vrot.slane %v2658, 4
  %v2679 = vsel %vm516, %v2664, %v2678
  %v2681 = vunpack.c.l.s4 1934713408
  %v2682 = vunpack.c.0.s8 %v2681
  %v2683 = vperm.slane %v2677, %v2682
  %v2685 = vunpack.c.l.s4 1934713408
  %v2686 = vunpack.c.0.s8 %v2685
  %v2687 = vperm.slane %v2679, %v2686
  %v2688 = vrot.slane %v2675, 4
  %v2689 = vsel %vm516, %v2688, %v2669
  %v2690 = vrot.slane %v2669, 4
  %v2691 = vsel %vm516, %v2675, %v2690
  %v2693 = vunpack.c.l.s4 1934713408
  %v2694 = vunpack.c.0.s8 %v2693
  %v2695 = vperm.slane %v2689, %v2694
  %v2697 = vunpack.c.l.s4 1934713408
  %v2698 = vunpack.c.0.s8 %v2697
  %v2699 = vperm.slane %v2691, %v2698
  %v2700 = vrot.slane %v2695, 4
  %v2701 = vsel %vm516, %v2700, %v2683
  %v2702 = vrot.slane %v2683, 4
  %v2703 = vsel %vm516, %v2695, %v2702
  %v2704 = vrot.slane %v2699, 4
  %v2705 = vsel %vm516, %v2704, %v2687
  %v2706 = vrot.slane %v2687, 4
  %v2707 = vsel %vm516, %v2699, %v2706
  %v2708 = vsel %vm516, %v2318, %v2299
  %v2710 = vunpack.c.l.s4 1983009808
  %v2711 = vunpack.c.0.s8 %v2710
  %v2712 = vperm.slane %v2708, %v2711
  %v2713 = vrot.slane %v2319, 4
  %v2714 = vsel %vm516, %v2713, %v2317
  %v2716 = vunpack.c.l.s4 1983009808
  %v2717 = vunpack.c.0.s8 %v2716
  %v2718 = vperm.slane %v2714, %v2717
  %v2719 = vsel %vm516, %v2322, %v2311
  %v2721 = vunpack.c.l.s4 1983009808
  %v2722 = vunpack.c.0.s8 %v2721
  %v2723 = vperm.slane %v2719, %v2722
  %v2724 = vrot.slane %v2323, 4
  %v2725 = vsel %vm516, %v2724, %v2321
  %v2727 = vunpack.c.l.s4 1983009808
  %v2728 = vunpack.c.0.s8 %v2727
  %v2729 = vperm.slane %v2725, %v2728
  %v2730 = vrot.slane %v2718, 4
  %v2731 = vsel %vm516, %v2730, %v2712
  %v2732 = vrot.slane %v2712, 4
  %v2733 = vsel %vm516, %v2718, %v2732
  %v2735 = vunpack.c.l.s4 1934713408
  %v2736 = vunpack.c.0.s8 %v2735
  %v2737 = vperm.slane %v2731, %v2736
  %v2739 = vunpack.c.l.s4 1934713408
  %v2740 = vunpack.c.0.s8 %v2739
  %v2741 = vperm.slane %v2733, %v2740
  %v2742 = vrot.slane %v2729, 4
  %v2743 = vsel %vm516, %v2742, %v2723
  %v2744 = vrot.slane %v2723, 4
  %v2745 = vsel %vm516, %v2729, %v2744
  %v2747 = vunpack.c.l.s4 1934713408
  %v2748 = vunpack.c.0.s8 %v2747
  %v2749 = vperm.slane %v2743, %v2748
  %v2751 = vunpack.c.l.s4 1934713408
  %v2752 = vunpack.c.0.s8 %v2751
  %v2753 = vperm.slane %v2745, %v2752
  %v2754 = vrot.slane %v2749, 4
  %v2755 = vsel %vm516, %v2754, %v2737
  %v2756 = vrot.slane %v2737, 4
  %v2757 = vsel %vm516, %v2749, %v2756
  %v2758 = vrot.slane %v2753, 4
  %v2759 = vsel %vm516, %v2758, %v2741
  %v2760 = vrot.slane %v2741, 4
  %v2761 = vsel %vm516, %v2753, %v2760
  %v2762 = vsel %vm516, %v2374, %v2355
  %v2764 = vunpack.c.l.s4 1983009808
  %v2765 = vunpack.c.0.s8 %v2764
  %v2766 = vperm.slane %v2762, %v2765
  %v2767 = vrot.slane %v2375, 4
  %v2768 = vsel %vm516, %v2767, %v2373
  %v2770 = vunpack.c.l.s4 1983009808
  %v2771 = vunpack.c.0.s8 %v2770
  %v2772 = vperm.slane %v2768, %v2771
  %v2773 = vsel %vm516, %v2378, %v2367
  %v2775 = vunpack.c.l.s4 1983009808
  %v2776 = vunpack.c.0.s8 %v2775
  %v2777 = vperm.slane %v2773, %v2776
  %v2778 = vrot.slane %v2379, 4
  %v2779 = vsel %vm516, %v2778, %v2377
  %v2781 = vunpack.c.l.s4 1983009808
  %v2782 = vunpack.c.0.s8 %v2781
  %v2783 = vperm.slane %v2779, %v2782
  %v2784 = vrot.slane %v2772, 4
  %v2785 = vsel %vm516, %v2784, %v2766
  %v2786 = vrot.slane %v2766, 4
  %v2787 = vsel %vm516, %v2772, %v2786
  %v2789 = vunpack.c.l.s4 1934713408
  %v2790 = vunpack.c.0.s8 %v2789
  %v2791 = vperm.slane %v2785, %v2790
  %v2793 = vunpack.c.l.s4 1934713408
  %v2794 = vunpack.c.0.s8 %v2793
  %v2795 = vperm.slane %v2787, %v2794
  %v2796 = vrot.slane %v2783, 4
  %v2797 = vsel %vm516, %v2796, %v2777
  %v2798 = vrot.slane %v2777, 4
  %v2799 = vsel %vm516, %v2783, %v2798
  %v2801 = vunpack.c.l.s4 1934713408
  %v2802 = vunpack.c.0.s8 %v2801
  %v2803 = vperm.slane %v2797, %v2802
  %v2805 = vunpack.c.l.s4 1934713408
  %v2806 = vunpack.c.0.s8 %v2805
  %v2807 = vperm.slane %v2799, %v2806
  %v2808 = vrot.slane %v2803, 4
  %v2809 = vsel %vm516, %v2808, %v2791
  %v2810 = vrot.slane %v2791, 4
  %v2811 = vsel %vm516, %v2803, %v2810
  %v2812 = vrot.slane %v2807, 4
  %v2813 = vsel %vm516, %v2812, %v2795
  %v2814 = vrot.slane %v2795, 4
  %v2815 = vsel %vm516, %v2807, %v2814
  %v2816 = vsel %vm516, %v2430, %v2411
  %v2818 = vunpack.c.l.s4 1983009808
  %v2819 = vunpack.c.0.s8 %v2818
  %v2820 = vperm.slane %v2816, %v2819
  %v2821 = vrot.slane %v2431, 4
  %v2822 = vsel %vm516, %v2821, %v2429
  %v2824 = vunpack.c.l.s4 1983009808
  %v2825 = vunpack.c.0.s8 %v2824
  %v2826 = vperm.slane %v2822, %v2825
  %v2827 = vsel %vm516, %v2434, %v2423
  %v2829 = vunpack.c.l.s4 1983009808
  %v2830 = vunpack.c.0.s8 %v2829
  %v2831 = vperm.slane %v2827, %v2830
  %v2832 = vrot.slane %v2435, 4
  %v2833 = vsel %vm516, %v2832, %v2433
  %v2835 = vunpack.c.l.s4 1983009808
  %v2836 = vunpack.c.0.s8 %v2835
  %v2837 = vperm.slane %v2833, %v2836
  %v2838 = vrot.slane %v2826, 4
  %v2839 = vsel %vm516, %v2838, %v2820
  %v2840 = vrot.slane %v2820, 4
  %v2841 = vsel %vm516, %v2826, %v2840
  %v2843 = vunpack.c.l.s4 1934713408
  %v2844 = vunpack.c.0.s8 %v2843
  %v2845 = vperm.slane %v2839, %v2844
  %v2847 = vunpack.c.l.s4 1934713408
  %v2848 = vunpack.c.0.s8 %v2847
  %v2849 = vperm.slane %v2841, %v2848
  %v2850 = vrot.slane %v2837, 4
  %v2851 = vsel %vm516, %v2850, %v2831
  %v2852 = vrot.slane %v2831, 4
  %v2853 = vsel %vm516, %v2837, %v2852
  %v2855 = vunpack.c.l.s4 1934713408
  %v2856 = vunpack.c.0.s8 %v2855
  %v2857 = vperm.slane %v2851, %v2856
  %v2859 = vunpack.c.l.s4 1934713408
  %v2860 = vunpack.c.0.s8 %v2859
  %v2861 = vperm.slane %v2853, %v2860
  %v2862 = vrot.slane %v2857, 4
  %v2863 = vsel %vm516, %v2862, %v2845
  %v2864 = vrot.slane %v2845, 4
  %v2865 = vsel %vm516, %v2857, %v2864
  %v2866 = vrot.slane %v2861, 4
  %v2867 = vsel %vm516, %v2866, %v2849
  %v2868 = vrot.slane %v2849, 4
  %v2869 = vsel %vm516, %v2861, %v2868
  %v2870 = vsel %vm516, %v2486, %v2467
  %v2872 = vunpack.c.l.s4 1983009808
  %v2873 = vunpack.c.0.s8 %v2872
  %v2874 = vperm.slane %v2870, %v2873
  %v2875 = vrot.slane %v2487, 4
  %v2876 = vsel %vm516, %v2875, %v2485
  %v2878 = vunpack.c.l.s4 1983009808
  %v2879 = vunpack.c.0.s8 %v2878
  %v2880 = vperm.slane %v2876, %v2879
  %v2881 = vsel %vm516, %v2490, %v2479
  %v2883 = vunpack.c.l.s4 1983009808
  %v2884 = vunpack.c.0.s8 %v2883
  %v2885 = vperm.slane %v2881, %v2884
  %v2886 = vrot.slane %v2491, 4
  %v2887 = vsel %vm516, %v2886, %v2489
  %v2889 = vunpack.c.l.s4 1983009808
  %v2890 = vunpack.c.0.s8 %v2889
  %v2891 = vperm.slane %v2887, %v2890
  %v2892 = vrot.slane %v2880, 4
  %v2893 = vsel %vm516, %v2892, %v2874
  %v2894 = vrot.slane %v2874, 4
  %v2895 = vsel %vm516, %v2880, %v2894
  %v2897 = vunpack.c.l.s4 1934713408
  %v2898 = vunpack.c.0.s8 %v2897
  %v2899 = vperm.slane %v2893, %v2898
  %v2901 = vunpack.c.l.s4 1934713408
  %v2902 = vunpack.c.0.s8 %v2901
  %v2903 = vperm.slane %v2895, %v2902
  %v2904 = vrot.slane %v2891, 4
  %v2905 = vsel %vm516, %v2904, %v2885
  %v2906 = vrot.slane %v2885, 4
  %v2907 = vsel %vm516, %v2891, %v2906
  %v2909 = vunpack.c.l.s4 1934713408
  %v2910 = vunpack.c.0.s8 %v2909
  %v2911 = vperm.slane %v2905, %v2910
  %v2913 = vunpack.c.l.s4 1934713408
  %v2914 = vunpack.c.0.s8 %v2913
  %v2915 = vperm.slane %v2907, %v2914
  %v2916 = vrot.slane %v2911, 4
  %v2917 = vsel %vm516, %v2916, %v2899
  %v2918 = vrot.slane %v2899, 4
  %v2919 = vsel %vm516, %v2911, %v2918
  %v2920 = vrot.slane %v2915, 4
  %v2921 = vsel %vm516, %v2920, %v2903
  %v2922 = vrot.slane %v2903, 4
  %v2923 = vsel %vm516, %v2915, %v2922
  %v2924 = vpack.c.bf16 %v2539, %v2539
  %v2925 = vpack.c.bf16 %v2593, %v2593
  %v2926 = vpack.c.bf16 %v2541, %v2541
  %v2927 = vpack.c.bf16 %v2595, %v2595
  %v2928 = vpack.c.bf16 %v2543, %v2543
  %v2929 = vpack.c.bf16 %v2597, %v2597
  %v2930 = vpack.c.bf16 %v2545, %v2545
  %v2931 = vpack.c.bf16 %v2599, %v2599
  %v2932 = vpack.c.bf16 %v2647, %v2647
  %v2933 = vpack.c.bf16 %v2701, %v2701
  %v2934 = vpack.c.bf16 %v2649, %v2649
  %v2935 = vpack.c.bf16 %v2703, %v2703
  %v2936 = vpack.c.bf16 %v2651, %v2651
  %v2937 = vpack.c.bf16 %v2705, %v2705
  %v2938 = vpack.c.bf16 %v2653, %v2653
  %v2939 = vpack.c.bf16 %v2707, %v2707
  %v2940 = vpack.c.bf16 %v2755, %v2755
  %v2941 = vpack.c.bf16 %v2809, %v2809
  %v2942 = vpack.c.bf16 %v2757, %v2757
  %v2943 = vpack.c.bf16 %v2811, %v2811
  %v2944 = vpack.c.bf16 %v2759, %v2759
  %v2945 = vpack.c.bf16 %v2813, %v2813
  %v2946 = vpack.c.bf16 %v2761, %v2761
  %v2947 = vpack.c.bf16 %v2815, %v2815
  %v2948 = vpack.c.bf16 %v2863, %v2863
  %v2949 = vpack.c.bf16 %v2917, %v2917
  %v2950 = vpack.c.bf16 %v2865, %v2865
  %v2951 = vpack.c.bf16 %v2919, %v2919
  %v2952 = vpack.c.bf16 %v2867, %v2867
  %v2953 = vpack.c.bf16 %v2921, %v2921
  %v2954 = vpack.c.bf16 %v2869, %v2869
  %v2955 = vpack.c.bf16 %v2923, %v2923
  %v2958 = vunpack.c.l.b16 %v956
  %v2959 = vunpack.c.l.b16 %v957
  %v2960 = vpack.c.b16 %v2959, %v2958
  %v2963 = vunpack.c.l.b16 %v1932
  %v2964 = vunpack.c.l.b16 %v1933
  %v2965 = vpack.c.b16 %v2964, %v2963
  %vm2966 = vcmask 130048
  %v2968 = vsel %vm2966, %v2960, 0
  %v2971 = vsel %vm2966, %v2965, 0
  %2973 = vmatpush.bf16.xpose.msra.mxu0 0
  %2974 = vmatpush.bf16.xpose.msra.mxu0 0
  %2975 = vmatpush.bf16.xpose.msra.mxu0 0
  %2976 = vmatpush.bf16.xpose.msra.mxu0 0
  %2977 = vmatpush.bf16.xpose.msra.mxu0 0
  %2978 = vmatpush.bf16.xpose.msra.mxu0 0
  %2979 = vmatpush.bf16.xpose.msra.mxu0 0
  %2980 = vmatpush.bf16.xpose.msra.mxu0 %v2971
  %2981 = vmatmul.bf16.gmra.mxu0 %v2968
  %v2982 = vpop.f32.mrf.mxu0
  %v2983 = vadd.f32 0.0, %v2982
  %v2984 = vpop.f32.mrf.mxu0
  %v2985 = vadd.f32 0.0, %v2984
  %2986 = vdwg.mxu0
  %v2989 = vunpack.c.l.b16 %v958
  %v2990 = vunpack.c.l.b16 %v959
  %v2991 = vpack.c.b16 %v2990, %v2989
  %v2994 = vunpack.c.l.b16 %v1934
  %v2995 = vunpack.c.l.b16 %v1935
  %v2996 = vpack.c.b16 %v2995, %v2994
  %v2998 = vsel %vm2966, %v2991, 0
  %v3001 = vsel %vm2966, %v2996, 0
  %3003 = vmatpush.bf16.xpose.msra.mxu0 0
  %3004 = vmatpush.bf16.xpose.msra.mxu0 0
  %3005 = vmatpush.bf16.xpose.msra.mxu0 0
  %3006 = vmatpush.bf16.xpose.msra.mxu0 0
  %3007 = vmatpush.bf16.xpose.msra.mxu0 0
  %3008 = vmatpush.bf16.xpose.msra.mxu0 0
  %3009 = vmatpush.bf16.xpose.msra.mxu0 0
  %3010 = vmatpush.bf16.xpose.msra.mxu0 %v3001
  %3011 = vmatmul.bf16.gmra.mxu0 %v2998
  %v3012 = vpop.f32.mrf.mxu0
  %v3013 = vadd.f32 0.0, %v3012
  %v3014 = vpop.f32.mrf.mxu0
  %v3015 = vadd.f32 0.0, %v3014
  %3016 = vdwg.mxu0
  %v3019 = vunpack.c.l.b16 %v960
  %v3020 = vunpack.c.l.b16 %v961
  %v3021 = vpack.c.b16 %v3020, %v3019
  %v3024 = vunpack.c.l.b16 %v1936
  %v3025 = vunpack.c.l.b16 %v1937
  %v3026 = vpack.c.b16 %v3025, %v3024
  %v3028 = vsel %vm2966, %v3021, 0
  %v3031 = vsel %vm2966, %v3026, 0
  %3033 = vmatpush.bf16.xpose.msra.mxu0 0
  %3034 = vmatpush.bf16.xpose.msra.mxu0 0
  %3035 = vmatpush.bf16.xpose.msra.mxu0 0
  %3036 = vmatpush.bf16.xpose.msra.mxu0 0
  %3037 = vmatpush.bf16.xpose.msra.mxu0 0
  %3038 = vmatpush.bf16.xpose.msra.mxu0 0
  %3039 = vmatpush.bf16.xpose.msra.mxu0 0
  %3040 = vmatpush.bf16.xpose.msra.mxu0 %v3031
  %3041 = vmatmul.bf16.gmra.mxu0 %v3028
  %v3042 = vpop.f32.mrf.mxu0
  %v3043 = vadd.f32 0.0, %v3042
  %v3044 = vpop.f32.mrf.mxu0
  %v3045 = vadd.f32 0.0, %v3044
  %3046 = vdwg.mxu0
  %v3049 = vunpack.c.l.b16 %v962
  %v3050 = vunpack.c.l.b16 %v963
  %v3051 = vpack.c.b16 %v3050, %v3049
  %v3054 = vunpack.c.l.b16 %v1938
  %v3055 = vunpack.c.l.b16 %v1939
  %v3056 = vpack.c.b16 %v3055, %v3054
  %v3058 = vsel %vm2966, %v3051, 0
  %v3061 = vsel %vm2966, %v3056, 0
  %3063 = vmatpush.bf16.xpose.msra.mxu0 0
  %3064 = vmatpush.bf16.xpose.msra.mxu0 0
  %3065 = vmatpush.bf16.xpose.msra.mxu0 0
  %3066 = vmatpush.bf16.xpose.msra.mxu0 0
  %3067 = vmatpush.bf16.xpose.msra.mxu0 0
  %3068 = vmatpush.bf16.xpose.msra.mxu0 0
  %3069 = vmatpush.bf16.xpose.msra.mxu0 0
  %3070 = vmatpush.bf16.xpose.msra.mxu0 %v3061
  %3071 = vmatmul.bf16.gmra.mxu0 %v3058
  %v3072 = vpop.f32.mrf.mxu0
  %v3073 = vadd.f32 0.0, %v3072
  %v3074 = vpop.f32.mrf.mxu0
  %v3075 = vadd.f32 0.0, %v3074
  %3076 = vdwg.mxu0
  %v3079 = vunpack.c.l.b16 %v964
  %v3080 = vunpack.c.l.b16 %v965
  %v3081 = vpack.c.b16 %v3080, %v3079
  %v3084 = vunpack.c.l.b16 %v1940
  %v3085 = vunpack.c.l.b16 %v1941
  %v3086 = vpack.c.b16 %v3085, %v3084
  %v3088 = vsel %vm2966, %v3081, 0
  %v3091 = vsel %vm2966, %v3086, 0
  %3093 = vmatpush.bf16.xpose.msra.mxu0 0
  %3094 = vmatpush.bf16.xpose.msra.mxu0 0
  %3095 = vmatpush.bf16.xpose.msra.mxu0 0
  %3096 = vmatpush.bf16.xpose.msra.mxu0 0
  %3097 = vmatpush.bf16.xpose.msra.mxu0 0
  %3098 = vmatpush.bf16.xpose.msra.mxu0 0
  %3099 = vmatpush.bf16.xpose.msra.mxu0 0
  %3100 = vmatpush.bf16.xpose.msra.mxu0 %v3091
  %3101 = vmatmul.bf16.gmra.mxu0 %v3088
  %v3102 = vpop.f32.mrf.mxu0
  %v3103 = vadd.f32 0.0, %v3102
  %v3104 = vpop.f32.mrf.mxu0
  %v3105 = vadd.f32 0.0, %v3104
  %3106 = vdwg.mxu0
  %v3109 = vunpack.c.l.b16 %v966
  %v3110 = vunpack.c.l.b16 %v967
  %v3111 = vpack.c.b16 %v3110, %v3109
  %v3114 = vunpack.c.l.b16 %v1942
  %v3115 = vunpack.c.l.b16 %v1943
  %v3116 = vpack.c.b16 %v3115, %v3114
  %v3118 = vsel %vm2966, %v3111, 0
  %v3121 = vsel %vm2966, %v3116, 0
  %3123 = vmatpush.bf16.xpose.msra.mxu0 0
  %3124 = vmatpush.bf16.xpose.msra.mxu0 0
  %3125 = vmatpush.bf16.xpose.msra.mxu0 0
  %3126 = vmatpush.bf16.xpose.msra.mxu0 0
  %3127 = vmatpush.bf16.xpose.msra.mxu0 0
  %3128 = vmatpush.bf16.xpose.msra.mxu0 0
  %3129 = vmatpush.bf16.xpose.msra.mxu0 0
  %3130 = vmatpush.bf16.xpose.msra.mxu0 %v3121
  %3131 = vmatmul.bf16.gmra.mxu0 %v3118
  %v3132 = vpop.f32.mrf.mxu0
  %v3133 = vadd.f32 0.0, %v3132
  %v3134 = vpop.f32.mrf.mxu0
  %v3135 = vadd.f32 0.0, %v3134
  %3136 = vdwg.mxu0
  %v3139 = vunpack.c.l.b16 %v968
  %v3140 = vunpack.c.l.b16 %v969
  %v3141 = vpack.c.b16 %v3140, %v3139
  %v3144 = vunpack.c.l.b16 %v1944
  %v3145 = vunpack.c.l.b16 %v1945
  %v3146 = vpack.c.b16 %v3145, %v3144
  %v3148 = vsel %vm2966, %v3141, 0
  %v3151 = vsel %vm2966, %v3146, 0
  %3153 = vmatpush.bf16.xpose.msra.mxu0 0
  %3154 = vmatpush.bf16.xpose.msra.mxu0 0
  %3155 = vmatpush.bf16.xpose.msra.mxu0 0
  %3156 = vmatpush.bf16.xpose.msra.mxu0 0
  %3157 = vmatpush.bf16.xpose.msra.mxu0 0
  %3158 = vmatpush.bf16.xpose.msra.mxu0 0
  %3159 = vmatpush.bf16.xpose.msra.mxu0 0
  %3160 = vmatpush.bf16.xpose.msra.mxu0 %v3151
  %3161 = vmatmul.bf16.gmra.mxu0 %v3148
  %v3162 = vpop.f32.mrf.mxu0
  %v3163 = vadd.f32 0.0, %v3162
  %v3164 = vpop.f32.mrf.mxu0
  %v3165 = vadd.f32 0.0, %v3164
  %3166 = vdwg.mxu0
  %v3169 = vunpack.c.l.b16 %v970
  %v3170 = vunpack.c.l.b16 %v971
  %v3171 = vpack.c.b16 %v3170, %v3169
  %v3174 = vunpack.c.l.b16 %v1946
  %v3175 = vunpack.c.l.b16 %v1947
  %v3176 = vpack.c.b16 %v3175, %v3174
  %v3178 = vsel %vm2966, %v3171, 0
  %v3181 = vsel %vm2966, %v3176, 0
  %3183 = vmatpush.bf16.xpose.msra.mxu0 0
  %3184 = vmatpush.bf16.xpose.msra.mxu0 0
  %3185 = vmatpush.bf16.xpose.msra.mxu0 0
  %3186 = vmatpush.bf16.xpose.msra.mxu0 0
  %3187 = vmatpush.bf16.xpose.msra.mxu0 0
  %3188 = vmatpush.bf16.xpose.msra.mxu0 0
  %3189 = vmatpush.bf16.xpose.msra.mxu0 0
  %3190 = vmatpush.bf16.xpose.msra.mxu0 %v3181
  %3191 = vmatmul.bf16.gmra.mxu0 %v3178
  %v3192 = vpop.f32.mrf.mxu0
  %v3193 = vadd.f32 0.0, %v3192
  %v3194 = vpop.f32.mrf.mxu0
  %v3195 = vadd.f32 0.0, %v3194
  %3196 = vdwg.mxu0
  %v3199 = vunpack.c.l.b16 %v1948
  %v3200 = vunpack.c.l.b16 %v1949
  %v3201 = vpack.c.b16 %v3200, %v3199
  %v3203 = vsel %vm2966, %v3201, 0
  %3205 = vmatpush.bf16.xpose.msra.mxu0 0
  %3206 = vmatpush.bf16.xpose.msra.mxu0 0
  %3207 = vmatpush.bf16.xpose.msra.mxu0 0
  %3208 = vmatpush.bf16.xpose.msra.mxu0 0
  %3209 = vmatpush.bf16.xpose.msra.mxu0 0
  %3210 = vmatpush.bf16.xpose.msra.mxu0 0
  %3211 = vmatpush.bf16.xpose.msra.mxu0 0
  %3212 = vmatpush.bf16.xpose.msra.mxu0 %v3203
  %3213 = vmatmul.bf16.gmra.mxu0 %v2968
  %v3214 = vpop.f32.mrf.mxu0
  %v3215 = vadd.f32 0.0, %v3214
  %v3216 = vpop.f32.mrf.mxu0
  %v3217 = vadd.f32 0.0, %v3216
  %3218 = vdwg.mxu0
  %v3221 = vunpack.c.l.b16 %v1950
  %v3222 = vunpack.c.l.b16 %v1951
  %v3223 = vpack.c.b16 %v3222, %v3221
  %v3225 = vsel %vm2966, %v3223, 0
  %3227 = vmatpush.bf16.xpose.msra.mxu0 0
  %3228 = vmatpush.bf16.xpose.msra.mxu0 0
  %3229 = vmatpush.bf16.xpose.msra.mxu0 0
  %3230 = vmatpush.bf16.xpose.msra.mxu0 0
  %3231 = vmatpush.bf16.xpose.msra.mxu0 0
  %3232 = vmatpush.bf16.xpose.msra.mxu0 0
  %3233 = vmatpush.bf16.xpose.msra.mxu0 0
  %3234 = vmatpush.bf16.xpose.msra.mxu0 %v3225
  %3235 = vmatmul.bf16.gmra.mxu0 %v2998
  %v3236 = vpop.f32.mrf.mxu0
  %v3237 = vadd.f32 0.0, %v3236
  %v3238 = vpop.f32.mrf.mxu0
  %v3239 = vadd.f32 0.0, %v3238
  %3240 = vdwg.mxu0
  %v3243 = vunpack.c.l.b16 %v1952
  %v3244 = vunpack.c.l.b16 %v1953
  %v3245 = vpack.c.b16 %v3244, %v3243
  %v3247 = vsel %vm2966, %v3245, 0
  %3249 = vmatpush.bf16.xpose.msra.mxu0 0
  %3250 = vmatpush.bf16.xpose.msra.mxu0 0
  %3251 = vmatpush.bf16.xpose.msra.mxu0 0
  %3252 = vmatpush.bf16.xpose.msra.mxu0 0
  %3253 = vmatpush.bf16.xpose.msra.mxu0 0
  %3254 = vmatpush.bf16.xpose.msra.mxu0 0
  %3255 = vmatpush.bf16.xpose.msra.mxu0 0
  %3256 = vmatpush.bf16.xpose.msra.mxu0 %v3247
  %3257 = vmatmul.bf16.gmra.mxu0 %v3028
  %v3258 = vpop.f32.mrf.mxu0
  %v3259 = vadd.f32 0.0, %v3258
  %v3260 = vpop.f32.mrf.mxu0
  %v3261 = vadd.f32 0.0, %v3260
  %3262 = vdwg.mxu0
  %v3265 = vunpack.c.l.b16 %v1954
  %v3266 = vunpack.c.l.b16 %v1955
  %v3267 = vpack.c.b16 %v3266, %v3265
  %v3269 = vsel %vm2966, %v3267, 0
  %3271 = vmatpush.bf16.xpose.msra.mxu0 0
  %3272 = vmatpush.bf16.xpose.msra.mxu0 0
  %3273 = vmatpush.bf16.xpose.msra.mxu0 0
  %3274 = vmatpush.bf16.xpose.msra.mxu0 0
  %3275 = vmatpush.bf16.xpose.msra.mxu0 0
  %3276 = vmatpush.bf16.xpose.msra.mxu0 0
  %3277 = vmatpush.bf16.xpose.msra.mxu0 0
  %3278 = vmatpush.bf16.xpose.msra.mxu0 %v3269
  %3279 = vmatmul.bf16.gmra.mxu0 %v3058
  %v3280 = vpop.f32.mrf.mxu0
  %v3281 = vadd.f32 0.0, %v3280
  %v3282 = vpop.f32.mrf.mxu0
  %v3283 = vadd.f32 0.0, %v3282
  %3284 = vdwg.mxu0
  %v3287 = vunpack.c.l.b16 %v1956
  %v3288 = vunpack.c.l.b16 %v1957
  %v3289 = vpack.c.b16 %v3288, %v3287
  %v3291 = vsel %vm2966, %v3289, 0
  %3293 = vmatpush.bf16.xpose.msra.mxu0 0
  %3294 = vmatpush.bf16.xpose.msra.mxu0 0
  %3295 = vmatpush.bf16.xpose.msra.mxu0 0
  %3296 = vmatpush.bf16.xpose.msra.mxu0 0
  %3297 = vmatpush.bf16.xpose.msra.mxu0 0
  %3298 = vmatpush.bf16.xpose.msra.mxu0 0
  %3299 = vmatpush.bf16.xpose.msra.mxu0 0
  %3300 = vmatpush.bf16.xpose.msra.mxu0 %v3291
  %3301 = vmatmul.bf16.gmra.mxu0 %v3088
  %v3302 = vpop.f32.mrf.mxu0
  %v3303 = vadd.f32 0.0, %v3302
  %v3304 = vpop.f32.mrf.mxu0
  %v3305 = vadd.f32 0.0, %v3304
  %3306 = vdwg.mxu0
  %v3309 = vunpack.c.l.b16 %v1958
  %v3310 = vunpack.c.l.b16 %v1959
  %v3311 = vpack.c.b16 %v3310, %v3309
  %v3313 = vsel %vm2966, %v3311, 0
  %3315 = vmatpush.bf16.xpose.msra.mxu0 0
  %3316 = vmatpush.bf16.xpose.msra.mxu0 0
  %3317 = vmatpush.bf16.xpose.msra.mxu0 0
  %3318 = vmatpush.bf16.xpose.msra.mxu0 0
  %3319 = vmatpush.bf16.xpose.msra.mxu0 0
  %3320 = vmatpush.bf16.xpose.msra.mxu0 0
  %3321 = vmatpush.bf16.xpose.msra.mxu0 0
  %3322 = vmatpush.bf16.xpose.msra.mxu0 %v3313
  %3323 = vmatmul.bf16.gmra.mxu0 %v3118
  %v3324 = vpop.f32.mrf.mxu0
  %v3325 = vadd.f32 0.0, %v3324
  %v3326 = vpop.f32.mrf.mxu0
  %v3327 = vadd.f32 0.0, %v3326
  %3328 = vdwg.mxu0
  %v3331 = vunpack.c.l.b16 %v1960
  %v3332 = vunpack.c.l.b16 %v1961
  %v3333 = vpack.c.b16 %v3332, %v3331
  %v3335 = vsel %vm2966, %v3333, 0
  %3337 = vmatpush.bf16.xpose.msra.mxu0 0
  %3338 = vmatpush.bf16.xpose.msra.mxu0 0
  %3339 = vmatpush.bf16.xpose.msra.mxu0 0
  %3340 = vmatpush.bf16.xpose.msra.mxu0 0
  %3341 = vmatpush.bf16.xpose.msra.mxu0 0
  %3342 = vmatpush.bf16.xpose.msra.mxu0 0
  %3343 = vmatpush.bf16.xpose.msra.mxu0 0
  %3344 = vmatpush.bf16.xpose.msra.mxu0 %v3335
  %3345 = vmatmul.bf16.gmra.mxu0 %v3148
  %v3346 = vpop.f32.mrf.mxu0
  %v3347 = vadd.f32 0.0, %v3346
  %v3348 = vpop.f32.mrf.mxu0
  %v3349 = vadd.f32 0.0, %v3348
  %3350 = vdwg.mxu0
  %v3353 = vunpack.c.l.b16 %v1962
  %v3354 = vunpack.c.l.b16 %v1963
  %v3355 = vpack.c.b16 %v3354, %v3353
  %v3357 = vsel %vm2966, %v3355, 0
  %3359 = vmatpush.bf16.xpose.msra.mxu0 0
  %3360 = vmatpush.bf16.xpose.msra.mxu0 0
  %3361 = vmatpush.bf16.xpose.msra.mxu0 0
  %3362 = vmatpush.bf16.xpose.msra.mxu0 0
  %3363 = vmatpush.bf16.xpose.msra.mxu0 0
  %3364 = vmatpush.bf16.xpose.msra.mxu0 0
  %3365 = vmatpush.bf16.xpose.msra.mxu0 0
  %3366 = vmatpush.bf16.xpose.msra.mxu0 %v3357
  %3367 = vmatmul.bf16.gmra.mxu0 %v3178
  %v3368 = vpop.f32.mrf.mxu0
  %v3369 = vadd.f32 0.0, %v3368
  %v3370 = vpop.f32.mrf.mxu0
  %v3371 = vadd.f32 0.0, %v3370
  %3372 = vdwg.mxu0
  %v3373 = vsel %vm2966, %v2983, -inf
  %3374 = vmax.xlane.f32.xlu0 %v3373
  %v3375 = vpop.xlane.xlu0 %3374
  %v3376 = vsel %vm2966, %v2985, -inf
  %3377 = vmax.xlane.f32.xlu0 %v3376
  %v3378 = vpop.xlane.xlu0 %3377
  %v3379 = vsel %vm2966, %v3013, -inf
  %3380 = vmax.xlane.f32.xlu0 %v3379
  %v3381 = vpop.xlane.xlu0 %3380
  %v3382 = vsel %vm2966, %v3015, -inf
  %3383 = vmax.xlane.f32.xlu0 %v3382
  %v3384 = vpop.xlane.xlu0 %3383
  %v3385 = vsel %vm2966, %v3043, -inf
  %3386 = vmax.xlane.f32.xlu0 %v3385
  %v3387 = vpop.xlane.xlu0 %3386
  %v3388 = vsel %vm2966, %v3045, -inf
  %3389 = vmax.xlane.f32.xlu0 %v3388
  %v3390 = vpop.xlane.xlu0 %3389
  %v3391 = vsel %vm2966, %v3073, -inf
  %3392 = vmax.xlane.f32.xlu0 %v3391
  %v3393 = vpop.xlane.xlu0 %3392
  %v3394 = vsel %vm2966, %v3075, -inf
  %3395 = vmax.xlane.f32.xlu0 %v3394
  %v3396 = vpop.xlane.xlu0 %3395
  %v3397 = vsel %vm2966, %v3103, -inf
  %3398 = vmax.xlane.f32.xlu0 %v3397
  %v3399 = vpop.xlane.xlu0 %3398
  %v3400 = vsel %vm2966, %v3105, -inf
  %3401 = vmax.xlane.f32.xlu0 %v3400
  %v3402 = vpop.xlane.xlu0 %3401
  %v3403 = vsel %vm2966, %v3133, -inf
  %3404 = vmax.xlane.f32.xlu0 %v3403
  %v3405 = vpop.xlane.xlu0 %3404
  %v3406 = vsel %vm2966, %v3135, -inf
  %3407 = vmax.xlane.f32.xlu0 %v3406
  %v3408 = vpop.xlane.xlu0 %3407
  %v3409 = vsel %vm2966, %v3163, -inf
  %3410 = vmax.xlane.f32.xlu0 %v3409
  %v3411 = vpop.xlane.xlu0 %3410
  %v3412 = vsel %vm2966, %v3165, -inf
  %3413 = vmax.xlane.f32.xlu0 %v3412
  %v3414 = vpop.xlane.xlu0 %3413
  %v3415 = vsel %vm2966, %v3193, -inf
  %3416 = vmax.xlane.f32.xlu0 %v3415
  %v3417 = vpop.xlane.xlu0 %3416
  %v3418 = vsel %vm2966, %v3195, -inf
  %3419 = vmax.xlane.f32.xlu0 %v3418
  %v3420 = vpop.xlane.xlu0 %3419
  %v3421 = vsel %vm2966, %v3215, -inf
  %3422 = vmax.xlane.f32.xlu0 %v3421
  %v3423 = vpop.xlane.xlu0 %3422
  %v3424 = vsel %vm2966, %v3217, -inf
  %3425 = vmax.xlane.f32.xlu0 %v3424
  %v3426 = vpop.xlane.xlu0 %3425
  %v3427 = vsel %vm2966, %v3237, -inf
  %3428 = vmax.xlane.f32.xlu0 %v3427
  %v3429 = vpop.xlane.xlu0 %3428
  %v3430 = vsel %vm2966, %v3239, -inf
  %3431 = vmax.xlane.f32.xlu0 %v3430
  %v3432 = vpop.xlane.xlu0 %3431
  %v3433 = vsel %vm2966, %v3259, -inf
  %3434 = vmax.xlane.f32.xlu0 %v3433
  %v3435 = vpop.xlane.xlu0 %3434
  %v3436 = vsel %vm2966, %v3261, -inf
  %3437 = vmax.xlane.f32.xlu0 %v3436
  %v3438 = vpop.xlane.xlu0 %3437
  %v3439 = vsel %vm2966, %v3281, -inf
  %3440 = vmax.xlane.f32.xlu0 %v3439
  %v3441 = vpop.xlane.xlu0 %3440
  %v3442 = vsel %vm2966, %v3283, -inf
  %3443 = vmax.xlane.f32.xlu0 %v3442
  %v3444 = vpop.xlane.xlu0 %3443
  %v3445 = vsel %vm2966, %v3303, -inf
  %3446 = vmax.xlane.f32.xlu0 %v3445
  %v3447 = vpop.xlane.xlu0 %3446
  %v3448 = vsel %vm2966, %v3305, -inf
  %3449 = vmax.xlane.f32.xlu0 %v3448
  %v3450 = vpop.xlane.xlu0 %3449
  %v3451 = vsel %vm2966, %v3325, -inf
  %3452 = vmax.xlane.f32.xlu0 %v3451
  %v3453 = vpop.xlane.xlu0 %3452
  %v3454 = vsel %vm2966, %v3327, -inf
  %3455 = vmax.xlane.f32.xlu0 %v3454
  %v3456 = vpop.xlane.xlu0 %3455
  %v3457 = vsel %vm2966, %v3347, -inf
  %3458 = vmax.xlane.f32.xlu0 %v3457
  %v3459 = vpop.xlane.xlu0 %3458
  %v3460 = vsel %vm2966, %v3349, -inf
  %3461 = vmax.xlane.f32.xlu0 %v3460
  %v3462 = vpop.xlane.xlu0 %3461
  %v3463 = vsel %vm2966, %v3369, -inf
  %3464 = vmax.xlane.f32.xlu0 %v3463
  %v3465 = vpop.xlane.xlu0 %3464
  %v3466 = vsel %vm2966, %v3371, -inf
  %3467 = vmax.xlane.f32.xlu0 %v3466
  %v3468 = vpop.xlane.xlu0 %3467
  %v3469 = vmax.f32 %v3375, %v3423
  %v3470 = vmax.f32 %v3378, %v3426
  %v3471 = vmax.f32 %v3381, %v3429
  %v3472 = vmax.f32 %v3384, %v3432
  %v3473 = vmax.f32 %v3387, %v3435
  %v3474 = vmax.f32 %v3390, %v3438
  %v3475 = vmax.f32 %v3393, %v3441
  %v3476 = vmax.f32 %v3396, %v3444
  %v3477 = vmax.f32 %v3399, %v3447
  %v3478 = vmax.f32 %v3402, %v3450
  %v3479 = vmax.f32 %v3405, %v3453
  %v3480 = vmax.f32 %v3408, %v3456
  %v3481 = vmax.f32 %v3411, %v3459
  %v3482 = vmax.f32 %v3414, %v3462
  %v3483 = vmax.f32 %v3417, %v3465
  %v3484 = vmax.f32 %v3420, %v3468
  %v3485 = vsub.f32 %v2983, %v3469
  %v3486 = vsub.f32 %v2985, %v3470
  %v3487 = vsub.f32 %v3013, %v3471
  %v3488 = vsub.f32 %v3015, %v3472
  %v3489 = vsub.f32 %v3043, %v3473
  %v3490 = vsub.f32 %v3045, %v3474
  %v3491 = vsub.f32 %v3073, %v3475
  %v3492 = vsub.f32 %v3075, %v3476
  %v3493 = vsub.f32 %v3103, %v3477
  %v3494 = vsub.f32 %v3105, %v3478
  %v3495 = vsub.f32 %v3133, %v3479
  %v3496 = vsub.f32 %v3135, %v3480
  %v3497 = vsub.f32 %v3163, %v3481
  %v3498 = vsub.f32 %v3165, %v3482
  %v3499 = vsub.f32 %v3193, %v3483
  %v3500 = vsub.f32 %v3195, %v3484
  %v3501 = vmul.f32 %v3485, 1.442695
  %v3502 = vpow.pop %v3501
  %v3503 = vmul.f32 %v3486, 1.442695
  %v3504 = vpow.pop %v3503
  %v3505 = vmul.f32 %v3487, 1.442695
  %v3506 = vpow.pop %v3505
  %v3507 = vmul.f32 %v3488, 1.442695
  %v3508 = vpow.pop %v3507
  %v3509 = vmul.f32 %v3489, 1.442695
  %v3510 = vpow.pop %v3509
  %v3511 = vmul.f32 %v3490, 1.442695
  %v3512 = vpow.pop %v3511
  %v3513 = vmul.f32 %v3491, 1.442695
  %v3514 = vpow.pop %v3513
  %v3515 = vmul.f32 %v3492, 1.442695
  %v3516 = vpow.pop %v3515
  %v3517 = vmul.f32 %v3493, 1.442695
  %v3518 = vpow.pop %v3517
  %v3519 = vmul.f32 %v3494, 1.442695
  %v3520 = vpow.pop %v3519
  %v3521 = vmul.f32 %v3495, 1.442695
  %v3522 = vpow.pop %v3521
  %v3523 = vmul.f32 %v3496, 1.442695
  %v3524 = vpow.pop %v3523
  %v3525 = vmul.f32 %v3497, 1.442695
  %v3526 = vpow.pop %v3525
  %v3527 = vmul.f32 %v3498, 1.442695
  %v3528 = vpow.pop %v3527
  %v3529 = vmul.f32 %v3499, 1.442695
  %v3530 = vpow.pop %v3529
  %v3531 = vmul.f32 %v3500, 1.442695
  %v3532 = vpow.pop %v3531
  %v3533 = vsub.f32 %v3215, %v3469
  %v3534 = vsub.f32 %v3217, %v3470
  %v3535 = vsub.f32 %v3237, %v3471
  %v3536 = vsub.f32 %v3239, %v3472
  %v3537 = vsub.f32 %v3259, %v3473
  %v3538 = vsub.f32 %v3261, %v3474
  %v3539 = vsub.f32 %v3281, %v3475
  %v3540 = vsub.f32 %v3283, %v3476
  %v3541 = vsub.f32 %v3303, %v3477
  %v3542 = vsub.f32 %v3305, %v3478
  %v3543 = vsub.f32 %v3325, %v3479
  %v3544 = vsub.f32 %v3327, %v3480
  %v3545 = vsub.f32 %v3347, %v3481
  %v3546 = vsub.f32 %v3349, %v3482
  %v3547 = vsub.f32 %v3369, %v3483
  %v3548 = vsub.f32 %v3371, %v3484
  %v3549 = vmul.f32 %v3533, 1.442695
  %v3550 = vpow.pop %v3549
  %v3551 = vmul.f32 %v3534, 1.442695
  %v3552 = vpow.pop %v3551
  %v3553 = vmul.f32 %v3535, 1.442695
  %v3554 = vpow.pop %v3553
  %v3555 = vmul.f32 %v3536, 1.442695
  %v3556 = vpow.pop %v3555
  %v3557 = vmul.f32 %v3537, 1.442695
  %v3558 = vpow.pop %v3557
  %v3559 = vmul.f32 %v3538, 1.442695
  %v3560 = vpow.pop %v3559
  %v3561 = vmul.f32 %v3539, 1.442695
  %v3562 = vpow.pop %v3561
  %v3563 = vmul.f32 %v3540, 1.442695
  %v3564 = vpow.pop %v3563
  %v3565 = vmul.f32 %v3541, 1.442695
  %v3566 = vpow.pop %v3565
  %v3567 = vmul.f32 %v3542, 1.442695
  %v3568 = vpow.pop %v3567
  %v3569 = vmul.f32 %v3543, 1.442695
  %v3570 = vpow.pop %v3569
  %v3571 = vmul.f32 %v3544, 1.442695
  %v3572 = vpow.pop %v3571
  %v3573 = vmul.f32 %v3545, 1.442695
  %v3574 = vpow.pop %v3573
  %v3575 = vmul.f32 %v3546, 1.442695
  %v3576 = vpow.pop %v3575
  %v3577 = vmul.f32 %v3547, 1.442695
  %v3578 = vpow.pop %v3577
  %v3579 = vmul.f32 %v3548, 1.442695
  %v3580 = vpow.pop %v3579
  %v3581 = vsel %vm2966, %v3502, 0.0
  %3582 = vadd.xlane.f32.xlu0 %v3581
  %v3583 = vpop.xlane.xlu0 %3582
  %v3584 = vsel %vm2966, %v3504, 0.0
  %3585 = vadd.xlane.f32.xlu0 %v3584
  %v3586 = vpop.xlane.xlu0 %3585
  %v3587 = vsel %vm2966, %v3506, 0.0
  %3588 = vadd.xlane.f32.xlu0 %v3587
  %v3589 = vpop.xlane.xlu0 %3588
  %v3590 = vsel %vm2966, %v3508, 0.0
  %3591 = vadd.xlane.f32.xlu0 %v3590
  %v3592 = vpop.xlane.xlu0 %3591
  %v3593 = vsel %vm2966, %v3510, 0.0
  %3594 = vadd.xlane.f32.xlu0 %v3593
  %v3595 = vpop.xlane.xlu0 %3594
  %v3596 = vsel %vm2966, %v3512, 0.0
  %3597 = vadd.xlane.f32.xlu0 %v3596
  %v3598 = vpop.xlane.xlu0 %3597
  %v3599 = vsel %vm2966, %v3514, 0.0
  %3600 = vadd.xlane.f32.xlu0 %v3599
  %v3601 = vpop.xlane.xlu0 %3600
  %v3602 = vsel %vm2966, %v3516, 0.0
  %3603 = vadd.xlane.f32.xlu0 %v3602
  %v3604 = vpop.xlane.xlu0 %3603
  %v3605 = vsel %vm2966, %v3518, 0.0
  %3606 = vadd.xlane.f32.xlu0 %v3605
  %v3607 = vpop.xlane.xlu0 %3606
  %v3608 = vsel %vm2966, %v3520, 0.0
  %3609 = vadd.xlane.f32.xlu0 %v3608
  %v3610 = vpop.xlane.xlu0 %3609
  %v3611 = vsel %vm2966, %v3522, 0.0
  %3612 = vadd.xlane.f32.xlu0 %v3611
  %v3613 = vpop.xlane.xlu0 %3612
  %v3614 = vsel %vm2966, %v3524, 0.0
  %3615 = vadd.xlane.f32.xlu0 %v3614
  %v3616 = vpop.xlane.xlu0 %3615
  %v3617 = vsel %vm2966, %v3526, 0.0
  %3618 = vadd.xlane.f32.xlu0 %v3617
  %v3619 = vpop.xlane.xlu0 %3618
  %v3620 = vsel %vm2966, %v3528, 0.0
  %3621 = vadd.xlane.f32.xlu0 %v3620
  %v3622 = vpop.xlane.xlu0 %3621
  %v3623 = vsel %vm2966, %v3530, 0.0
  %3624 = vadd.xlane.f32.xlu0 %v3623
  %v3625 = vpop.xlane.xlu0 %3624
  %v3626 = vsel %vm2966, %v3532, 0.0
  %3627 = vadd.xlane.f32.xlu0 %v3626
  %v3628 = vpop.xlane.xlu0 %3627
  %v3629 = vsel %vm2966, %v3550, 0.0
  %3630 = vadd.xlane.f32.xlu0 %v3629
  %v3631 = vpop.xlane.xlu0 %3630
  %v3632 = vsel %vm2966, %v3552, 0.0
  %3633 = vadd.xlane.f32.xlu0 %v3632
  %v3634 = vpop.xlane.xlu0 %3633
  %v3635 = vsel %vm2966, %v3554, 0.0
  %3636 = vadd.xlane.f32.xlu0 %v3635
  %v3637 = vpop.xlane.xlu0 %3636
  %v3638 = vsel %vm2966, %v3556, 0.0
  %3639 = vadd.xlane.f32.xlu0 %v3638
  %v3640 = vpop.xlane.xlu0 %3639
  %v3641 = vsel %vm2966, %v3558, 0.0
  %3642 = vadd.xlane.f32.xlu0 %v3641
  %v3643 = vpop.xlane.xlu0 %3642
  %v3644 = vsel %vm2966, %v3560, 0.0
  %3645 = vadd.xlane.f32.xlu0 %v3644
  %v3646 = vpop.xlane.xlu0 %3645
  %v3647 = vsel %vm2966, %v3562, 0.0
  %3648 = vadd.xlane.f32.xlu0 %v3647
  %v3649 = vpop.xlane.xlu0 %3648
  %v3650 = vsel %vm2966, %v3564, 0.0
  %3651 = vadd.xlane.f32.xlu0 %v3650
  %v3652 = vpop.xlane.xlu0 %3651
  %v3653 = vsel %vm2966, %v3566, 0.0
  %3654 = vadd.xlane.f32.xlu0 %v3653
  %v3655 = vpop.xlane.xlu0 %3654
  %v3656 = vsel %vm2966, %v3568, 0.0
  %3657 = vadd.xlane.f32.xlu0 %v3656
  %v3658 = vpop.xlane.xlu0 %3657
  %v3659 = vsel %vm2966, %v3570, 0.0
  %3660 = vadd.xlane.f32.xlu0 %v3659
  %v3661 = vpop.xlane.xlu0 %3660
  %v3662 = vsel %vm2966, %v3572, 0.0
  %3663 = vadd.xlane.f32.xlu0 %v3662
  %v3664 = vpop.xlane.xlu0 %3663
  %v3665 = vsel %vm2966, %v3574, 0.0
  %3666 = vadd.xlane.f32.xlu0 %v3665
  %v3667 = vpop.xlane.xlu0 %3666
  %v3668 = vsel %vm2966, %v3576, 0.0
  %3669 = vadd.xlane.f32.xlu0 %v3668
  %v3670 = vpop.xlane.xlu0 %3669
  %v3671 = vsel %vm2966, %v3578, 0.0
  %3672 = vadd.xlane.f32.xlu0 %v3671
  %v3673 = vpop.xlane.xlu0 %3672
  %v3674 = vsel %vm2966, %v3580, 0.0
  %3675 = vadd.xlane.f32.xlu0 %v3674
  %v3676 = vpop.xlane.xlu0 %3675
  %v3677 = vadd.f32 %v3583, %v3631
  %v3678 = vadd.f32 %v3586, %v3634
  %v3679 = vadd.f32 %v3589, %v3637
  %v3680 = vadd.f32 %v3592, %v3640
  %v3681 = vadd.f32 %v3595, %v3643
  %v3682 = vadd.f32 %v3598, %v3646
  %v3683 = vadd.f32 %v3601, %v3649
  %v3684 = vadd.f32 %v3604, %v3652
  %v3685 = vadd.f32 %v3607, %v3655
  %v3686 = vadd.f32 %v3610, %v3658
  %v3687 = vadd.f32 %v3613, %v3661
  %v3688 = vadd.f32 %v3616, %v3664
  %v3689 = vadd.f32 %v3619, %v3667
  %v3690 = vadd.f32 %v3622, %v3670
  %v3691 = vadd.f32 %v3625, %v3673
  %v3692 = vadd.f32 %v3628, %v3676
  %v3693 = vpack.c.bf16 %v3502, %v3502
  %v3694 = vpack.c.bf16 %v3504, %v3504
  %v3695 = vpack.c.bf16 %v3506, %v3506
  %v3696 = vpack.c.bf16 %v3508, %v3508
  %v3697 = vpack.c.bf16 %v3510, %v3510
  %v3698 = vpack.c.bf16 %v3512, %v3512
  %v3699 = vpack.c.bf16 %v3514, %v3514
  %v3700 = vpack.c.bf16 %v3516, %v3516
  %v3701 = vpack.c.bf16 %v3518, %v3518
  %v3702 = vpack.c.bf16 %v3520, %v3520
  %v3703 = vpack.c.bf16 %v3522, %v3522
  %v3704 = vpack.c.bf16 %v3524, %v3524
  %v3705 = vpack.c.bf16 %v3526, %v3526
  %v3706 = vpack.c.bf16 %v3528, %v3528
  %v3707 = vpack.c.bf16 %v3530, %v3530
  %v3708 = vpack.c.bf16 %v3532, %v3532
  %v3709 = vpack.c.bf16 %v3550, %v3550
  %v3710 = vpack.c.bf16 %v3552, %v3552
  %v3711 = vpack.c.bf16 %v3554, %v3554
  %v3712 = vpack.c.bf16 %v3556, %v3556
  %v3713 = vpack.c.bf16 %v3558, %v3558
  %v3714 = vpack.c.bf16 %v3560, %v3560
  %v3715 = vpack.c.bf16 %v3562, %v3562
  %v3716 = vpack.c.bf16 %v3564, %v3564
  %v3717 = vpack.c.bf16 %v3566, %v3566
  %v3718 = vpack.c.bf16 %v3568, %v3568
  %v3719 = vpack.c.bf16 %v3570, %v3570
  %v3720 = vpack.c.bf16 %v3572, %v3572
  %v3721 = vpack.c.bf16 %v3574, %v3574
  %v3722 = vpack.c.bf16 %v3576, %v3576
  %v3723 = vpack.c.bf16 %v3578, %v3578
  %v3724 = vpack.c.bf16 %v3580, %v3580
  %v3727 = vunpack.c.l.b16 %v3709
  %v3728 = vunpack.c.l.b16 %v3710
  %v3729 = vpack.c.b16 %v3728, %v3727
  %v3732 = vunpack.c.l.b16 %v2940
  %v3733 = vunpack.c.l.b16 %v2941
  %v3734 = vpack.c.b16 %v3733, %v3732
  %v3737 = vsel %vm2966, %v3729, 0
  %3739 = vmatpush.bf16.msra.mxu0 0
  %3740 = vmatpush.bf16.msra.mxu0 0
  %3741 = vmatpush.bf16.msra.mxu0 0
  %3742 = vmatpush.bf16.msra.mxu0 0
  %3743 = vmatpush.bf16.msra.mxu0 0
  %3744 = vmatpush.bf16.msra.mxu0 0
  %3745 = vmatpush.bf16.msra.mxu0 0
  %3746 = vmatpush.bf16.msra.mxu0 %v3734
  %3747 = vmatmul.bf16.gmra.mxu0 %v3737
  %v3748 = vpop.f32.mrf.mxu0
  %v3749 = vadd.f32 0.0, %v3748
  %v3750 = vpop.f32.mrf.mxu0
  %v3751 = vadd.f32 0.0, %v3750
  %3752 = vdwg.mxu0
  %v3755 = vunpack.c.l.b16 %v3711
  %v3756 = vunpack.c.l.b16 %v3712
  %v3757 = vpack.c.b16 %v3756, %v3755
  %v3760 = vunpack.c.l.b16 %v2942
  %v3761 = vunpack.c.l.b16 %v2943
  %v3762 = vpack.c.b16 %v3761, %v3760
  %v3765 = vsel %vm2966, %v3757, 0
  %3767 = vmatpush.bf16.msra.mxu0 0
  %3768 = vmatpush.bf16.msra.mxu0 0
  %3769 = vmatpush.bf16.msra.mxu0 0
  %3770 = vmatpush.bf16.msra.mxu0 0
  %3771 = vmatpush.bf16.msra.mxu0 0
  %3772 = vmatpush.bf16.msra.mxu0 0
  %3773 = vmatpush.bf16.msra.mxu0 0
  %3774 = vmatpush.bf16.msra.mxu0 %v3762
  %3775 = vmatmul.bf16.gmra.mxu0 %v3765
  %v3776 = vpop.f32.mrf.mxu0
  %v3777 = vadd.f32 0.0, %v3776
  %v3778 = vpop.f32.mrf.mxu0
  %v3779 = vadd.f32 0.0, %v3778
  %3780 = vdwg.mxu0
  %v3783 = vunpack.c.l.b16 %v3713
  %v3784 = vunpack.c.l.b16 %v3714
  %v3785 = vpack.c.b16 %v3784, %v3783
  %v3788 = vunpack.c.l.b16 %v2944
  %v3789 = vunpack.c.l.b16 %v2945
  %v3790 = vpack.c.b16 %v3789, %v3788
  %v3793 = vsel %vm2966, %v3785, 0
  %3795 = vmatpush.bf16.msra.mxu0 0
  %3796 = vmatpush.bf16.msra.mxu0 0
  %3797 = vmatpush.bf16.msra.mxu0 0
  %3798 = vmatpush.bf16.msra.mxu0 0
  %3799 = vmatpush.bf16.msra.mxu0 0
  %3800 = vmatpush.bf16.msra.mxu0 0
  %3801 = vmatpush.bf16.msra.mxu0 0
  %3802 = vmatpush.bf16.msra.mxu0 %v3790
  %3803 = vmatmul.bf16.gmra.mxu0 %v3793
  %v3804 = vpop.f32.mrf.mxu0
  %v3805 = vadd.f32 0.0, %v3804
  %v3806 = vpop.f32.mrf.mxu0
  %v3807 = vadd.f32 0.0, %v3806
  %3808 = vdwg.mxu0
  %v3811 = vunpack.c.l.b16 %v3715
  %v3812 = vunpack.c.l.b16 %v3716
  %v3813 = vpack.c.b16 %v3812, %v3811
  %v3816 = vunpack.c.l.b16 %v2946
  %v3817 = vunpack.c.l.b16 %v2947
  %v3818 = vpack.c.b16 %v3817, %v3816
  %v3821 = vsel %vm2966, %v3813, 0
  %3823 = vmatpush.bf16.msra.mxu0 0
  %3824 = vmatpush.bf16.msra.mxu0 0
  %3825 = vmatpush.bf16.msra.mxu0 0
  %3826 = vmatpush.bf16.msra.mxu0 0
  %3827 = vmatpush.bf16.msra.mxu0 0
  %3828 = vmatpush.bf16.msra.mxu0 0
  %3829 = vmatpush.bf16.msra.mxu0 0
  %3830 = vmatpush.bf16.msra.mxu0 %v3818
  %3831 = vmatmul.bf16.gmra.mxu0 %v3821
  %v3832 = vpop.f32.mrf.mxu0
  %v3833 = vadd.f32 0.0, %v3832
  %v3834 = vpop.f32.mrf.mxu0
  %v3835 = vadd.f32 0.0, %v3834
  %3836 = vdwg.mxu0
  %v3839 = vunpack.c.l.b16 %v3717
  %v3840 = vunpack.c.l.b16 %v3718
  %v3841 = vpack.c.b16 %v3840, %v3839
  %v3844 = vunpack.c.l.b16 %v2948
  %v3845 = vunpack.c.l.b16 %v2949
  %v3846 = vpack.c.b16 %v3845, %v3844
  %v3849 = vsel %vm2966, %v3841, 0
  %3851 = vmatpush.bf16.msra.mxu0 0
  %3852 = vmatpush.bf16.msra.mxu0 0
  %3853 = vmatpush.bf16.msra.mxu0 0
  %3854 = vmatpush.bf16.msra.mxu0 0
  %3855 = vmatpush.bf16.msra.mxu0 0
  %3856 = vmatpush.bf16.msra.mxu0 0
  %3857 = vmatpush.bf16.msra.mxu0 0
  %3858 = vmatpush.bf16.msra.mxu0 %v3846
  %3859 = vmatmul.bf16.gmra.mxu0 %v3849
  %v3860 = vpop.f32.mrf.mxu0
  %v3861 = vadd.f32 0.0, %v3860
  %v3862 = vpop.f32.mrf.mxu0
  %v3863 = vadd.f32 0.0, %v3862
  %3864 = vdwg.mxu0
  %v3867 = vunpack.c.l.b16 %v3719
  %v3868 = vunpack.c.l.b16 %v3720
  %v3869 = vpack.c.b16 %v3868, %v3867
  %v3872 = vunpack.c.l.b16 %v2950
  %v3873 = vunpack.c.l.b16 %v2951
  %v3874 = vpack.c.b16 %v3873, %v3872
  %v3877 = vsel %vm2966, %v3869, 0
  %3879 = vmatpush.bf16.msra.mxu0 0
  %3880 = vmatpush.bf16.msra.mxu0 0
  %3881 = vmatpush.bf16.msra.mxu0 0
  %3882 = vmatpush.bf16.msra.mxu0 0
  %3883 = vmatpush.bf16.msra.mxu0 0
  %3884 = vmatpush.bf16.msra.mxu0 0
  %3885 = vmatpush.bf16.msra.mxu0 0
  %3886 = vmatpush.bf16.msra.mxu0 %v3874
  %3887 = vmatmul.bf16.gmra.mxu0 %v3877
  %v3888 = vpop.f32.mrf.mxu0
  %v3889 = vadd.f32 0.0, %v3888
  %v3890 = vpop.f32.mrf.mxu0
  %v3891 = vadd.f32 0.0, %v3890
  %3892 = vdwg.mxu0
  %v3895 = vunpack.c.l.b16 %v3721
  %v3896 = vunpack.c.l.b16 %v3722
  %v3897 = vpack.c.b16 %v3896, %v3895
  %v3900 = vunpack.c.l.b16 %v2952
  %v3901 = vunpack.c.l.b16 %v2953
  %v3902 = vpack.c.b16 %v3901, %v3900
  %v3905 = vsel %vm2966, %v3897, 0
  %3907 = vmatpush.bf16.msra.mxu0 0
  %3908 = vmatpush.bf16.msra.mxu0 0
  %3909 = vmatpush.bf16.msra.mxu0 0
  %3910 = vmatpush.bf16.msra.mxu0 0
  %3911 = vmatpush.bf16.msra.mxu0 0
  %3912 = vmatpush.bf16.msra.mxu0 0
  %3913 = vmatpush.bf16.msra.mxu0 0
  %3914 = vmatpush.bf16.msra.mxu0 %v3902
  %3915 = vmatmul.bf16.gmra.mxu0 %v3905
  %v3916 = vpop.f32.mrf.mxu0
  %v3917 = vadd.f32 0.0, %v3916
  %v3918 = vpop.f32.mrf.mxu0
  %v3919 = vadd.f32 0.0, %v3918
  %3920 = vdwg.mxu0
  %v3923 = vunpack.c.l.b16 %v3723
  %v3924 = vunpack.c.l.b16 %v3724
  %v3925 = vpack.c.b16 %v3924, %v3923
  %v3928 = vunpack.c.l.b16 %v2954
  %v3929 = vunpack.c.l.b16 %v2955
  %v3930 = vpack.c.b16 %v3929, %v3928
  %v3933 = vsel %vm2966, %v3925, 0
  %3935 = vmatpush.bf16.msra.mxu0 0
  %3936 = vmatpush.bf16.msra.mxu0 0
  %3937 = vmatpush.bf16.msra.mxu0 0
  %3938 = vmatpush.bf16.msra.mxu0 0
  %3939 = vmatpush.bf16.msra.mxu0 0
  %3940 = vmatpush.bf16.msra.mxu0 0
  %3941 = vmatpush.bf16.msra.mxu0 0
  %3942 = vmatpush.bf16.msra.mxu0 %v3930
  %3943 = vmatmul.bf16.gmra.mxu0 %v3933
  %v3944 = vpop.f32.mrf.mxu0
  %v3945 = vadd.f32 0.0, %v3944
  %v3946 = vpop.f32.mrf.mxu0
  %v3947 = vadd.f32 0.0, %v3946
  %3948 = vdwg.mxu0
  %v3951 = vunpack.c.l.b16 %v3693
  %v3952 = vunpack.c.l.b16 %v3694
  %v3953 = vpack.c.b16 %v3952, %v3951
  %v3956 = vunpack.c.l.b16 %v2924
  %v3957 = vunpack.c.l.b16 %v2925
  %v3958 = vpack.c.b16 %v3957, %v3956
  %v3961 = vsel %vm2966, %v3953, 0
  %3963 = vmatpush.bf16.msra.mxu0 0
  %3964 = vmatpush.bf16.msra.mxu0 0
  %3965 = vmatpush.bf16.msra.mxu0 0
  %3966 = vmatpush.bf16.msra.mxu0 0
  %3967 = vmatpush.bf16.msra.mxu0 0
  %3968 = vmatpush.bf16.msra.mxu0 0
  %3969 = vmatpush.bf16.msra.mxu0 0
  %3970 = vmatpush.bf16.msra.mxu0 %v3958
  %3971 = vmatmul.bf16.gmra.mxu0 %v3961
  %v3972 = vpop.f32.mrf.mxu0
  %v3973 = vadd.f32 %v3749, %v3972
  %v3974 = vpop.f32.mrf.mxu0
  %v3975 = vadd.f32 %v3751, %v3974
  %3976 = vdwg.mxu0
  %v3979 = vunpack.c.l.b16 %v3695
  %v3980 = vunpack.c.l.b16 %v3696
  %v3981 = vpack.c.b16 %v3980, %v3979
  %v3984 = vunpack.c.l.b16 %v2926
  %v3985 = vunpack.c.l.b16 %v2927
  %v3986 = vpack.c.b16 %v3985, %v3984
  %v3989 = vsel %vm2966, %v3981, 0
  %3991 = vmatpush.bf16.msra.mxu0 0
  %3992 = vmatpush.bf16.msra.mxu0 0
  %3993 = vmatpush.bf16.msra.mxu0 0
  %3994 = vmatpush.bf16.msra.mxu0 0
  %3995 = vmatpush.bf16.msra.mxu0 0
  %3996 = vmatpush.bf16.msra.mxu0 0
  %3997 = vmatpush.bf16.msra.mxu0 0
  %3998 = vmatpush.bf16.msra.mxu0 %v3986
  %3999 = vmatmul.bf16.gmra.mxu0 %v3989
  %v4000 = vpop.f32.mrf.mxu0
  %v4001 = vadd.f32 %v3777, %v4000
  %v4002 = vpop.f32.mrf.mxu0
  %v4003 = vadd.f32 %v3779, %v4002
  %4004 = vdwg.mxu0
  %v4007 = vunpack.c.l.b16 %v3697
  %v4008 = vunpack.c.l.b16 %v3698
  %v4009 = vpack.c.b16 %v4008, %v4007
  %v4012 = vunpack.c.l.b16 %v2928
  %v4013 = vunpack.c.l.b16 %v2929
  %v4014 = vpack.c.b16 %v4013, %v4012
  %v4017 = vsel %vm2966, %v4009, 0
  %4019 = vmatpush.bf16.msra.mxu0 0
  %4020 = vmatpush.bf16.msra.mxu0 0
  %4021 = vmatpush.bf16.msra.mxu0 0
  %4022 = vmatpush.bf16.msra.mxu0 0
  %4023 = vmatpush.bf16.msra.mxu0 0
  %4024 = vmatpush.bf16.msra.mxu0 0
  %4025 = vmatpush.bf16.msra.mxu0 0
  %4026 = vmatpush.bf16.msra.mxu0 %v4014
  %4027 = vmatmul.bf16.gmra.mxu0 %v4017
  %v4028 = vpop.f32.mrf.mxu0
  %v4029 = vadd.f32 %v3805, %v4028
  %v4030 = vpop.f32.mrf.mxu0
  %v4031 = vadd.f32 %v3807, %v4030
  %4032 = vdwg.mxu0
  %v4035 = vunpack.c.l.b16 %v3699
  %v4036 = vunpack.c.l.b16 %v3700
  %v4037 = vpack.c.b16 %v4036, %v4035
  %v4040 = vunpack.c.l.b16 %v2930
  %v4041 = vunpack.c.l.b16 %v2931
  %v4042 = vpack.c.b16 %v4041, %v4040
  %v4045 = vsel %vm2966, %v4037, 0
  %4047 = vmatpush.bf16.msra.mxu0 0
  %4048 = vmatpush.bf16.msra.mxu0 0
  %4049 = vmatpush.bf16.msra.mxu0 0
  %4050 = vmatpush.bf16.msra.mxu0 0
  %4051 = vmatpush.bf16.msra.mxu0 0
  %4052 = vmatpush.bf16.msra.mxu0 0
  %4053 = vmatpush.bf16.msra.mxu0 0
  %4054 = vmatpush.bf16.msra.mxu0 %v4042
  %4055 = vmatmul.bf16.gmra.mxu0 %v4045
  %v4056 = vpop.f32.mrf.mxu0
  %v4057 = vadd.f32 %v3833, %v4056
  %v4058 = vpop.f32.mrf.mxu0
  %v4059 = vadd.f32 %v3835, %v4058
  %4060 = vdwg.mxu0
  %v4063 = vunpack.c.l.b16 %v3701
  %v4064 = vunpack.c.l.b16 %v3702
  %v4065 = vpack.c.b16 %v4064, %v4063
  %v4068 = vunpack.c.l.b16 %v2932
  %v4069 = vunpack.c.l.b16 %v2933
  %v4070 = vpack.c.b16 %v4069, %v4068
  %v4073 = vsel %vm2966, %v4065, 0
  %4075 = vmatpush.bf16.msra.mxu0 0
  %4076 = vmatpush.bf16.msra.mxu0 0
  %4077 = vmatpush.bf16.msra.mxu0 0
  %4078 = vmatpush.bf16.msra.mxu0 0
  %4079 = vmatpush.bf16.msra.mxu0 0
  %4080 = vmatpush.bf16.msra.mxu0 0
  %4081 = vmatpush.bf16.msra.mxu0 0
  %4082 = vmatpush.bf16.msra.mxu0 %v4070
  %4083 = vmatmul.bf16.gmra.mxu0 %v4073
  %v4084 = vpop.f32.mrf.mxu0
  %v4085 = vadd.f32 %v3861, %v4084
  %v4086 = vpop.f32.mrf.mxu0
  %v4087 = vadd.f32 %v3863, %v4086
  %4088 = vdwg.mxu0
  %v4091 = vunpack.c.l.b16 %v3703
  %v4092 = vunpack.c.l.b16 %v3704
  %v4093 = vpack.c.b16 %v4092, %v4091
  %v4096 = vunpack.c.l.b16 %v2934
  %v4097 = vunpack.c.l.b16 %v2935
  %v4098 = vpack.c.b16 %v4097, %v4096
  %v4101 = vsel %vm2966, %v4093, 0
  %4103 = vmatpush.bf16.msra.mxu0 0
  %4104 = vmatpush.bf16.msra.mxu0 0
  %4105 = vmatpush.bf16.msra.mxu0 0
  %4106 = vmatpush.bf16.msra.mxu0 0
  %4107 = vmatpush.bf16.msra.mxu0 0
  %4108 = vmatpush.bf16.msra.mxu0 0
  %4109 = vmatpush.bf16.msra.mxu0 0
  %4110 = vmatpush.bf16.msra.mxu0 %v4098
  %4111 = vmatmul.bf16.gmra.mxu0 %v4101
  %v4112 = vpop.f32.mrf.mxu0
  %v4113 = vadd.f32 %v3889, %v4112
  %v4114 = vpop.f32.mrf.mxu0
  %v4115 = vadd.f32 %v3891, %v4114
  %4116 = vdwg.mxu0
  %v4119 = vunpack.c.l.b16 %v3705
  %v4120 = vunpack.c.l.b16 %v3706
  %v4121 = vpack.c.b16 %v4120, %v4119
  %v4124 = vunpack.c.l.b16 %v2936
  %v4125 = vunpack.c.l.b16 %v2937
  %v4126 = vpack.c.b16 %v4125, %v4124
  %v4129 = vsel %vm2966, %v4121, 0
  %4131 = vmatpush.bf16.msra.mxu0 0
  %4132 = vmatpush.bf16.msra.mxu0 0
  %4133 = vmatpush.bf16.msra.mxu0 0
  %4134 = vmatpush.bf16.msra.mxu0 0
  %4135 = vmatpush.bf16.msra.mxu0 0
  %4136 = vmatpush.bf16.msra.mxu0 0
  %4137 = vmatpush.bf16.msra.mxu0 0
  %4138 = vmatpush.bf16.msra.mxu0 %v4126
  %4139 = vmatmul.bf16.gmra.mxu0 %v4129
  %v4140 = vpop.f32.mrf.mxu0
  %v4141 = vadd.f32 %v3917, %v4140
  %v4142 = vpop.f32.mrf.mxu0
  %v4143 = vadd.f32 %v3919, %v4142
  %4144 = vdwg.mxu0
  %v4147 = vunpack.c.l.b16 %v3707
  %v4148 = vunpack.c.l.b16 %v3708
  %v4149 = vpack.c.b16 %v4148, %v4147
  %v4152 = vunpack.c.l.b16 %v2938
  %v4153 = vunpack.c.l.b16 %v2939
  %v4154 = vpack.c.b16 %v4153, %v4152
  %v4157 = vsel %vm2966, %v4149, 0
  %4159 = vmatpush.bf16.msra.mxu0 0
  %4160 = vmatpush.bf16.msra.mxu0 0
  %4161 = vmatpush.bf16.msra.mxu0 0
  %4162 = vmatpush.bf16.msra.mxu0 0
  %4163 = vmatpush.bf16.msra.mxu0 0
  %4164 = vmatpush.bf16.msra.mxu0 0
  %4165 = vmatpush.bf16.msra.mxu0 0
  %4166 = vmatpush.bf16.msra.mxu0 %v4154
  %4167 = vmatmul.bf16.gmra.mxu0 %v4157
  %v4168 = vpop.f32.mrf.mxu0
  %v4169 = vadd.f32 %v3945, %v4168
  %v4170 = vpop.f32.mrf.mxu0
  %v4171 = vadd.f32 %v3947, %v4170
  %4172 = vdwg.mxu0
  %v4173 = vrcp.pop %v3677
  %v4174 = vmul.f32 %v3677, %v4173
  %v4175 = vsub.f32 1.0, %v4174
  %v4176 = vmul.f32 %v4173, %v4175
  %v4177 = vadd.f32 %v4173, %v4176
  %vm4178 = vweird.f32 %v3677
  %vm4179 = vweird.f32 %v4173
  %vm4180 = vmor %vm4178, %vm4179
  %v4181 = vsel %vm4180, %v4173, %v4177
  %v4182 = vand.u32 2147483647, %v3677
  %vm4183 = vcmp.eq.f32.partialorder %v4182, 8.507059e+37
  %v4184 = vand.u32 %v3677, 2147483648
  %v4185 = vor.u32 1.1754944e-38, %v4184
  %v4186 = vsel %vm4183, %v4185, %v4181
  %v4187 = vmul.f32 %v3973, %v4186
  %v4188 = vrcp.pop %v3678
  %v4189 = vmul.f32 %v3678, %v4188
  %v4190 = vsub.f32 1.0, %v4189
  %v4191 = vmul.f32 %v4188, %v4190
  %v4192 = vadd.f32 %v4188, %v4191
  %vm4193 = vweird.f32 %v3678
  %vm4194 = vweird.f32 %v4188
  %vm4195 = vmor %vm4193, %vm4194
  %v4196 = vsel %vm4195, %v4188, %v4192
  %v4197 = vand.u32 2147483647, %v3678
  %vm4198 = vcmp.eq.f32.partialorder %v4197, 8.507059e+37
  %v4199 = vand.u32 %v3678, 2147483648
  %v4200 = vor.u32 1.1754944e-38, %v4199
  %v4201 = vsel %vm4198, %v4200, %v4196
  %v4202 = vmul.f32 %v3975, %v4201
  %v4203 = vrcp.pop %v3679
  %v4204 = vmul.f32 %v3679, %v4203
  %v4205 = vsub.f32 1.0, %v4204
  %v4206 = vmul.f32 %v4203, %v4205
  %v4207 = vadd.f32 %v4203, %v4206
  %vm4208 = vweird.f32 %v3679
  %vm4209 = vweird.f32 %v4203
  %vm4210 = vmor %vm4208, %vm4209
  %v4211 = vsel %vm4210, %v4203, %v4207
  %v4212 = vand.u32 2147483647, %v3679
  %vm4213 = vcmp.eq.f32.partialorder %v4212, 8.507059e+37
  %v4214 = vand.u32 %v3679, 2147483648
  %v4215 = vor.u32 1.1754944e-38, %v4214
  %v4216 = vsel %vm4213, %v4215, %v4211
  %v4217 = vmul.f32 %v4001, %v4216
  %v4218 = vrcp.pop %v3680
  %v4219 = vmul.f32 %v3680, %v4218
  %v4220 = vsub.f32 1.0, %v4219
  %v4221 = vmul.f32 %v4218, %v4220
  %v4222 = vadd.f32 %v4218, %v4221
  %vm4223 = vweird.f32 %v3680
  %vm4224 = vweird.f32 %v4218
  %vm4225 = vmor %vm4223, %vm4224
  %v4226 = vsel %vm4225, %v4218, %v4222
  %v4227 = vand.u32 2147483647, %v3680
  %vm4228 = vcmp.eq.f32.partialorder %v4227, 8.507059e+37
  %v4229 = vand.u32 %v3680, 2147483648
  %v4230 = vor.u32 1.1754944e-38, %v4229
  %v4231 = vsel %vm4228, %v4230, %v4226
  %v4232 = vmul.f32 %v4003, %v4231
  %v4233 = vrcp.pop %v3681
  %v4234 = vmul.f32 %v3681, %v4233
  %v4235 = vsub.f32 1.0, %v4234
  %v4236 = vmul.f32 %v4233, %v4235
  %v4237 = vadd.f32 %v4233, %v4236
  %vm4238 = vweird.f32 %v3681
  %vm4239 = vweird.f32 %v4233
  %vm4240 = vmor %vm4238, %vm4239
  %v4241 = vsel %vm4240, %v4233, %v4237
  %v4242 = vand.u32 2147483647, %v3681
  %vm4243 = vcmp.eq.f32.partialorder %v4242, 8.507059e+37
  %v4244 = vand.u32 %v3681, 2147483648
  %v4245 = vor.u32 1.1754944e-38, %v4244
  %v4246 = vsel %vm4243, %v4245, %v4241
  %v4247 = vmul.f32 %v4029, %v4246
  %v4248 = vrcp.pop %v3682
  %v4249 = vmul.f32 %v3682, %v4248
  %v4250 = vsub.f32 1.0, %v4249
  %v4251 = vmul.f32 %v4248, %v4250
  %v4252 = vadd.f32 %v4248, %v4251
  %vm4253 = vweird.f32 %v3682
  %vm4254 = vweird.f32 %v4248
  %vm4255 = vmor %vm4253, %vm4254
  %v4256 = vsel %vm4255, %v4248, %v4252
  %v4257 = vand.u32 2147483647, %v3682
  %vm4258 = vcmp.eq.f32.partialorder %v4257, 8.507059e+37
  %v4259 = vand.u32 %v3682, 2147483648
  %v4260 = vor.u32 1.1754944e-38, %v4259
  %v4261 = vsel %vm4258, %v4260, %v4256
  %v4262 = vmul.f32 %v4031, %v4261
  %v4263 = vrcp.pop %v3683
  %v4264 = vmul.f32 %v3683, %v4263
  %v4265 = vsub.f32 1.0, %v4264
  %v4266 = vmul.f32 %v4263, %v4265
  %v4267 = vadd.f32 %v4263, %v4266
  %vm4268 = vweird.f32 %v3683
  %vm4269 = vweird.f32 %v4263
  %vm4270 = vmor %vm4268, %vm4269
  %v4271 = vsel %vm4270, %v4263, %v4267
  %v4272 = vand.u32 2147483647, %v3683
  %vm4273 = vcmp.eq.f32.partialorder %v4272, 8.507059e+37
  %v4274 = vand.u32 %v3683, 2147483648
  %v4275 = vor.u32 1.1754944e-38, %v4274
  %v4276 = vsel %vm4273, %v4275, %v4271
  %v4277 = vmul.f32 %v4057, %v4276
  %v4278 = vrcp.pop %v3684
  %v4279 = vmul.f32 %v3684, %v4278
  %v4280 = vsub.f32 1.0, %v4279
  %v4281 = vmul.f32 %v4278, %v4280
  %v4282 = vadd.f32 %v4278, %v4281
  %vm4283 = vweird.f32 %v3684
  %vm4284 = vweird.f32 %v4278
  %vm4285 = vmor %vm4283, %vm4284
  %v4286 = vsel %vm4285, %v4278, %v4282
  %v4287 = vand.u32 2147483647, %v3684
  %vm4288 = vcmp.eq.f32.partialorder %v4287, 8.507059e+37
  %v4289 = vand.u32 %v3684, 2147483648
  %v4290 = vor.u32 1.1754944e-38, %v4289
  %v4291 = vsel %vm4288, %v4290, %v4286
  %v4292 = vmul.f32 %v4059, %v4291
  %v4293 = vrcp.pop %v3685
  %v4294 = vmul.f32 %v3685, %v4293
  %v4295 = vsub.f32 1.0, %v4294
  %v4296 = vmul.f32 %v4293, %v4295
  %v4297 = vadd.f32 %v4293, %v4296
  %vm4298 = vweird.f32 %v3685
  %vm4299 = vweird.f32 %v4293
  %vm4300 = vmor %vm4298, %vm4299
  %v4301 = vsel %vm4300, %v4293, %v4297
  %v4302 = vand.u32 2147483647, %v3685
  %vm4303 = vcmp.eq.f32.partialorder %v4302, 8.507059e+37
  %v4304 = vand.u32 %v3685, 2147483648
  %v4305 = vor.u32 1.1754944e-38, %v4304
  %v4306 = vsel %vm4303, %v4305, %v4301
  %v4307 = vmul.f32 %v4085, %v4306
  %v4308 = vrcp.pop %v3686
  %v4309 = vmul.f32 %v3686, %v4308
  %v4310 = vsub.f32 1.0, %v4309
  %v4311 = vmul.f32 %v4308, %v4310
  %v4312 = vadd.f32 %v4308, %v4311
  %vm4313 = vweird.f32 %v3686
  %vm4314 = vweird.f32 %v4308
  %vm4315 = vmor %vm4313, %vm4314
  %v4316 = vsel %vm4315, %v4308, %v4312
  %v4317 = vand.u32 2147483647, %v3686
  %vm4318 = vcmp.eq.f32.partialorder %v4317, 8.507059e+37
  %v4319 = vand.u32 %v3686, 2147483648
  %v4320 = vor.u32 1.1754944e-38, %v4319
  %v4321 = vsel %vm4318, %v4320, %v4316
  %v4322 = vmul.f32 %v4087, %v4321
  %v4323 = vrcp.pop %v3687
  %v4324 = vmul.f32 %v3687, %v4323
  %v4325 = vsub.f32 1.0, %v4324
  %v4326 = vmul.f32 %v4323, %v4325
  %v4327 = vadd.f32 %v4323, %v4326
  %vm4328 = vweird.f32 %v3687
  %vm4329 = vweird.f32 %v4323
  %vm4330 = vmor %vm4328, %vm4329
  %v4331 = vsel %vm4330, %v4323, %v4327
  %v4332 = vand.u32 2147483647, %v3687
  %vm4333 = vcmp.eq.f32.partialorder %v4332, 8.507059e+37
  %v4334 = vand.u32 %v3687, 2147483648
  %v4335 = vor.u32 1.1754944e-38, %v4334
  %v4336 = vsel %vm4333, %v4335, %v4331
  %v4337 = vmul.f32 %v4113, %v4336
  %v4338 = vrcp.pop %v3688
  %v4339 = vmul.f32 %v3688, %v4338
  %v4340 = vsub.f32 1.0, %v4339
  %v4341 = vmul.f32 %v4338, %v4340
  %v4342 = vadd.f32 %v4338, %v4341
  %vm4343 = vweird.f32 %v3688
  %vm4344 = vweird.f32 %v4338
  %vm4345 = vmor %vm4343, %vm4344
  %v4346 = vsel %vm4345, %v4338, %v4342
  %v4347 = vand.u32 2147483647, %v3688
  %vm4348 = vcmp.eq.f32.partialorder %v4347, 8.507059e+37
  %v4349 = vand.u32 %v3688, 2147483648
  %v4350 = vor.u32 1.1754944e-38, %v4349
  %v4351 = vsel %vm4348, %v4350, %v4346
  %v4352 = vmul.f32 %v4115, %v4351
  %v4353 = vrcp.pop %v3689
  %v4354 = vmul.f32 %v3689, %v4353
  %v4355 = vsub.f32 1.0, %v4354
  %v4356 = vmul.f32 %v4353, %v4355
  %v4357 = vadd.f32 %v4353, %v4356
  %vm4358 = vweird.f32 %v3689
  %vm4359 = vweird.f32 %v4353
  %vm4360 = vmor %vm4358, %vm4359
  %v4361 = vsel %vm4360, %v4353, %v4357
  %v4362 = vand.u32 2147483647, %v3689
  %vm4363 = vcmp.eq.f32.partialorder %v4362, 8.507059e+37
  %v4364 = vand.u32 %v3689, 2147483648
  %v4365 = vor.u32 1.1754944e-38, %v4364
  %v4366 = vsel %vm4363, %v4365, %v4361
  %v4367 = vmul.f32 %v4141, %v4366
  %v4368 = vrcp.pop %v3690
  %v4369 = vmul.f32 %v3690, %v4368
  %v4370 = vsub.f32 1.0, %v4369
  %v4371 = vmul.f32 %v4368, %v4370
  %v4372 = vadd.f32 %v4368, %v4371
  %vm4373 = vweird.f32 %v3690
  %vm4374 = vweird.f32 %v4368
  %vm4375 = vmor %vm4373, %vm4374
  %v4376 = vsel %vm4375, %v4368, %v4372
  %v4377 = vand.u32 2147483647, %v3690
  %vm4378 = vcmp.eq.f32.partialorder %v4377, 8.507059e+37
  %v4379 = vand.u32 %v3690, 2147483648
  %v4380 = vor.u32 1.1754944e-38, %v4379
  %v4381 = vsel %vm4378, %v4380, %v4376
  %v4382 = vmul.f32 %v4143, %v4381
  %v4383 = vrcp.pop %v3691
  %v4384 = vmul.f32 %v3691, %v4383
  %v4385 = vsub.f32 1.0, %v4384
  %v4386 = vmul.f32 %v4383, %v4385
  %v4387 = vadd.f32 %v4383, %v4386
  %vm4388 = vweird.f32 %v3691
  %vm4389 = vweird.f32 %v4383
  %vm4390 = vmor %vm4388, %vm4389
  %v4391 = vsel %vm4390, %v4383, %v4387
  %v4392 = vand.u32 2147483647, %v3691
  %vm4393 = vcmp.eq.f32.partialorder %v4392, 8.507059e+37
  %v4394 = vand.u32 %v3691, 2147483648
  %v4395 = vor.u32 1.1754944e-38, %v4394
  %v4396 = vsel %vm4393, %v4395, %v4391
  %v4397 = vmul.f32 %v4169, %v4396
  %v4398 = vrcp.pop %v3692
  %v4399 = vmul.f32 %v3692, %v4398
  %v4400 = vsub.f32 1.0, %v4399
  %v4401 = vmul.f32 %v4398, %v4400
  %v4402 = vadd.f32 %v4398, %v4401
  %vm4403 = vweird.f32 %v3692
  %vm4404 = vweird.f32 %v4398
  %vm4405 = vmor %vm4403, %vm4404
  %v4406 = vsel %vm4405, %v4398, %v4402
  %v4407 = vand.u32 2147483647, %v3692
  %vm4408 = vcmp.eq.f32.partialorder %v4407, 8.507059e+37
  %v4409 = vand.u32 %v3692, 2147483648
  %v4410 = vor.u32 1.1754944e-38, %v4409
  %v4411 = vsel %vm4408, %v4410, %v4406
  %v4412 = vmul.f32 %v4171, %v4411
  %v4413 = vrot.slane %v4247, 4
  %v4414 = vsel %vm516, %v4413, %v4187
  %v4415 = vrot.slane %v4187, 4
  %v4416 = vsel %vm516, %v4247, %v4415
  %v4418 = vunpack.c.l.s4 1983009808
  %v4419 = vunpack.c.0.s8 %v4418
  %v4420 = vperm.slane %v4414, %v4419
  %v4422 = vunpack.c.l.s4 1983009808
  %v4423 = vunpack.c.0.s8 %v4422
  %v4424 = vperm.slane %v4416, %v4423
  %v4425 = vrot.slane %v4277, 4
  %v4426 = vsel %vm516, %v4425, %v4217
  %v4427 = vrot.slane %v4217, 4
  %v4428 = vsel %vm516, %v4277, %v4427
  %v4430 = vunpack.c.l.s4 1983009808
  %v4431 = vunpack.c.0.s8 %v4430
  %v4432 = vperm.slane %v4426, %v4431
  %v4434 = vunpack.c.l.s4 1983009808
  %v4435 = vunpack.c.0.s8 %v4434
  %v4436 = vperm.slane %v4428, %v4435
  %v4437 = vrot.slane %v4432, 4
  %v4438 = vsel %vm516, %v4437, %v4420
  %v4439 = vrot.slane %v4420, 4
  %v4440 = vsel %vm516, %v4432, %v4439
  %v4442 = vunpack.c.l.s4 1934713408
  %v4443 = vunpack.c.0.s8 %v4442
  %v4444 = vperm.slane %v4438, %v4443
  %v4446 = vunpack.c.l.s4 1934713408
  %v4447 = vunpack.c.0.s8 %v4446
  %v4448 = vperm.slane %v4440, %v4447
  %v4449 = vrot.slane %v4436, 4
  %v4450 = vsel %vm516, %v4449, %v4424
  %v4451 = vrot.slane %v4424, 4
  %v4452 = vsel %vm516, %v4436, %v4451
  %v4454 = vunpack.c.l.s4 1934713408
  %v4455 = vunpack.c.0.s8 %v4454
  %v4456 = vperm.slane %v4450, %v4455
  %v4458 = vunpack.c.l.s4 1934713408
  %v4459 = vunpack.c.0.s8 %v4458
  %v4460 = vperm.slane %v4452, %v4459
  %v4461 = vrot.slane %v4444, 4
  %v4462 = vsel %vm516, 0.0, %v4461
  %v4463 = vrot.slane %v4448, 4
  %v4464 = vsel %vm516, 0.0, %v4463
  %v4465 = vrot.slane %v4456, 4
  %v4466 = vsel %vm516, 0.0, %v4465
  %v4467 = vrot.slane %v4460, 4
  %v4468 = vsel %vm516, 0.0, %v4467
  %v4469 = vrot.slane %v4262, 4
  %v4470 = vsel %vm516, %v4469, %v4202
  %v4471 = vrot.slane %v4202, 4
  %v4472 = vsel %vm516, %v4262, %v4471
  %v4474 = vunpack.c.l.s4 1983009808
  %v4475 = vunpack.c.0.s8 %v4474
  %v4476 = vperm.slane %v4470, %v4475
  %v4478 = vunpack.c.l.s4 1983009808
  %v4479 = vunpack.c.0.s8 %v4478
  %v4480 = vperm.slane %v4472, %v4479
  %v4481 = vrot.slane %v4292, 4
  %v4482 = vsel %vm516, %v4481, %v4232
  %v4483 = vrot.slane %v4232, 4
  %v4484 = vsel %vm516, %v4292, %v4483
  %v4486 = vunpack.c.l.s4 1983009808
  %v4487 = vunpack.c.0.s8 %v4486
  %v4488 = vperm.slane %v4482, %v4487
  %v4490 = vunpack.c.l.s4 1983009808
  %v4491 = vunpack.c.0.s8 %v4490
  %v4492 = vperm.slane %v4484, %v4491
  %v4493 = vrot.slane %v4488, 4
  %v4494 = vsel %vm516, %v4493, %v4476
  %v4495 = vrot.slane %v4476, 4
  %v4496 = vsel %vm516, %v4488, %v4495
  %v4498 = vunpack.c.l.s4 1934713408
  %v4499 = vunpack.c.0.s8 %v4498
  %v4500 = vperm.slane %v4494, %v4499
  %v4502 = vunpack.c.l.s4 1934713408
  %v4503 = vunpack.c.0.s8 %v4502
  %v4504 = vperm.slane %v4496, %v4503
  %v4505 = vrot.slane %v4492, 4
  %v4506 = vsel %vm516, %v4505, %v4480
  %v4507 = vrot.slane %v4480, 4
  %v4508 = vsel %vm516, %v4492, %v4507
  %v4510 = vunpack.c.l.s4 1934713408
  %v4511 = vunpack.c.0.s8 %v4510
  %v4512 = vperm.slane %v4506, %v4511
  %v4514 = vunpack.c.l.s4 1934713408
  %v4515 = vunpack.c.0.s8 %v4514
  %v4516 = vperm.slane %v4508, %v4515
  %v4517 = vrot.slane %v4500, 4
  %v4518 = vsel %vm516, 0.0, %v4517
  %v4519 = vrot.slane %v4504, 4
  %v4520 = vsel %vm516, 0.0, %v4519
  %v4521 = vrot.slane %v4512, 4
  %v4522 = vsel %vm516, 0.0, %v4521
  %v4523 = vrot.slane %v4516, 4
  %v4524 = vsel %vm516, 0.0, %v4523
  %v4525 = vrot.slane %v4367, 4
  %v4526 = vsel %vm516, %v4525, %v4307
  %v4527 = vrot.slane %v4307, 4
  %v4528 = vsel %vm516, %v4367, %v4527
  %v4530 = vunpack.c.l.s4 1983009808
  %v4531 = vunpack.c.0.s8 %v4530
  %v4532 = vperm.slane %v4526, %v4531
  %v4534 = vunpack.c.l.s4 1983009808
  %v4535 = vunpack.c.0.s8 %v4534
  %v4536 = vperm.slane %v4528, %v4535
  %v4537 = vrot.slane %v4397, 4
  %v4538 = vsel %vm516, %v4537, %v4337
  %v4539 = vrot.slane %v4337, 4
  %v4540 = vsel %vm516, %v4397, %v4539
  %v4542 = vunpack.c.l.s4 1983009808
  %v4543 = vunpack.c.0.s8 %v4542
  %v4544 = vperm.slane %v4538, %v4543
  %v4546 = vunpack.c.l.s4 1983009808
  %v4547 = vunpack.c.0.s8 %v4546
  %v4548 = vperm.slane %v4540, %v4547
  %v4549 = vrot.slane %v4544, 4
  %v4550 = vsel %vm516, %v4549, %v4532
  %v4551 = vrot.slane %v4532, 4
  %v4552 = vsel %vm516, %v4544, %v4551
  %v4554 = vunpack.c.l.s4 1934713408
  %v4555 = vunpack.c.0.s8 %v4554
  %v4556 = vperm.slane %v4550, %v4555
  %v4558 = vunpack.c.l.s4 1934713408
  %v4559 = vunpack.c.0.s8 %v4558
  %v4560 = vperm.slane %v4552, %v4559
  %v4561 = vrot.slane %v4548, 4
  %v4562 = vsel %vm516, %v4561, %v4536
  %v4563 = vrot.slane %v4536, 4
  %v4564 = vsel %vm516, %v4548, %v4563
  %v4566 = vunpack.c.l.s4 1934713408
  %v4567 = vunpack.c.0.s8 %v4566
  %v4568 = vperm.slane %v4562, %v4567
  %v4570 = vunpack.c.l.s4 1934713408
  %v4571 = vunpack.c.0.s8 %v4570
  %v4572 = vperm.slane %v4564, %v4571
  %v4573 = vrot.slane %v4556, 4
  %v4574 = vsel %vm516, 0.0, %v4573
  %v4575 = vrot.slane %v4560, 4
  %v4576 = vsel %vm516, 0.0, %v4575
  %v4577 = vrot.slane %v4568, 4
  %v4578 = vsel %vm516, 0.0, %v4577
  %v4579 = vrot.slane %v4572, 4
  %v4580 = vsel %vm516, 0.0, %v4579
  %v4581 = vrot.slane %v4382, 4
  %v4582 = vsel %vm516, %v4581, %v4322
  %v4583 = vrot.slane %v4322, 4
  %v4584 = vsel %vm516, %v4382, %v4583
  %v4586 = vunpack.c.l.s4 1983009808
  %v4587 = vunpack.c.0.s8 %v4586
  %v4588 = vperm.slane %v4582, %v4587
  %v4590 = vunpack.c.l.s4 1983009808
  %v4591 = vunpack.c.0.s8 %v4590
  %v4592 = vperm.slane %v4584, %v4591
  %v4593 = vrot.slane %v4412, 4
  %v4594 = vsel %vm516, %v4593, %v4352
  %v4595 = vrot.slane %v4352, 4
  %v4596 = vsel %vm516, %v4412, %v4595
  %v4598 = vunpack.c.l.s4 1983009808
  %v4599 = vunpack.c.0.s8 %v4598
  %v4600 = vperm.slane %v4594, %v4599
  %v4602 = vunpack.c.l.s4 1983009808
  %v4603 = vunpack.c.0.s8 %v4602
  %v4604 = vperm.slane %v4596, %v4603
  %v4605 = vrot.slane %v4600, 4
  %v4606 = vsel %vm516, %v4605, %v4588
  %v4607 = vrot.slane %v4588, 4
  %v4608 = vsel %vm516, %v4600, %v4607
  %v4610 = vunpack.c.l.s4 1934713408
  %v4611 = vunpack.c.0.s8 %v4610
  %v4612 = vperm.slane %v4606, %v4611
  %v4614 = vunpack.c.l.s4 1934713408
  %v4615 = vunpack.c.0.s8 %v4614
  %v4616 = vperm.slane %v4608, %v4615
  %v4617 = vrot.slane %v4604, 4
  %v4618 = vsel %vm516, %v4617, %v4592
  %v4619 = vrot.slane %v4592, 4
  %v4620 = vsel %vm516, %v4604, %v4619
  %v4622 = vunpack.c.l.s4 1934713408
  %v4623 = vunpack.c.0.s8 %v4622
  %v4624 = vperm.slane %v4618, %v4623
  %v4626 = vunpack.c.l.s4 1934713408
  %v4627 = vunpack.c.0.s8 %v4626
  %v4628 = vperm.slane %v4620, %v4627
  %v4629 = vrot.slane %v4612, 4
  %v4630 = vsel %vm516, 0.0, %v4629
  %v4631 = vrot.slane %v4616, 4
  %v4632 = vsel %vm516, 0.0, %v4631
  %v4633 = vrot.slane %v4624, 4
  %v4634 = vsel %vm516, 0.0, %v4633
  %v4635 = vrot.slane %v4628, 4
  %v4636 = vsel %vm516, 0.0, %v4635
  %v4637 = vsel %vm516, %v4463, %v4444
  %v4639 = vunpack.c.l.s4 1983009808
  %v4640 = vunpack.c.0.s8 %v4639
  %v4641 = vperm.slane %v4637, %v4640
  %v4642 = vrot.slane %v4464, 4
  %v4643 = vsel %vm516, %v4642, %v4462
  %v4645 = vunpack.c.l.s4 1983009808
  %v4646 = vunpack.c.0.s8 %v4645
  %v4647 = vperm.slane %v4643, %v4646
  %v4648 = vsel %vm516, %v4467, %v4456
  %v4650 = vunpack.c.l.s4 1983009808
  %v4651 = vunpack.c.0.s8 %v4650
  %v4652 = vperm.slane %v4648, %v4651
  %v4653 = vrot.slane %v4468, 4
  %v4654 = vsel %vm516, %v4653, %v4466
  %v4656 = vunpack.c.l.s4 1983009808
  %v4657 = vunpack.c.0.s8 %v4656
  %v4658 = vperm.slane %v4654, %v4657
  %v4659 = vrot.slane %v4647, 4
  %v4660 = vsel %vm516, %v4659, %v4641
  %v4661 = vrot.slane %v4641, 4
  %v4662 = vsel %vm516, %v4647, %v4661
  %v4664 = vunpack.c.l.s4 1934713408
  %v4665 = vunpack.c.0.s8 %v4664
  %v4666 = vperm.slane %v4660, %v4665
  %v4668 = vunpack.c.l.s4 1934713408
  %v4669 = vunpack.c.0.s8 %v4668
  %v4670 = vperm.slane %v4662, %v4669
  %v4671 = vrot.slane %v4658, 4
  %v4672 = vsel %vm516, %v4671, %v4652
  %v4673 = vrot.slane %v4652, 4
  %v4674 = vsel %vm516, %v4658, %v4673
  %v4676 = vunpack.c.l.s4 1934713408
  %v4677 = vunpack.c.0.s8 %v4676
  %v4678 = vperm.slane %v4672, %v4677
  %v4680 = vunpack.c.l.s4 1934713408
  %v4681 = vunpack.c.0.s8 %v4680
  %v4682 = vperm.slane %v4674, %v4681
  %v4683 = vrot.slane %v4678, 4
  %v4684 = vsel %vm516, %v4683, %v4666
  %v4685 = vrot.slane %v4666, 4
  %v4686 = vsel %vm516, %v4678, %v4685
  %v4687 = vrot.slane %v4682, 4
  %v4688 = vsel %vm516, %v4687, %v4670
  %v4689 = vrot.slane %v4670, 4
  %v4690 = vsel %vm516, %v4682, %v4689
  %v4691 = vsel %vm516, %v4519, %v4500
  %v4693 = vunpack.c.l.s4 1983009808
  %v4694 = vunpack.c.0.s8 %v4693
  %v4695 = vperm.slane %v4691, %v4694
  %v4696 = vrot.slane %v4520, 4
  %v4697 = vsel %vm516, %v4696, %v4518
  %v4699 = vunpack.c.l.s4 1983009808
  %v4700 = vunpack.c.0.s8 %v4699
  %v4701 = vperm.slane %v4697, %v4700
  %v4702 = vsel %vm516, %v4523, %v4512
  %v4704 = vunpack.c.l.s4 1983009808
  %v4705 = vunpack.c.0.s8 %v4704
  %v4706 = vperm.slane %v4702, %v4705
  %v4707 = vrot.slane %v4524, 4
  %v4708 = vsel %vm516, %v4707, %v4522
  %v4710 = vunpack.c.l.s4 1983009808
  %v4711 = vunpack.c.0.s8 %v4710
  %v4712 = vperm.slane %v4708, %v4711
  %v4713 = vrot.slane %v4701, 4
  %v4714 = vsel %vm516, %v4713, %v4695
  %v4715 = vrot.slane %v4695, 4
  %v4716 = vsel %vm516, %v4701, %v4715
  %v4718 = vunpack.c.l.s4 1934713408
  %v4719 = vunpack.c.0.s8 %v4718
  %v4720 = vperm.slane %v4714, %v4719
  %v4722 = vunpack.c.l.s4 1934713408
  %v4723 = vunpack.c.0.s8 %v4722
  %v4724 = vperm.slane %v4716, %v4723
  %v4725 = vrot.slane %v4712, 4
  %v4726 = vsel %vm516, %v4725, %v4706
  %v4727 = vrot.slane %v4706, 4
  %v4728 = vsel %vm516, %v4712, %v4727
  %v4730 = vunpack.c.l.s4 1934713408
  %v4731 = vunpack.c.0.s8 %v4730
  %v4732 = vperm.slane %v4726, %v4731
  %v4734 = vunpack.c.l.s4 1934713408
  %v4735 = vunpack.c.0.s8 %v4734
  %v4736 = vperm.slane %v4728, %v4735
  %v4737 = vrot.slane %v4732, 4
  %v4738 = vsel %vm516, %v4737, %v4720
  %v4739 = vrot.slane %v4720, 4
  %v4740 = vsel %vm516, %v4732, %v4739
  %v4741 = vrot.slane %v4736, 4
  %v4742 = vsel %vm516, %v4741, %v4724
  %v4743 = vrot.slane %v4724, 4
  %v4744 = vsel %vm516, %v4736, %v4743
  %v4745 = vsel %vm516, %v4575, %v4556
  %v4747 = vunpack.c.l.s4 1983009808
  %v4748 = vunpack.c.0.s8 %v4747
  %v4749 = vperm.slane %v4745, %v4748
  %v4750 = vrot.slane %v4576, 4
  %v4751 = vsel %vm516, %v4750, %v4574
  %v4753 = vunpack.c.l.s4 1983009808
  %v4754 = vunpack.c.0.s8 %v4753
  %v4755 = vperm.slane %v4751, %v4754
  %v4756 = vsel %vm516, %v4579, %v4568
  %v4758 = vunpack.c.l.s4 1983009808
  %v4759 = vunpack.c.0.s8 %v4758
  %v4760 = vperm.slane %v4756, %v4759
  %v4761 = vrot.slane %v4580, 4
  %v4762 = vsel %vm516, %v4761, %v4578
  %v4764 = vunpack.c.l.s4 1983009808
  %v4765 = vunpack.c.0.s8 %v4764
  %v4766 = vperm.slane %v4762, %v4765
  %v4767 = vrot.slane %v4755, 4
  %v4768 = vsel %vm516, %v4767, %v4749
  %v4769 = vrot.slane %v4749, 4
  %v4770 = vsel %vm516, %v4755, %v4769
  %v4772 = vunpack.c.l.s4 1934713408
  %v4773 = vunpack.c.0.s8 %v4772
  %v4774 = vperm.slane %v4768, %v4773
  %v4776 = vunpack.c.l.s4 1934713408
  %v4777 = vunpack.c.0.s8 %v4776
  %v4778 = vperm.slane %v4770, %v4777
  %v4779 = vrot.slane %v4766, 4
  %v4780 = vsel %vm516, %v4779, %v4760
  %v4781 = vrot.slane %v4760, 4
  %v4782 = vsel %vm516, %v4766, %v4781
  %v4784 = vunpack.c.l.s4 1934713408
  %v4785 = vunpack.c.0.s8 %v4784
  %v4786 = vperm.slane %v4780, %v4785
  %v4788 = vunpack.c.l.s4 1934713408
  %v4789 = vunpack.c.0.s8 %v4788
  %v4790 = vperm.slane %v4782, %v4789
  %v4791 = vrot.slane %v4786, 4
  %v4792 = vsel %vm516, %v4791, %v4774
  %v4793 = vrot.slane %v4774, 4
  %v4794 = vsel %vm516, %v4786, %v4793
  %v4795 = vrot.slane %v4790, 4
  %v4796 = vsel %vm516, %v4795, %v4778
  %v4797 = vrot.slane %v4778, 4
  %v4798 = vsel %vm516, %v4790, %v4797
  %v4799 = vsel %vm516, %v4631, %v4612
  %v4801 = vunpack.c.l.s4 1983009808
  %v4802 = vunpack.c.0.s8 %v4801
  %v4803 = vperm.slane %v4799, %v4802
  %v4804 = vrot.slane %v4632, 4
  %v4805 = vsel %vm516, %v4804, %v4630
  %v4807 = vunpack.c.l.s4 1983009808
  %v4808 = vunpack.c.0.s8 %v4807
  %v4809 = vperm.slane %v4805, %v4808
  %v4810 = vsel %vm516, %v4635, %v4624
  %v4812 = vunpack.c.l.s4 1983009808
  %v4813 = vunpack.c.0.s8 %v4812
  %v4814 = vperm.slane %v4810, %v4813
  %v4815 = vrot.slane %v4636, 4
  %v4816 = vsel %vm516, %v4815, %v4634
  %v4818 = vunpack.c.l.s4 1983009808
  %v4819 = vunpack.c.0.s8 %v4818
  %v4820 = vperm.slane %v4816, %v4819
  %v4821 = vrot.slane %v4809, 4
  %v4822 = vsel %vm516, %v4821, %v4803
  %v4823 = vrot.slane %v4803, 4
  %v4824 = vsel %vm516, %v4809, %v4823
  %v4826 = vunpack.c.l.s4 1934713408
  %v4827 = vunpack.c.0.s8 %v4826
  %v4828 = vperm.slane %v4822, %v4827
  %v4830 = vunpack.c.l.s4 1934713408
  %v4831 = vunpack.c.0.s8 %v4830
  %v4832 = vperm.slane %v4824, %v4831
  %v4833 = vrot.slane %v4820, 4
  %v4834 = vsel %vm516, %v4833, %v4814
  %v4835 = vrot.slane %v4814, 4
  %v4836 = vsel %vm516, %v4820, %v4835
  %v4838 = vunpack.c.l.s4 1934713408
  %v4839 = vunpack.c.0.s8 %v4838
  %v4840 = vperm.slane %v4834, %v4839
  %v4842 = vunpack.c.l.s4 1934713408
  %v4843 = vunpack.c.0.s8 %v4842
  %v4844 = vperm.slane %v4836, %v4843
  %v4845 = vrot.slane %v4840, 4
  %v4846 = vsel %vm516, %v4845, %v4828
  %v4847 = vrot.slane %v4828, 4
  %v4848 = vsel %vm516, %v4840, %v4847
  %v4849 = vrot.slane %v4844, 4
  %v4850 = vsel %vm516, %v4849, %v4832
  %v4851 = vrot.slane %v4832, 4
  %v4852 = vsel %vm516, %v4844, %v4851
  %4857 = vrot.lane.b32.xlu0 %v4686, 16
  %v4858 = vpop.permute.xlu0 %4857
  %4859 = vrot.lane.b32.xlu0 %v4740, 16
  %v4860 = vpop.permute.xlu0 %4859
  %4861 = vrot.lane.b32.xlu0 %v4794, 16
  %v4862 = vpop.permute.xlu0 %4861
  %4863 = vrot.lane.b32.xlu0 %v4848, 16
  %v4864 = vpop.permute.xlu0 %4863
  %4873 = vrot.lane.b32.xlu0 %v4688, 32
  %v4874 = vpop.permute.xlu0 %4873
  %4875 = vrot.lane.b32.xlu0 %v4742, 32
  %v4876 = vpop.permute.xlu0 %4875
  %4877 = vrot.lane.b32.xlu0 %v4796, 32
  %v4878 = vpop.permute.xlu0 %4877
  %4879 = vrot.lane.b32.xlu0 %v4850, 32
  %v4880 = vpop.permute.xlu0 %4879
  %4889 = vrot.lane.b32.xlu0 %v4690, 48
  %v4890 = vpop.permute.xlu0 %4889
  %4891 = vrot.lane.b32.xlu0 %v4744, 48
  %v4892 = vpop.permute.xlu0 %4891
  %4893 = vrot.lane.b32.xlu0 %v4798, 48
  %v4894 = vpop.permute.xlu0 %4893
  %4895 = vrot.lane.b32.xlu0 %v4852, 48
  %v4896 = vpop.permute.xlu0 %4895
  %v4901 = vsel %vm2966, %v4684, %v4858
  %v4902 = vsel %vm2966, %v4738, %v4860
  %v4903 = vsel %vm2966, %v4792, %v4862
  %v4904 = vsel %vm2966, %v4846, %v4864
  %vm4905 = vcmask 261120
  %v4906 = vsel %vm4905, %v4901, %v4874
  %v4907 = vsel %vm4905, %v4902, %v4876
  %v4908 = vsel %vm4905, %v4903, %v4878
  %v4909 = vsel %vm4905, %v4904, %v4880
  %vm4910 = vcmask 392192
  %v4911 = vsel %vm4910, %v4906, %v4890
  %v4912 = vsel %vm4910, %v4907, %v4892
  %v4913 = vsel %vm4910, %v4908, %v4894
  %v4914 = vsel %vm4910, %v4909, %v4896
  %v4915 = vadd.f32 %v4911, %v160
  %v4916 = vadd.f32 %v4912, %v161
  %v4917 = vadd.f32 %v4913, %v162
  %v4918 = vadd.f32 %v4914, %v163
  %v4919 = vpack.c.bf16 %v4916, %v4915
  %v4920 = vpack.c.bf16 %v4918, %v4917
  %v4921 = vld [vmem:[%s8] sm:$0xf]
  %v4922 = vld [vmem:[%s8 + $0x4] sm:$0xf]
  %v4923 = vld [vmem:[%s8 + $0x8] sm:$0xf]
  %v4924 = vld [vmem:[%s8 + $0xc] sm:$0xf]
  %v4925 = vld [vmem:[%s8 + $0x10] sm:$0xf]
  %v4926 = vld [vmem:[%s8 + $0x14] sm:$0xf]
  %v4927 = vld [vmem:[%s8 + $0x18] sm:$0xf]
  %v4928 = vld [vmem:[%s8 + $0x1c] sm:$0xf]
  %v4937 = vunpack.c.l.b16 %v4921
  %v4938 = vunpack.c.l.b16 %v4922
  %v4939 = vunpack.c.l.b16 %v4923
  %v4940 = vunpack.c.l.b16 %v4924
  %v4941 = vunpack.c.l.b16 %v4925
  %v4942 = vunpack.c.l.b16 %v4926
  %v4943 = vunpack.c.l.b16 %v4927
  %v4944 = vunpack.c.l.b16 %v4928
  %v4945 = vpack.c.b16 %v4938, %v4937
  %v4946 = vpack.c.b16 %v4940, %v4939
  %v4947 = vpack.c.b16 %v4942, %v4941
  %v4948 = vpack.c.b16 %v4944, %v4943
  %v4954 = vsel %vm58, %v4919, 0
  %v4957 = vsel %vm58, %v4920, 0
  %4959 = vmatpush.bf16.msra.mxu0 0
  %4960 = vmatpush.bf16.msra.mxu0 0
  %4961 = vmatpush.bf16.msra.mxu0 0
  %4962 = vmatpush.bf16.msra.mxu0 0
  %4963 = vmatpush.bf16.msra.mxu0 %v4948
  %4964 = vmatpush.bf16.msra.mxu0 %v4947
  %4965 = vmatpush.bf16.msra.mxu0 %v4946
  %4966 = vmatpush.bf16.msra.mxu0 %v4945
  %4967 = vmatmul.bf16.gmra.mxu0 %v4954
  %v4968 = vpop.f32.mrf.mxu0
  %v4969 = vadd.f32 0.0, %v4968
  %v4970 = vpop.f32.mrf.mxu0
  %v4971 = vadd.f32 0.0, %v4970
  %4972 = vmatmul.bf16.gmra.mxu0 %v4957
  %v4973 = vpop.f32.mrf.mxu0
  %v4974 = vadd.f32 0.0, %v4973
  %v4975 = vpop.f32.mrf.mxu0
  %v4976 = vadd.f32 0.0, %v4975
  %4977 = vdwg.mxu0
  %v4978 = vadd.f32 %v160, %v4969
  %v4979 = vadd.f32 %v161, %v4971
  %v4980 = vadd.f32 %v162, %v4974
  %v4981 = vadd.f32 %v163, %v4976
  %v4982 = vperm.slane %v37, 0
  %v4983 = vadd.f32 %v4978, %v4982
  %v4984 = vadd.f32 %v4979, %v4982
  %v4985 = vadd.f32 %v4980, %v4982
  %v4986 = vadd.f32 %v4981, %v4982
  %4987 = vst.msk [vmem:[%s9] sm:$0xff] %vm58, %v4983
  %4988 = vst.msk [vmem:[%s9 + $0x8] sm:$0xff] %vm58, %v4984
  %4989 = vst.msk [vmem:[%s9 + $0x10] sm:$0xff] %vm58, %v4985
  %4990 = vst.msk [vmem:[%s9 + $0x18] sm:$0xff] %vm58, %v4986
  // Predicated region
  $region38: #{patch_embedding_cross_attention.1} parent=0 // pred_check
    _
  $region39: #{patch_embedding_cross_attention.1} parent=0 // pred_check_branch
    %4992 = sbr.rel (0) target = $region41
  $region40: #{patch_embedding_cross_attention.1} parent=0 // pred_region
    _
  $region41: #{patch_embedding_cross_attention.1} parent=0 // pred_fallthru
    _
  // Predicated region
  $region42: #{patch_embedding_cross_attention.1} parent=0 // pred_check
    _
  $region43: #{patch_embedding_cross_attention.1} parent=0 // pred_check_branch
    %4994 = sbr.rel (0) target = $region45
  $region44: #{patch_embedding_cross_attention.1} parent=0 // pred_region
    _
  $region45: #{patch_embedding_cross_attention.1} parent=0 // pred_fallthru
    _

</llo_original>
